<compile_context>
chip_gen: v5e
topology: v5e:2x2
jax: 0.10.0
libtpu: 0.0.40
codegen_flags: <defaults>
</compile_context>

<pallas_src>
import functools

import numpy as np
import jax
import jax.numpy as jnp
from jax.experimental import pallas as pl
from jax.experimental.pallas import tpu as pltpu


# Per-layer weight order passed to the fused kernel.
_WNAMES = (
    "wqh", "bqh", "wkh", "bkh", "wvh", "bvh",   # per-head in-projections
    "woh", "bo",                                # head-split out projection
    "g1", "be1",                                # LayerNorm 1
    "w1", "b1", "w2", "b2",                     # feed-forward
    "g2", "be2",                                # LayerNorm 2
    "fcw1", "fcb1", "fcw2", "fcb2",             # fc block (W1 pre-folded)
)


def _mm_nt(a, b):
    # a @ b.T  (PyTorch nn.Linear convention: weight is (out, in))
    return jax.lax.dot_general(a, b, (((1,), (1,)), ((), ())),
                               preferred_element_type=jnp.float32)


def _layernorm(x, gamma, beta, eps=1e-5):
    # PyTorch LayerNorm: biased variance, eps inside the sqrt.
    mu = jnp.mean(x, axis=-1, keepdims=True)
    var = jnp.mean((x - mu) ** 2, axis=-1, keepdims=True)
    return (x - mu) * jax.lax.rsqrt(var + eps) * gamma + beta


# ----------------------------------------------------------------------------
# Fused kernel: full forward (all layers) for one block of sequences.
# ----------------------------------------------------------------------------
def _fused_forward_kernel(n_layer, n_head, x_ref, *refs):
    o_ref = refs[-1]
    w_refs = refs[:-1]
    npl = len(_WNAMES)

    xb = x_ref[...]                         # (Bb, S, D) float32
    Bb, S, D = xb.shape
    N = Bb * S
    x2 = xb.reshape(N, D)                   # token-major matrix for projections
    dh = D // n_head
    scale = 1.0 / np.sqrt(dh)

    for li in range(n_layer):               # static unroll over layers
        w = dict(zip(_WNAMES, w_refs[li * npl:(li + 1) * npl]))

        # ---- multi-head self attention (heads via pre-split weights) -------
        attn = jnp.zeros((N, D), jnp.float32)
        for h in range(n_head):             # static unroll, n_head small
            qh = (_mm_nt(x2, w["wqh"][h]) + w["bqh"][h]) * scale   # (N, dh)
            kh = _mm_nt(x2, w["wkh"][h]) + w["bkh"][h]             # (N, dh)
            vh = _mm_nt(x2, w["wvh"][h]) + w["bvh"][h]             # (N, dh)
            qh3 = qh.reshape(Bb, S, dh)
            kh3 = kh.reshape(Bb, S, dh)
            vh3 = vh.reshape(Bb, S, dh)
            s = jnp.einsum("bqd,bkd->bqk", qh3, kh3,
                           preferred_element_type=jnp.float32)      # (Bb,S,S)
            s = s - jnp.max(s, axis=-1, keepdims=True)
            p = jnp.exp(s)
            p = p * pl.reciprocal(jnp.sum(p, axis=-1, keepdims=True),
                                  approx=True)
            oh = jnp.einsum("bqk,bkd->bqd", p, vh3,
                            preferred_element_type=jnp.float32)     # (Bb,S,dh)
            # head "concat" == accumulate through the per-head slice of W_out
            attn = attn + _mm_nt(oh.reshape(N, dh), w["woh"][h])    # (N, D)
        attn = attn + w["bo"][...]

        # ---- residual + norm1, feed-forward, residual + norm2 ---------------
        y = _layernorm(x2 + attn, w["g1"][...], w["be1"][...])
        ff = jnp.maximum(_mm_nt(y, w["w1"][...]) + w["b1"][...], 0.0)
        ff = _mm_nt(ff, w["w2"][...]) + w["b2"][...]
        z = _layernorm(y + ff, w["g2"][...], w["be2"][...])

        # ---- fc block; cat([row, row]) already folded into fcw1 -------------
        h1 = jnp.maximum(_mm_nt(z, w["fcw1"][...]) + w["fcb1"][...], 0.0)
        x2 = _mm_nt(h1, w["fcw2"][...]) + w["fcb2"][...]            # (N, d_out_i)

    d_out = x2.shape[-1]
    o_ref[...] = x2.reshape(Bb, S, d_out)


# ----------------------------------------------------------------------------
# Weight preparation (wrapper-side, trace-time only)
# ----------------------------------------------------------------------------
def _prep_layer_weights(lp, n_head, d):
    row = lp["row"]
    dh = d // n_head
    wqh = row["wq"].reshape(n_head, dh, d)          # split output dim per head
    bqh = row["bq"].reshape(n_head, 1, dh)
    wkh = row["wk"].reshape(n_head, dh, d)
    bkh = row["bk"].reshape(n_head, 1, dh)
    wvh = row["wv"].reshape(n_head, dh, d)
    bvh = row["bv"].reshape(n_head, 1, dh)
    # out projection: split its *input* (column) dim per head -> (H, d, dh)
    woh = row["wo"].reshape(d, n_head, dh).transpose(1, 0, 2)
    # fold cat([row, row]) @ W1^T == row @ (W1[:, :d] + W1[:, d:])^T
    fcw1 = lp["fc_w1"][:, :d] + lp["fc_w1"][:, d:]
    vals = dict(
        wqh=wqh, bqh=bqh, wkh=wkh, bkh=bkh, wvh=wvh, bvh=bvh,
        woh=woh, bo=row["bo"], g1=row["g1"], be1=row["be1"],
        w1=row["w1"], b1=row["b1"], w2=row["w2"], b2=row["b2"],
        g2=row["g2"], be2=row["be2"],
        fcw1=fcw1, fcb1=lp["fc_b1"], fcw2=lp["fc_w2"], fcb2=lp["fc_b2"],
    )
    return [vals[n] for n in _WNAMES]


# ----------------------------------------------------------------------------
# Forward pass (single fused pallas_call)
# ----------------------------------------------------------------------------
def transformer2dnet_forward(x, params, n_layer, n_head):
    bs, n_bidder, n_item, d = x.shape
    assert d % n_head == 0, "d_input must be divisible by n_head"
    b_flat = bs * n_bidder
    x3 = x.reshape(b_flat, n_item, d).astype(jnp.float32)

    flat_w = []
    for i in range(n_layer):
        flat_w.extend(_prep_layer_weights(params["layers"][i], n_head, d))
    d_out_final = int(flat_w[-2].shape[0])        # last layer fc_w2: (d_out, d)

    # Two "parallel" grid points -> both v7x TensorCores get half the
    # sequences; on single-TC v5e/v6e the extra step is ~0.35us of overhead.
    num_blocks = 2 if (b_flat % 2 == 0 and b_flat >= 2) else 1
    b_blk = b_flat // num_blocks

    in_specs = [pl.BlockSpec((b_blk, n_item, d), lambda i: (i, 0, 0))]
    for w in flat_w:
        # Weights: one full-array block, identical for every grid step (the
        # pipeline does not re-fetch a block whose index did not change).
        in_specs.append(pl.BlockSpec(w.shape, lambda i, _nd=w.ndim: (0,) * _nd))

    # Advisory cost estimate for the XLA scheduler.
    n_tok = b_flat * n_item
    flops = 0
    transcendentals = 0
    for i in range(n_layer):
        d_out_i = d if i != n_layer - 1 else d_out_final
        flops += n_tok * (4 * 2 * d * d            # q, k, v, out projections
                          + 2 * 2 * d * 4 * d      # feed-forward
                          + 2 * d * d              # fc1 (folded)
                          + 2 * d * d_out_i)       # fc2
        flops += b_flat * n_head * 2 * 2 * n_item * n_item * (d // n_head)
        transcendentals += b_flat * n_head * n_item * n_item
    bytes_accessed = 4 * (int(x3.size) + b_flat * n_item * d_out_final
                          + sum(int(w.size) for w in flat_w))

    out = pl.pallas_call(
        functools.partial(_fused_forward_kernel, n_layer, n_head),
        out_shape=jax.ShapeDtypeStruct((b_flat, n_item, d_out_final),
                                       jnp.float32),
        grid=(num_blocks,),
        in_specs=in_specs,
        out_specs=pl.BlockSpec((b_blk, n_item, d_out_final),
                               lambda i: (i, 0, 0)),
        compiler_params=pltpu.CompilerParams(
            dimension_semantics=("parallel",)),
        cost_estimate=pl.CostEstimate(flops=int(flops),
                                      transcendentals=int(transcendentals),
                                      bytes_accessed=int(bytes_accessed)),
    )(x3, *flat_w)
    return out.reshape(bs, n_bidder, n_item, d_out_final)


# ----------------------------------------------------------------------------
# Parameter init (deterministic, synthetic)
# ----------------------------------------------------------------------------
def init_params(key, d_input, d_output, n_layer):
    d = d_input
    d_hidden = 4 * d
    layers = []
    for i in range(n_layer):
        d_out = d if i != n_layer - 1 else d_output
        key, *ks = jax.random.split(key, 17)

        def nrm(k, shape, s=0.1):
            return jax.random.normal(k, shape, jnp.float32) * s

        row = dict(
            wq=nrm(ks[0], (d, d)),        bq=nrm(ks[1], (1, d), 0.02),
            wk=nrm(ks[2], (d, d)),        bk=nrm(ks[3], (1, d), 0.02),
            wv=nrm(ks[4], (d, d)),        bv=nrm(ks[5], (1, d), 0.02),
            wo=nrm(ks[6], (d, d)),        bo=nrm(ks[7], (1, d), 0.02),
            g1=jnp.ones((1, d), jnp.float32), be1=jnp.zeros((1, d), jnp.float32),
            w1=nrm(ks[8], (d_hidden, d)), b1=nrm(ks[9], (1, d_hidden), 0.02),
            w2=nrm(ks[10], (d, d_hidden)), b2=nrm(ks[11], (1, d), 0.02),
            g2=jnp.ones((1, d), jnp.float32), be2=jnp.zeros((1, d), jnp.float32),
        )
        layers.append(dict(
            row=row,
            fc_w1=nrm(ks[12], (d, 2 * d)), fc_b1=nrm(ks[13], (1, d), 0.02),
            fc_w2=nrm(ks[14], (d_out, d)), fc_b2=nrm(ks[15], (1, d_out), 0.02),
        ))
    return dict(layers=layers)


# ----------------------------------------------------------------------------
# Pure-JAX reference (same math as the PyTorch module, row-only)
# ----------------------------------------------------------------------------
def _reference_forward(x, params, n_layer, n_head):
    bs, n_bidder, n_item, d = x.shape

    def layernorm(t, g, b, eps=1e-5):
        mu = t.mean(-1, keepdims=True)
        var = ((t - mu) ** 2).mean(-1, keepdims=True)
        return (t - mu) * jax.lax.rsqrt(var + eps) * g + b

    def encoder(xs, p):                        # xs: (B, S, D)
        B, S, D = xs.shape
        dh = D // n_head
        x2 = xs.reshape(B * S, D)
        q = (x2 @ p["wq"].T + p["bq"]) / np.sqrt(dh)
        k = x2 @ p["wk"].T + p["bk"]
        v = x2 @ p["wv"].T + p["bv"]

        def split(t):
            return t.reshape(B, S, n_head, dh).transpose(0, 2, 1, 3)

        s = jnp.einsum("bhqd,bhkd->bhqk", split(q), split(k))
        a = jax.nn.softmax(s, axis=-1)
        o = jnp.einsum("bhqk,bhkd->bhqd", a, split(v))
        o = o.transpose(0, 2, 1, 3).reshape(B * S, D)
        attn = o @ p["wo"].T + p["bo"]
        y = layernorm(x2 + attn, p["g1"], p["be1"])
        ff = jax.nn.relu(y @ p["w1"].T + p["b1"]) @ p["w2"].T + p["b2"]
        return layernorm(y + ff, p["g2"], p["be2"]).reshape(B, S, D)

    cur = x
    for i in range(n_layer):
        lp = params["layers"][i]
        row = encoder(cur.reshape(bs * n_bidder, n_item, -1), lp["row"])
        row = row.reshape(bs, n_bidder, n_item, -1)
        cat = jnp.concatenate([row, row], axis=-1)
        h = jax.nn.relu(cat @ lp["fc_w1"].T + lp["fc_b1"])
        cur = h @ lp["fc_w2"].T + lp["fc_b2"]
    return cur


if __name__ == "__main__":
    d_input, d_output, n_layer, n_head = 16, 8, 2, 2
    bs, n_bidder, n_item = 2, 4, 8

    key = jax.random.PRNGKey(0)
    kx, kp = jax.random.split(key)
    x = jax.random.normal(kx, (bs, n_bidder, n_item, d_input), jnp.float32)
    params = init_params(kp, d_input, d_output, n_layer)

    out = transformer2dnet_forward(x, params, n_layer, n_head)
    out = jax.block_until_ready(out)
    assert out.shape == (bs, n_bidder, n_item, d_output), out.shape
    assert out.dtype == jnp.float32

    ref = jax.block_until_ready(_reference_forward(x, params, n_layer, n_head))
    np.testing.assert_allclose(np.asarray(out), np.asarray(ref),
                               rtol=2e-2, atol=2e-2)
    print("KERNEL_OK")
</pallas_src>

<mosaic_0001>
module attributes {stable_mosaic.version = 11 : i64} {
  func.func @_fused_forward_kernel(%arg0: i32, %arg1: memref<4x8x16xf32, #tpu.memory_space<vmem>>, %arg2: memref<2x8x16xf32, #tpu.memory_space<vmem>>, %arg3: memref<2x1x8xf32, #tpu.memory_space<vmem>>, %arg4: memref<2x8x16xf32, #tpu.memory_space<vmem>>, %arg5: memref<2x1x8xf32, #tpu.memory_space<vmem>>, %arg6: memref<2x8x16xf32, #tpu.memory_space<vmem>>, %arg7: memref<2x1x8xf32, #tpu.memory_space<vmem>>, %arg8: memref<2x16x8xf32, #tpu.memory_space<vmem>>, %arg9: memref<1x16xf32, #tpu.memory_space<vmem>>, %arg10: memref<1x16xf32, #tpu.memory_space<vmem>>, %arg11: memref<1x16xf32, #tpu.memory_space<vmem>>, %arg12: memref<64x16xf32, #tpu.memory_space<vmem>>, %arg13: memref<1x64xf32, #tpu.memory_space<vmem>>, %arg14: memref<16x64xf32, #tpu.memory_space<vmem>>, %arg15: memref<1x16xf32, #tpu.memory_space<vmem>>, %arg16: memref<1x16xf32, #tpu.memory_space<vmem>>, %arg17: memref<1x16xf32, #tpu.memory_space<vmem>>, %arg18: memref<16x16xf32, #tpu.memory_space<vmem>>, %arg19: memref<1x16xf32, #tpu.memory_space<vmem>>, %arg20: memref<16x16xf32, #tpu.memory_space<vmem>>, %arg21: memref<1x16xf32, #tpu.memory_space<vmem>>, %arg22: memref<2x8x16xf32, #tpu.memory_space<vmem>>, %arg23: memref<2x1x8xf32, #tpu.memory_space<vmem>>, %arg24: memref<2x8x16xf32, #tpu.memory_space<vmem>>, %arg25: memref<2x1x8xf32, #tpu.memory_space<vmem>>, %arg26: memref<2x8x16xf32, #tpu.memory_space<vmem>>, %arg27: memref<2x1x8xf32, #tpu.memory_space<vmem>>, %arg28: memref<2x16x8xf32, #tpu.memory_space<vmem>>, %arg29: memref<1x16xf32, #tpu.memory_space<vmem>>, %arg30: memref<1x16xf32, #tpu.memory_space<vmem>>, %arg31: memref<1x16xf32, #tpu.memory_space<vmem>>, %arg32: memref<64x16xf32, #tpu.memory_space<vmem>>, %arg33: memref<1x64xf32, #tpu.memory_space<vmem>>, %arg34: memref<16x64xf32, #tpu.memory_space<vmem>>, %arg35: memref<1x16xf32, #tpu.memory_space<vmem>>, %arg36: memref<1x16xf32, #tpu.memory_space<vmem>>, %arg37: memref<1x16xf32, #tpu.memory_space<vmem>>, %arg38: memref<16x16xf32, #tpu.memory_space<vmem>>, %arg39: memref<1x16xf32, #tpu.memory_space<vmem>>, %arg40: memref<8x16xf32, #tpu.memory_space<vmem>>, %arg41: memref<1x8xf32, #tpu.memory_space<vmem>>, %arg42: memref<4x8x8xf32, #tpu.memory_space<vmem>>) attributes {dimension_semantics = [#tpu.dimension_semantics<parallel>], iteration_bounds = array<i64: 2>, scalar_prefetch = 0 : i64, scratch_operands = 0 : i64, tpu.core_type = #tpu.core_type<tc>, window_params = [{transform_indices = @transform_0, window_bounds = array<i64: 4, 8, 16>}, {pipeline_mode = #tpu.pipeline_mode<synchronous>, transform_indices = @transform_1, window_bounds = array<i64: 2, 8, 16>}, {pipeline_mode = #tpu.pipeline_mode<synchronous>, transform_indices = @transform_2, window_bounds = array<i64: 2, 1, 8>}, {pipeline_mode = #tpu.pipeline_mode<synchronous>, transform_indices = @transform_3, window_bounds = array<i64: 2, 8, 16>}, {pipeline_mode = #tpu.pipeline_mode<synchronous>, transform_indices = @transform_4, window_bounds = array<i64: 2, 1, 8>}, {pipeline_mode = #tpu.pipeline_mode<synchronous>, transform_indices = @transform_5, window_bounds = array<i64: 2, 8, 16>}, {pipeline_mode = #tpu.pipeline_mode<synchronous>, transform_indices = @transform_6, window_bounds = array<i64: 2, 1, 8>}, {pipeline_mode = #tpu.pipeline_mode<synchronous>, transform_indices = @transform_7, window_bounds = array<i64: 2, 16, 8>}, {pipeline_mode = #tpu.pipeline_mode<synchronous>, transform_indices = @transform_8, window_bounds = array<i64: 1, 16>}, {pipeline_mode = #tpu.pipeline_mode<synchronous>, transform_indices = @transform_9, window_bounds = array<i64: 1, 16>}, {pipeline_mode = #tpu.pipeline_mode<synchronous>, transform_indices = @transform_10, window_bounds = array<i64: 1, 16>}, {pipeline_mode = #tpu.pipeline_mode<synchronous>, transform_indices = @transform_11, window_bounds = array<i64: 64, 16>}, {pipeline_mode = #tpu.pipeline_mode<synchronous>, transform_indices = @transform_12, window_bounds = array<i64: 1, 64>}, {pipeline_mode = #tpu.pipeline_mode<synchronous>, transform_indices = @transform_13, window_bounds = array<i64: 16, 64>}, {pipeline_mode = #tpu.pipeline_mode<synchronous>, transform_indices = @transform_14, window_bounds = array<i64: 1, 16>}, {pipeline_mode = #tpu.pipeline_mode<synchronous>, transform_indices = @transform_15, window_bounds = array<i64: 1, 16>}, {pipeline_mode = #tpu.pipeline_mode<synchronous>, transform_indices = @transform_16, window_bounds = array<i64: 1, 16>}, {pipeline_mode = #tpu.pipeline_mode<synchronous>, transform_indices = @transform_17, window_bounds = array<i64: 16, 16>}, {pipeline_mode = #tpu.pipeline_mode<synchronous>, transform_indices = @transform_18, window_bounds = array<i64: 1, 16>}, {pipeline_mode = #tpu.pipeline_mode<synchronous>, transform_indices = @transform_19, window_bounds = array<i64: 16, 16>}, {pipeline_mode = #tpu.pipeline_mode<synchronous>, transform_indices = @transform_20, window_bounds = array<i64: 1, 16>}, {pipeline_mode = #tpu.pipeline_mode<synchronous>, transform_indices = @transform_21, window_bounds = array<i64: 2, 8, 16>}, {pipeline_mode = #tpu.pipeline_mode<synchronous>, transform_indices = @transform_22, window_bounds = array<i64: 2, 1, 8>}, {pipeline_mode = #tpu.pipeline_mode<synchronous>, transform_indices = @transform_23, window_bounds = array<i64: 2, 8, 16>}, {pipeline_mode = #tpu.pipeline_mode<synchronous>, transform_indices = @transform_24, window_bounds = array<i64: 2, 1, 8>}, {pipeline_mode = #tpu.pipeline_mode<synchronous>, transform_indices = @transform_25, window_bounds = array<i64: 2, 8, 16>}, {pipeline_mode = #tpu.pipeline_mode<synchronous>, transform_indices = @transform_26, window_bounds = array<i64: 2, 1, 8>}, {pipeline_mode = #tpu.pipeline_mode<synchronous>, transform_indices = @transform_27, window_bounds = array<i64: 2, 16, 8>}, {pipeline_mode = #tpu.pipeline_mode<synchronous>, transform_indices = @transform_28, window_bounds = array<i64: 1, 16>}, {pipeline_mode = #tpu.pipeline_mode<synchronous>, transform_indices = @transform_29, window_bounds = array<i64: 1, 16>}, {pipeline_mode = #tpu.pipeline_mode<synchronous>, transform_indices = @transform_30, window_bounds = array<i64: 1, 16>}, {pipeline_mode = #tpu.pipeline_mode<synchronous>, transform_indices = @transform_31, window_bounds = array<i64: 64, 16>}, {pipeline_mode = #tpu.pipeline_mode<synchronous>, transform_indices = @transform_32, window_bounds = array<i64: 1, 64>}, {pipeline_mode = #tpu.pipeline_mode<synchronous>, transform_indices = @transform_33, window_bounds = array<i64: 16, 64>}, {pipeline_mode = #tpu.pipeline_mode<synchronous>, transform_indices = @transform_34, window_bounds = array<i64: 1, 16>}, {pipeline_mode = #tpu.pipeline_mode<synchronous>, transform_indices = @transform_35, window_bounds = array<i64: 1, 16>}, {pipeline_mode = #tpu.pipeline_mode<synchronous>, transform_indices = @transform_36, window_bounds = array<i64: 1, 16>}, {pipeline_mode = #tpu.pipeline_mode<synchronous>, transform_indices = @transform_37, window_bounds = array<i64: 16, 16>}, {pipeline_mode = #tpu.pipeline_mode<synchronous>, transform_indices = @transform_38, window_bounds = array<i64: 1, 16>}, {pipeline_mode = #tpu.pipeline_mode<synchronous>, transform_indices = @transform_39, window_bounds = array<i64: 8, 16>}, {pipeline_mode = #tpu.pipeline_mode<synchronous>, transform_indices = @transform_40, window_bounds = array<i64: 1, 8>}, {transform_indices = @transform_41, window_bounds = array<i64: 4, 8, 8>}]} {
    %c0 = arith.constant 0 : index
    %c0_0 = arith.constant 0 : index
    %c0_1 = arith.constant 0 : index
    %0 = vector.load %arg1[%c0, %c0_0, %c0_1] : memref<4x8x16xf32, #tpu.memory_space<vmem>>, vector<4x8x16xf32>
    %1 = vector.shape_cast %0 : vector<4x8x16xf32> to vector<32x16xf32>
    %cst = arith.constant 0.000000e+00 : f32
    %2 = vector.broadcast %cst : f32 to vector<32x16xf32>
    %c0_2 = arith.constant 0 : index
    %c0_3 = arith.constant 0 : index
    %c0_4 = arith.constant 0 : index
    %3 = vector.load %arg2[%c0_2, %c0_3, %c0_4] : memref<2x8x16xf32, #tpu.memory_space<vmem>>, vector<1x8x16xf32>
    %4 = vector.shape_cast %3 : vector<1x8x16xf32> to vector<8x16xf32>
    %cst_5 = arith.constant dense<0.000000e+00> : vector<32x8xf32>
    %5 = tpu.matmul %1, %4, %cst_5 {dimension_numbers = #tpu.dot_dimension_numbers<[1], [1], [0], [0], [0, 0, 1, 0], [], []>} : vector<32x16xf32>, vector<8x16xf32>, vector<32x8xf32> -> vector<32x8xf32>
    %c0_6 = arith.constant 0 : index
    %c0_7 = arith.constant 0 : index
    %c0_8 = arith.constant 0 : index
    %6 = vector.load %arg3[%c0_6, %c0_7, %c0_8] : memref<2x1x8xf32, #tpu.memory_space<vmem>>, vector<1x1x8xf32>
    %7 = vector.shape_cast %6 : vector<1x1x8xf32> to vector<1x8xf32>
    %8 = vector.broadcast %7 : vector<1x8xf32> to vector<32x8xf32>
    %9 = arith.addf %5, %8 : vector<32x8xf32>
    %cst_9 = arith.constant 0.353553385 : f32
    %10 = vector.broadcast %cst_9 : f32 to vector<32x8xf32>
    %11 = arith.mulf %9, %10 : vector<32x8xf32>
    %c0_10 = arith.constant 0 : index
    %c0_11 = arith.constant 0 : index
    %c0_12 = arith.constant 0 : index
    %12 = vector.load %arg4[%c0_10, %c0_11, %c0_12] : memref<2x8x16xf32, #tpu.memory_space<vmem>>, vector<1x8x16xf32>
    %13 = vector.shape_cast %12 : vector<1x8x16xf32> to vector<8x16xf32>
    %cst_13 = arith.constant dense<0.000000e+00> : vector<32x8xf32>
    %14 = tpu.matmul %1, %13, %cst_13 {dimension_numbers = #tpu.dot_dimension_numbers<[1], [1], [0], [0], [0, 0, 1, 0], [], []>} : vector<32x16xf32>, vector<8x16xf32>, vector<32x8xf32> -> vector<32x8xf32>
    %c0_14 = arith.constant 0 : index
    %c0_15 = arith.constant 0 : index
    %c0_16 = arith.constant 0 : index
    %15 = vector.load %arg5[%c0_14, %c0_15, %c0_16] : memref<2x1x8xf32, #tpu.memory_space<vmem>>, vector<1x1x8xf32>
    %16 = vector.shape_cast %15 : vector<1x1x8xf32> to vector<1x8xf32>
    %17 = vector.broadcast %16 : vector<1x8xf32> to vector<32x8xf32>
    %18 = arith.addf %14, %17 : vector<32x8xf32>
    %c0_17 = arith.constant 0 : index
    %c0_18 = arith.constant 0 : index
    %c0_19 = arith.constant 0 : index
    %19 = vector.load %arg6[%c0_17, %c0_18, %c0_19] : memref<2x8x16xf32, #tpu.memory_space<vmem>>, vector<1x8x16xf32>
    %20 = vector.shape_cast %19 : vector<1x8x16xf32> to vector<8x16xf32>
    %cst_20 = arith.constant dense<0.000000e+00> : vector<32x8xf32>
    %21 = tpu.matmul %1, %20, %cst_20 {dimension_numbers = #tpu.dot_dimension_numbers<[1], [1], [0], [0], [0, 0, 1, 0], [], []>} : vector<32x16xf32>, vector<8x16xf32>, vector<32x8xf32> -> vector<32x8xf32>
    %c0_21 = arith.constant 0 : index
    %c0_22 = arith.constant 0 : index
    %c0_23 = arith.constant 0 : index
    %22 = vector.load %arg7[%c0_21, %c0_22, %c0_23] : memref<2x1x8xf32, #tpu.memory_space<vmem>>, vector<1x1x8xf32>
    %23 = vector.shape_cast %22 : vector<1x1x8xf32> to vector<1x8xf32>
    %24 = vector.broadcast %23 : vector<1x8xf32> to vector<32x8xf32>
    %25 = arith.addf %21, %24 : vector<32x8xf32>
    %26 = vector.shape_cast %11 : vector<32x8xf32> to vector<4x8x8xf32>
    %27 = vector.shape_cast %18 : vector<32x8xf32> to vector<4x8x8xf32>
    %28 = vector.shape_cast %25 : vector<32x8xf32> to vector<4x8x8xf32>
    "tpu.trace_start"() <{level = 10 : i32, message = "bqd,bkd->bqk"}> : () -> ()
    %cst_24 = arith.constant dense<0.000000e+00> : vector<4x8x8xf32>
    %29 = tpu.matmul %26, %27, %cst_24 {dimension_numbers = #tpu.dot_dimension_numbers<[2], [2], [1], [1], [0, 0, 0, 1, 1, 1], [0], [0]>} : vector<4x8x8xf32>, vector<4x8x8xf32>, vector<4x8x8xf32> -> vector<4x8x8xf32>
    "tpu.trace_stop"() : () -> ()
    %cst_25 = arith.constant dense<0xFF800000> : vector<4x8xf32>
    %30 = vector.multi_reduction <maximumf>, %29, %cst_25 [2] : vector<4x8x8xf32> to vector<4x8xf32>
    %31 = vector.shape_cast %30 : vector<4x8xf32> to vector<4x8x1xf32>
    %32 = vector.broadcast %31 : vector<4x8x1xf32> to vector<4x8x8xf32>
    %33 = arith.subf %29, %32 : vector<4x8x8xf32>
    %34 = math.exp %33 : vector<4x8x8xf32>
    %cst_26 = arith.constant dense<0.000000e+00> : vector<4x8xf32>
    %35 = vector.multi_reduction <add>, %34, %cst_26 [2] : vector<4x8x8xf32> to vector<4x8xf32>
    %36 = vector.shape_cast %35 : vector<4x8xf32> to vector<4x8x1xf32>
    %37 = tpu.reciprocal %36 {approx = true} : vector<4x8x1xf32> -> vector<4x8x1xf32>
    %38 = vector.broadcast %37 : vector<4x8x1xf32> to vector<4x8x8xf32>
    %39 = arith.mulf %34, %38 : vector<4x8x8xf32>
    "tpu.trace_start"() <{level = 10 : i32, message = "bqk,bkd->bqd"}> : () -> ()
    %cst_27 = arith.constant dense<0.000000e+00> : vector<4x8x8xf32>
    %40 = tpu.matmul %39, %28, %cst_27 {dimension_numbers = #tpu.dot_dimension_numbers<[2], [1], [1], [2], [0, 0, 0, 1, 1, 2], [0], [0]>} : vector<4x8x8xf32>, vector<4x8x8xf32>, vector<4x8x8xf32> -> vector<4x8x8xf32>
    "tpu.trace_stop"() : () -> ()
    %41 = vector.shape_cast %40 : vector<4x8x8xf32> to vector<32x8xf32>
    %c0_28 = arith.constant 0 : index
    %c0_29 = arith.constant 0 : index
    %c0_30 = arith.constant 0 : index
    %42 = vector.load %arg8[%c0_28, %c0_29, %c0_30] : memref<2x16x8xf32, #tpu.memory_space<vmem>>, vector<1x16x8xf32>
    %43 = vector.shape_cast %42 : vector<1x16x8xf32> to vector<16x8xf32>
    %cst_31 = arith.constant dense<0.000000e+00> : vector<32x16xf32>
    %44 = tpu.matmul %41, %43, %cst_31 {dimension_numbers = #tpu.dot_dimension_numbers<[1], [1], [0], [0], [0, 0, 1, 0], [], []>} : vector<32x8xf32>, vector<16x8xf32>, vector<32x16xf32> -> vector<32x16xf32>
    %45 = arith.addf %2, %44 : vector<32x16xf32>
    %c1 = arith.constant 1 : index
    %c0_32 = arith.constant 0 : index
    %c0_33 = arith.constant 0 : index
    %46 = vector.load %arg2[%c1, %c0_32, %c0_33] : memref<2x8x16xf32, #tpu.memory_space<vmem>>, vector<1x8x16xf32>
    %47 = vector.shape_cast %46 : vector<1x8x16xf32> to vector<8x16xf32>
    %cst_34 = arith.constant dense<0.000000e+00> : vector<32x8xf32>
    %48 = tpu.matmul %1, %47, %cst_34 {dimension_numbers = #tpu.dot_dimension_numbers<[1], [1], [0], [0], [0, 0, 1, 0], [], []>} : vector<32x16xf32>, vector<8x16xf32>, vector<32x8xf32> -> vector<32x8xf32>
    %c1_35 = arith.constant 1 : index
    %c0_36 = arith.constant 0 : index
    %c0_37 = arith.constant 0 : index
    %49 = vector.load %arg3[%c1_35, %c0_36, %c0_37] : memref<2x1x8xf32, #tpu.memory_space<vmem>>, vector<1x1x8xf32>
    %50 = vector.shape_cast %49 : vector<1x1x8xf32> to vector<1x8xf32>
    %51 = vector.broadcast %50 : vector<1x8xf32> to vector<32x8xf32>
    %52 = arith.addf %48, %51 : vector<32x8xf32>
    %cst_38 = arith.constant 0.353553385 : f32
    %53 = vector.broadcast %cst_38 : f32 to vector<32x8xf32>
    %54 = arith.mulf %52, %53 : vector<32x8xf32>
    %c1_39 = arith.constant 1 : index
    %c0_40 = arith.constant 0 : index
    %c0_41 = arith.constant 0 : index
    %55 = vector.load %arg4[%c1_39, %c0_40, %c0_41] : memref<2x8x16xf32, #tpu.memory_space<vmem>>, vector<1x8x16xf32>
    %56 = vector.shape_cast %55 : vector<1x8x16xf32> to vector<8x16xf32>
    %cst_42 = arith.constant dense<0.000000e+00> : vector<32x8xf32>
    %57 = tpu.matmul %1, %56, %cst_42 {dimension_numbers = #tpu.dot_dimension_numbers<[1], [1], [0], [0], [0, 0, 1, 0], [], []>} : vector<32x16xf32>, vector<8x16xf32>, vector<32x8xf32> -> vector<32x8xf32>
    %c1_43 = arith.constant 1 : index
    %c0_44 = arith.constant 0 : index
    %c0_45 = arith.constant 0 : index
    %58 = vector.load %arg5[%c1_43, %c0_44, %c0_45] : memref<2x1x8xf32, #tpu.memory_space<vmem>>, vector<1x1x8xf32>
    %59 = vector.shape_cast %58 : vector<1x1x8xf32> to vector<1x8xf32>
    %60 = vector.broadcast %59 : vector<1x8xf32> to vector<32x8xf32>
    %61 = arith.addf %57, %60 : vector<32x8xf32>
    %c1_46 = arith.constant 1 : index
    %c0_47 = arith.constant 0 : index
    %c0_48 = arith.constant 0 : index
    %62 = vector.load %arg6[%c1_46, %c0_47, %c0_48] : memref<2x8x16xf32, #tpu.memory_space<vmem>>, vector<1x8x16xf32>
    %63 = vector.shape_cast %62 : vector<1x8x16xf32> to vector<8x16xf32>
    %cst_49 = arith.constant dense<0.000000e+00> : vector<32x8xf32>
    %64 = tpu.matmul %1, %63, %cst_49 {dimension_numbers = #tpu.dot_dimension_numbers<[1], [1], [0], [0], [0, 0, 1, 0], [], []>} : vector<32x16xf32>, vector<8x16xf32>, vector<32x8xf32> -> vector<32x8xf32>
    %c1_50 = arith.constant 1 : index
    %c0_51 = arith.constant 0 : index
    %c0_52 = arith.constant 0 : index
    %65 = vector.load %arg7[%c1_50, %c0_51, %c0_52] : memref<2x1x8xf32, #tpu.memory_space<vmem>>, vector<1x1x8xf32>
    %66 = vector.shape_cast %65 : vector<1x1x8xf32> to vector<1x8xf32>
    %67 = vector.broadcast %66 : vector<1x8xf32> to vector<32x8xf32>
    %68 = arith.addf %64, %67 : vector<32x8xf32>
    %69 = vector.shape_cast %54 : vector<32x8xf32> to vector<4x8x8xf32>
    %70 = vector.shape_cast %61 : vector<32x8xf32> to vector<4x8x8xf32>
    %71 = vector.shape_cast %68 : vector<32x8xf32> to vector<4x8x8xf32>
    "tpu.trace_start"() <{level = 10 : i32, message = "bqd,bkd->bqk"}> : () -> ()
    %cst_53 = arith.constant dense<0.000000e+00> : vector<4x8x8xf32>
    %72 = tpu.matmul %69, %70, %cst_53 {dimension_numbers = #tpu.dot_dimension_numbers<[2], [2], [1], [1], [0, 0, 0, 1, 1, 1], [0], [0]>} : vector<4x8x8xf32>, vector<4x8x8xf32>, vector<4x8x8xf32> -> vector<4x8x8xf32>
    "tpu.trace_stop"() : () -> ()
    %cst_54 = arith.constant dense<0xFF800000> : vector<4x8xf32>
    %73 = vector.multi_reduction <maximumf>, %72, %cst_54 [2] : vector<4x8x8xf32> to vector<4x8xf32>
    %74 = vector.shape_cast %73 : vector<4x8xf32> to vector<4x8x1xf32>
    %75 = vector.broadcast %74 : vector<4x8x1xf32> to vector<4x8x8xf32>
    %76 = arith.subf %72, %75 : vector<4x8x8xf32>
    %77 = math.exp %76 : vector<4x8x8xf32>
    %cst_55 = arith.constant dense<0.000000e+00> : vector<4x8xf32>
    %78 = vector.multi_reduction <add>, %77, %cst_55 [2] : vector<4x8x8xf32> to vector<4x8xf32>
    %79 = vector.shape_cast %78 : vector<4x8xf32> to vector<4x8x1xf32>
    %80 = tpu.reciprocal %79 {approx = true} : vector<4x8x1xf32> -> vector<4x8x1xf32>
    %81 = vector.broadcast %80 : vector<4x8x1xf32> to vector<4x8x8xf32>
    %82 = arith.mulf %77, %81 : vector<4x8x8xf32>
    "tpu.trace_start"() <{level = 10 : i32, message = "bqk,bkd->bqd"}> : () -> ()
    %cst_56 = arith.constant dense<0.000000e+00> : vector<4x8x8xf32>
    %83 = tpu.matmul %82, %71, %cst_56 {dimension_numbers = #tpu.dot_dimension_numbers<[2], [1], [1], [2], [0, 0, 0, 1, 1, 2], [0], [0]>} : vector<4x8x8xf32>, vector<4x8x8xf32>, vector<4x8x8xf32> -> vector<4x8x8xf32>
    "tpu.trace_stop"() : () -> ()
    %84 = vector.shape_cast %83 : vector<4x8x8xf32> to vector<32x8xf32>
    %c1_57 = arith.constant 1 : index
    %c0_58 = arith.constant 0 : index
    %c0_59 = arith.constant 0 : index
    %85 = vector.load %arg8[%c1_57, %c0_58, %c0_59] : memref<2x16x8xf32, #tpu.memory_space<vmem>>, vector<1x16x8xf32>
    %86 = vector.shape_cast %85 : vector<1x16x8xf32> to vector<16x8xf32>
    %cst_60 = arith.constant dense<0.000000e+00> : vector<32x16xf32>
    %87 = tpu.matmul %84, %86, %cst_60 {dimension_numbers = #tpu.dot_dimension_numbers<[1], [1], [0], [0], [0, 0, 1, 0], [], []>} : vector<32x8xf32>, vector<16x8xf32>, vector<32x16xf32> -> vector<32x16xf32>
    %88 = arith.addf %45, %87 : vector<32x16xf32>
    %c0_61 = arith.constant 0 : index
    %c0_62 = arith.constant 0 : index
    %89 = vector.load %arg9[%c0_61, %c0_62] : memref<1x16xf32, #tpu.memory_space<vmem>>, vector<1x16xf32>
    %90 = vector.broadcast %89 : vector<1x16xf32> to vector<32x16xf32>
    %91 = arith.addf %88, %90 : vector<32x16xf32>
    %92 = arith.addf %1, %91 : vector<32x16xf32>
    %c0_63 = arith.constant 0 : index
    %c0_64 = arith.constant 0 : index
    %93 = vector.load %arg10[%c0_63, %c0_64] : memref<1x16xf32, #tpu.memory_space<vmem>>, vector<1x16xf32>
    %c0_65 = arith.constant 0 : index
    %c0_66 = arith.constant 0 : index
    %94 = vector.load %arg11[%c0_65, %c0_66] : memref<1x16xf32, #tpu.memory_space<vmem>>, vector<1x16xf32>
    %cst_67 = arith.constant dense<0.000000e+00> : vector<32xf32>
    %95 = vector.multi_reduction <add>, %92, %cst_67 [1] : vector<32x16xf32> to vector<32xf32>
    %96 = vector.shape_cast %95 : vector<32xf32> to vector<32x1xf32>
    %cst_68 = arith.constant 1.600000e+01 : f32
    %97 = vector.broadcast %cst_68 : f32 to vector<32x1xf32>
    %98 = arith.divf %96, %97 : vector<32x1xf32>
    %99 = vector.broadcast %98 : vector<32x1xf32> to vector<32x16xf32>
    %100 = arith.subf %92, %99 : vector<32x16xf32>
    %101 = arith.mulf %100, %100 : vector<32x16xf32>
    %cst_69 = arith.constant dense<0.000000e+00> : vector<32xf32>
    %102 = vector.multi_reduction <add>, %101, %cst_69 [1] : vector<32x16xf32> to vector<32xf32>
    %103 = vector.shape_cast %102 : vector<32xf32> to vector<32x1xf32>
    %cst_70 = arith.constant 1.600000e+01 : f32
    %104 = vector.broadcast %cst_70 : f32 to vector<32x1xf32>
    %105 = arith.divf %103, %104 : vector<32x1xf32>
    %106 = vector.broadcast %98 : vector<32x1xf32> to vector<32x16xf32>
    %107 = arith.subf %92, %106 : vector<32x16xf32>
    %cst_71 = arith.constant 9.99999974E-6 : f32
    %108 = vector.broadcast %cst_71 : f32 to vector<32x1xf32>
    %109 = arith.addf %105, %108 : vector<32x1xf32>
    %110 = math.rsqrt %109 : vector<32x1xf32>
    %111 = vector.broadcast %110 : vector<32x1xf32> to vector<32x16xf32>
    %112 = arith.mulf %107, %111 : vector<32x16xf32>
    %113 = vector.broadcast %93 : vector<1x16xf32> to vector<32x16xf32>
    %114 = arith.mulf %112, %113 : vector<32x16xf32>
    %115 = vector.broadcast %94 : vector<1x16xf32> to vector<32x16xf32>
    %116 = arith.addf %114, %115 : vector<32x16xf32>
    %c0_72 = arith.constant 0 : index
    %c0_73 = arith.constant 0 : index
    %117 = vector.load %arg12[%c0_72, %c0_73] : memref<64x16xf32, #tpu.memory_space<vmem>>, vector<64x16xf32>
    %cst_74 = arith.constant dense<0.000000e+00> : vector<32x64xf32>
    %118 = tpu.matmul %116, %117, %cst_74 {dimension_numbers = #tpu.dot_dimension_numbers<[1], [1], [0], [0], [0, 0, 1, 0], [], []>} : vector<32x16xf32>, vector<64x16xf32>, vector<32x64xf32> -> vector<32x64xf32>
    %c0_75 = arith.constant 0 : index
    %c0_76 = arith.constant 0 : index
    %119 = vector.load %arg13[%c0_75, %c0_76] : memref<1x64xf32, #tpu.memory_space<vmem>>, vector<1x64xf32>
    %120 = vector.broadcast %119 : vector<1x64xf32> to vector<32x64xf32>
    %121 = arith.addf %118, %120 : vector<32x64xf32>
    %cst_77 = arith.constant 0.000000e+00 : f32
    %122 = vector.broadcast %cst_77 : f32 to vector<32x64xf32>
    %123 = arith.maximumf %121, %122 : vector<32x64xf32>
    %c0_78 = arith.constant 0 : index
    %c0_79 = arith.constant 0 : index
    %124 = vector.load %arg14[%c0_78, %c0_79] : memref<16x64xf32, #tpu.memory_space<vmem>>, vector<16x64xf32>
    %cst_80 = arith.constant dense<0.000000e+00> : vector<32x16xf32>
    %125 = tpu.matmul %123, %124, %cst_80 {dimension_numbers = #tpu.dot_dimension_numbers<[1], [1], [0], [0], [0, 0, 1, 0], [], []>} : vector<32x64xf32>, vector<16x64xf32>, vector<32x16xf32> -> vector<32x16xf32>
    %c0_81 = arith.constant 0 : index
    %c0_82 = arith.constant 0 : index
    %126 = vector.load %arg15[%c0_81, %c0_82] : memref<1x16xf32, #tpu.memory_space<vmem>>, vector<1x16xf32>
    %127 = vector.broadcast %126 : vector<1x16xf32> to vector<32x16xf32>
    %128 = arith.addf %125, %127 : vector<32x16xf32>
    %129 = arith.addf %116, %128 : vector<32x16xf32>
    %c0_83 = arith.constant 0 : index
    %c0_84 = arith.constant 0 : index
    %130 = vector.load %arg16[%c0_83, %c0_84] : memref<1x16xf32, #tpu.memory_space<vmem>>, vector<1x16xf32>
    %c0_85 = arith.constant 0 : index
    %c0_86 = arith.constant 0 : index
    %131 = vector.load %arg17[%c0_85, %c0_86] : memref<1x16xf32, #tpu.memory_space<vmem>>, vector<1x16xf32>
    %cst_87 = arith.constant dense<0.000000e+00> : vector<32xf32>
    %132 = vector.multi_reduction <add>, %129, %cst_87 [1] : vector<32x16xf32> to vector<32xf32>
    %133 = vector.shape_cast %132 : vector<32xf32> to vector<32x1xf32>
    %cst_88 = arith.constant 1.600000e+01 : f32
    %134 = vector.broadcast %cst_88 : f32 to vector<32x1xf32>
    %135 = arith.divf %133, %134 : vector<32x1xf32>
    %136 = vector.broadcast %135 : vector<32x1xf32> to vector<32x16xf32>
    %137 = arith.subf %129, %136 : vector<32x16xf32>
    %138 = arith.mulf %137, %137 : vector<32x16xf32>
    %cst_89 = arith.constant dense<0.000000e+00> : vector<32xf32>
    %139 = vector.multi_reduction <add>, %138, %cst_89 [1] : vector<32x16xf32> to vector<32xf32>
    %140 = vector.shape_cast %139 : vector<32xf32> to vector<32x1xf32>
    %cst_90 = arith.constant 1.600000e+01 : f32
    %141 = vector.broadcast %cst_90 : f32 to vector<32x1xf32>
    %142 = arith.divf %140, %141 : vector<32x1xf32>
    %143 = vector.broadcast %135 : vector<32x1xf32> to vector<32x16xf32>
    %144 = arith.subf %129, %143 : vector<32x16xf32>
    %cst_91 = arith.constant 9.99999974E-6 : f32
    %145 = vector.broadcast %cst_91 : f32 to vector<32x1xf32>
    %146 = arith.addf %142, %145 : vector<32x1xf32>
    %147 = math.rsqrt %146 : vector<32x1xf32>
    %148 = vector.broadcast %147 : vector<32x1xf32> to vector<32x16xf32>
    %149 = arith.mulf %144, %148 : vector<32x16xf32>
    %150 = vector.broadcast %130 : vector<1x16xf32> to vector<32x16xf32>
    %151 = arith.mulf %149, %150 : vector<32x16xf32>
    %152 = vector.broadcast %131 : vector<1x16xf32> to vector<32x16xf32>
    %153 = arith.addf %151, %152 : vector<32x16xf32>
    %c0_92 = arith.constant 0 : index
    %c0_93 = arith.constant 0 : index
    %154 = vector.load %arg18[%c0_92, %c0_93] : memref<16x16xf32, #tpu.memory_space<vmem>>, vector<16x16xf32>
    %cst_94 = arith.constant dense<0.000000e+00> : vector<32x16xf32>
    %155 = tpu.matmul %153, %154, %cst_94 {dimension_numbers = #tpu.dot_dimension_numbers<[1], [1], [0], [0], [0, 0, 1, 0], [], []>} : vector<32x16xf32>, vector<16x16xf32>, vector<32x16xf32> -> vector<32x16xf32>
    %c0_95 = arith.constant 0 : index
    %c0_96 = arith.constant 0 : index
    %156 = vector.load %arg19[%c0_95, %c0_96] : memref<1x16xf32, #tpu.memory_space<vmem>>, vector<1x16xf32>
    %157 = vector.broadcast %156 : vector<1x16xf32> to vector<32x16xf32>
    %158 = arith.addf %155, %157 : vector<32x16xf32>
    %cst_97 = arith.constant 0.000000e+00 : f32
    %159 = vector.broadcast %cst_97 : f32 to vector<32x16xf32>
    %160 = arith.maximumf %158, %159 : vector<32x16xf32>
    %c0_98 = arith.constant 0 : index
    %c0_99 = arith.constant 0 : index
    %161 = vector.load %arg20[%c0_98, %c0_99] : memref<16x16xf32, #tpu.memory_space<vmem>>, vector<16x16xf32>
    %cst_100 = arith.constant dense<0.000000e+00> : vector<32x16xf32>
    %162 = tpu.matmul %160, %161, %cst_100 {dimension_numbers = #tpu.dot_dimension_numbers<[1], [1], [0], [0], [0, 0, 1, 0], [], []>} : vector<32x16xf32>, vector<16x16xf32>, vector<32x16xf32> -> vector<32x16xf32>
    %c0_101 = arith.constant 0 : index
    %c0_102 = arith.constant 0 : index
    %163 = vector.load %arg21[%c0_101, %c0_102] : memref<1x16xf32, #tpu.memory_space<vmem>>, vector<1x16xf32>
    %164 = vector.broadcast %163 : vector<1x16xf32> to vector<32x16xf32>
    %165 = arith.addf %162, %164 : vector<32x16xf32>
    %cst_103 = arith.constant 0.000000e+00 : f32
    %166 = vector.broadcast %cst_103 : f32 to vector<32x16xf32>
    %c0_104 = arith.constant 0 : index
    %c0_105 = arith.constant 0 : index
    %c0_106 = arith.constant 0 : index
    %167 = vector.load %arg22[%c0_104, %c0_105, %c0_106] : memref<2x8x16xf32, #tpu.memory_space<vmem>>, vector<1x8x16xf32>
    %168 = vector.shape_cast %167 : vector<1x8x16xf32> to vector<8x16xf32>
    %cst_107 = arith.constant dense<0.000000e+00> : vector<32x8xf32>
    %169 = tpu.matmul %165, %168, %cst_107 {dimension_numbers = #tpu.dot_dimension_numbers<[1], [1], [0], [0], [0, 0, 1, 0], [], []>} : vector<32x16xf32>, vector<8x16xf32>, vector<32x8xf32> -> vector<32x8xf32>
    %c0_108 = arith.constant 0 : index
    %c0_109 = arith.constant 0 : index
    %c0_110 = arith.constant 0 : index
    %170 = vector.load %arg23[%c0_108, %c0_109, %c0_110] : memref<2x1x8xf32, #tpu.memory_space<vmem>>, vector<1x1x8xf32>
    %171 = vector.shape_cast %170 : vector<1x1x8xf32> to vector<1x8xf32>
    %172 = vector.broadcast %171 : vector<1x8xf32> to vector<32x8xf32>
    %173 = arith.addf %169, %172 : vector<32x8xf32>
    %cst_111 = arith.constant 0.353553385 : f32
    %174 = vector.broadcast %cst_111 : f32 to vector<32x8xf32>
    %175 = arith.mulf %173, %174 : vector<32x8xf32>
    %c0_112 = arith.constant 0 : index
    %c0_113 = arith.constant 0 : index
    %c0_114 = arith.constant 0 : index
    %176 = vector.load %arg24[%c0_112, %c0_113, %c0_114] : memref<2x8x16xf32, #tpu.memory_space<vmem>>, vector<1x8x16xf32>
    %177 = vector.shape_cast %176 : vector<1x8x16xf32> to vector<8x16xf32>
    %cst_115 = arith.constant dense<0.000000e+00> : vector<32x8xf32>
    %178 = tpu.matmul %165, %177, %cst_115 {dimension_numbers = #tpu.dot_dimension_numbers<[1], [1], [0], [0], [0, 0, 1, 0], [], []>} : vector<32x16xf32>, vector<8x16xf32>, vector<32x8xf32> -> vector<32x8xf32>
    %c0_116 = arith.constant 0 : index
    %c0_117 = arith.constant 0 : index
    %c0_118 = arith.constant 0 : index
    %179 = vector.load %arg25[%c0_116, %c0_117, %c0_118] : memref<2x1x8xf32, #tpu.memory_space<vmem>>, vector<1x1x8xf32>
    %180 = vector.shape_cast %179 : vector<1x1x8xf32> to vector<1x8xf32>
    %181 = vector.broadcast %180 : vector<1x8xf32> to vector<32x8xf32>
    %182 = arith.addf %178, %181 : vector<32x8xf32>
    %c0_119 = arith.constant 0 : index
    %c0_120 = arith.constant 0 : index
    %c0_121 = arith.constant 0 : index
    %183 = vector.load %arg26[%c0_119, %c0_120, %c0_121] : memref<2x8x16xf32, #tpu.memory_space<vmem>>, vector<1x8x16xf32>
    %184 = vector.shape_cast %183 : vector<1x8x16xf32> to vector<8x16xf32>
    %cst_122 = arith.constant dense<0.000000e+00> : vector<32x8xf32>
    %185 = tpu.matmul %165, %184, %cst_122 {dimension_numbers = #tpu.dot_dimension_numbers<[1], [1], [0], [0], [0, 0, 1, 0], [], []>} : vector<32x16xf32>, vector<8x16xf32>, vector<32x8xf32> -> vector<32x8xf32>
    %c0_123 = arith.constant 0 : index
    %c0_124 = arith.constant 0 : index
    %c0_125 = arith.constant 0 : index
    %186 = vector.load %arg27[%c0_123, %c0_124, %c0_125] : memref<2x1x8xf32, #tpu.memory_space<vmem>>, vector<1x1x8xf32>
    %187 = vector.shape_cast %186 : vector<1x1x8xf32> to vector<1x8xf32>
    %188 = vector.broadcast %187 : vector<1x8xf32> to vector<32x8xf32>
    %189 = arith.addf %185, %188 : vector<32x8xf32>
    %190 = vector.shape_cast %175 : vector<32x8xf32> to vector<4x8x8xf32>
    %191 = vector.shape_cast %182 : vector<32x8xf32> to vector<4x8x8xf32>
    %192 = vector.shape_cast %189 : vector<32x8xf32> to vector<4x8x8xf32>
    "tpu.trace_start"() <{level = 10 : i32, message = "bqd,bkd->bqk"}> : () -> ()
    %cst_126 = arith.constant dense<0.000000e+00> : vector<4x8x8xf32>
    %193 = tpu.matmul %190, %191, %cst_126 {dimension_numbers = #tpu.dot_dimension_numbers<[2], [2], [1], [1], [0, 0, 0, 1, 1, 1], [0], [0]>} : vector<4x8x8xf32>, vector<4x8x8xf32>, vector<4x8x8xf32> -> vector<4x8x8xf32>
    "tpu.trace_stop"() : () -> ()
    %cst_127 = arith.constant dense<0xFF800000> : vector<4x8xf32>
    %194 = vector.multi_reduction <maximumf>, %193, %cst_127 [2] : vector<4x8x8xf32> to vector<4x8xf32>
    %195 = vector.shape_cast %194 : vector<4x8xf32> to vector<4x8x1xf32>
    %196 = vector.broadcast %195 : vector<4x8x1xf32> to vector<4x8x8xf32>
    %197 = arith.subf %193, %196 : vector<4x8x8xf32>
    %198 = math.exp %197 : vector<4x8x8xf32>
    %cst_128 = arith.constant dense<0.000000e+00> : vector<4x8xf32>
    %199 = vector.multi_reduction <add>, %198, %cst_128 [2] : vector<4x8x8xf32> to vector<4x8xf32>
    %200 = vector.shape_cast %199 : vector<4x8xf32> to vector<4x8x1xf32>
    %201 = tpu.reciprocal %200 {approx = true} : vector<4x8x1xf32> -> vector<4x8x1xf32>
    %202 = vector.broadcast %201 : vector<4x8x1xf32> to vector<4x8x8xf32>
    %203 = arith.mulf %198, %202 : vector<4x8x8xf32>
    "tpu.trace_start"() <{level = 10 : i32, message = "bqk,bkd->bqd"}> : () -> ()
    %cst_129 = arith.constant dense<0.000000e+00> : vector<4x8x8xf32>
    %204 = tpu.matmul %203, %192, %cst_129 {dimension_numbers = #tpu.dot_dimension_numbers<[2], [1], [1], [2], [0, 0, 0, 1, 1, 2], [0], [0]>} : vector<4x8x8xf32>, vector<4x8x8xf32>, vector<4x8x8xf32> -> vector<4x8x8xf32>
    "tpu.trace_stop"() : () -> ()
    %205 = vector.shape_cast %204 : vector<4x8x8xf32> to vector<32x8xf32>
    %c0_130 = arith.constant 0 : index
    %c0_131 = arith.constant 0 : index
    %c0_132 = arith.constant 0 : index
    %206 = vector.load %arg28[%c0_130, %c0_131, %c0_132] : memref<2x16x8xf32, #tpu.memory_space<vmem>>, vector<1x16x8xf32>
    %207 = vector.shape_cast %206 : vector<1x16x8xf32> to vector<16x8xf32>
    %cst_133 = arith.constant dense<0.000000e+00> : vector<32x16xf32>
    %208 = tpu.matmul %205, %207, %cst_133 {dimension_numbers = #tpu.dot_dimension_numbers<[1], [1], [0], [0], [0, 0, 1, 0], [], []>} : vector<32x8xf32>, vector<16x8xf32>, vector<32x16xf32> -> vector<32x16xf32>
    %209 = arith.addf %166, %208 : vector<32x16xf32>
    %c1_134 = arith.constant 1 : index
    %c0_135 = arith.constant 0 : index
    %c0_136 = arith.constant 0 : index
    %210 = vector.load %arg22[%c1_134, %c0_135, %c0_136] : memref<2x8x16xf32, #tpu.memory_space<vmem>>, vector<1x8x16xf32>
    %211 = vector.shape_cast %210 : vector<1x8x16xf32> to vector<8x16xf32>
    %cst_137 = arith.constant dense<0.000000e+00> : vector<32x8xf32>
    %212 = tpu.matmul %165, %211, %cst_137 {dimension_numbers = #tpu.dot_dimension_numbers<[1], [1], [0], [0], [0, 0, 1, 0], [], []>} : vector<32x16xf32>, vector<8x16xf32>, vector<32x8xf32> -> vector<32x8xf32>
    %c1_138 = arith.constant 1 : index
    %c0_139 = arith.constant 0 : index
    %c0_140 = arith.constant 0 : index
    %213 = vector.load %arg23[%c1_138, %c0_139, %c0_140] : memref<2x1x8xf32, #tpu.memory_space<vmem>>, vector<1x1x8xf32>
    %214 = vector.shape_cast %213 : vector<1x1x8xf32> to vector<1x8xf32>
    %215 = vector.broadcast %214 : vector<1x8xf32> to vector<32x8xf32>
    %216 = arith.addf %212, %215 : vector<32x8xf32>
    %cst_141 = arith.constant 0.353553385 : f32
    %217 = vector.broadcast %cst_141 : f32 to vector<32x8xf32>
    %218 = arith.mulf %216, %217 : vector<32x8xf32>
    %c1_142 = arith.constant 1 : index
    %c0_143 = arith.constant 0 : index
    %c0_144 = arith.constant 0 : index
    %219 = vector.load %arg24[%c1_142, %c0_143, %c0_144] : memref<2x8x16xf32, #tpu.memory_space<vmem>>, vector<1x8x16xf32>
    %220 = vector.shape_cast %219 : vector<1x8x16xf32> to vector<8x16xf32>
    %cst_145 = arith.constant dense<0.000000e+00> : vector<32x8xf32>
    %221 = tpu.matmul %165, %220, %cst_145 {dimension_numbers = #tpu.dot_dimension_numbers<[1], [1], [0], [0], [0, 0, 1, 0], [], []>} : vector<32x16xf32>, vector<8x16xf32>, vector<32x8xf32> -> vector<32x8xf32>
    %c1_146 = arith.constant 1 : index
    %c0_147 = arith.constant 0 : index
    %c0_148 = arith.constant 0 : index
    %222 = vector.load %arg25[%c1_146, %c0_147, %c0_148] : memref<2x1x8xf32, #tpu.memory_space<vmem>>, vector<1x1x8xf32>
    %223 = vector.shape_cast %222 : vector<1x1x8xf32> to vector<1x8xf32>
    %224 = vector.broadcast %223 : vector<1x8xf32> to vector<32x8xf32>
    %225 = arith.addf %221, %224 : vector<32x8xf32>
    %c1_149 = arith.constant 1 : index
    %c0_150 = arith.constant 0 : index
    %c0_151 = arith.constant 0 : index
    %226 = vector.load %arg26[%c1_149, %c0_150, %c0_151] : memref<2x8x16xf32, #tpu.memory_space<vmem>>, vector<1x8x16xf32>
    %227 = vector.shape_cast %226 : vector<1x8x16xf32> to vector<8x16xf32>
    %cst_152 = arith.constant dense<0.000000e+00> : vector<32x8xf32>
    %228 = tpu.matmul %165, %227, %cst_152 {dimension_numbers = #tpu.dot_dimension_numbers<[1], [1], [0], [0], [0, 0, 1, 0], [], []>} : vector<32x16xf32>, vector<8x16xf32>, vector<32x8xf32> -> vector<32x8xf32>
    %c1_153 = arith.constant 1 : index
    %c0_154 = arith.constant 0 : index
    %c0_155 = arith.constant 0 : index
    %229 = vector.load %arg27[%c1_153, %c0_154, %c0_155] : memref<2x1x8xf32, #tpu.memory_space<vmem>>, vector<1x1x8xf32>
    %230 = vector.shape_cast %229 : vector<1x1x8xf32> to vector<1x8xf32>
    %231 = vector.broadcast %230 : vector<1x8xf32> to vector<32x8xf32>
    %232 = arith.addf %228, %231 : vector<32x8xf32>
    %233 = vector.shape_cast %218 : vector<32x8xf32> to vector<4x8x8xf32>
    %234 = vector.shape_cast %225 : vector<32x8xf32> to vector<4x8x8xf32>
    %235 = vector.shape_cast %232 : vector<32x8xf32> to vector<4x8x8xf32>
    "tpu.trace_start"() <{level = 10 : i32, message = "bqd,bkd->bqk"}> : () -> ()
    %cst_156 = arith.constant dense<0.000000e+00> : vector<4x8x8xf32>
    %236 = tpu.matmul %233, %234, %cst_156 {dimension_numbers = #tpu.dot_dimension_numbers<[2], [2], [1], [1], [0, 0, 0, 1, 1, 1], [0], [0]>} : vector<4x8x8xf32>, vector<4x8x8xf32>, vector<4x8x8xf32> -> vector<4x8x8xf32>
    "tpu.trace_stop"() : () -> ()
    %cst_157 = arith.constant dense<0xFF800000> : vector<4x8xf32>
    %237 = vector.multi_reduction <maximumf>, %236, %cst_157 [2] : vector<4x8x8xf32> to vector<4x8xf32>
    %238 = vector.shape_cast %237 : vector<4x8xf32> to vector<4x8x1xf32>
    %239 = vector.broadcast %238 : vector<4x8x1xf32> to vector<4x8x8xf32>
    %240 = arith.subf %236, %239 : vector<4x8x8xf32>
    %241 = math.exp %240 : vector<4x8x8xf32>
    %cst_158 = arith.constant dense<0.000000e+00> : vector<4x8xf32>
    %242 = vector.multi_reduction <add>, %241, %cst_158 [2] : vector<4x8x8xf32> to vector<4x8xf32>
    %243 = vector.shape_cast %242 : vector<4x8xf32> to vector<4x8x1xf32>
    %244 = tpu.reciprocal %243 {approx = true} : vector<4x8x1xf32> -> vector<4x8x1xf32>
    %245 = vector.broadcast %244 : vector<4x8x1xf32> to vector<4x8x8xf32>
    %246 = arith.mulf %241, %245 : vector<4x8x8xf32>
    "tpu.trace_start"() <{level = 10 : i32, message = "bqk,bkd->bqd"}> : () -> ()
    %cst_159 = arith.constant dense<0.000000e+00> : vector<4x8x8xf32>
    %247 = tpu.matmul %246, %235, %cst_159 {dimension_numbers = #tpu.dot_dimension_numbers<[2], [1], [1], [2], [0, 0, 0, 1, 1, 2], [0], [0]>} : vector<4x8x8xf32>, vector<4x8x8xf32>, vector<4x8x8xf32> -> vector<4x8x8xf32>
    "tpu.trace_stop"() : () -> ()
    %248 = vector.shape_cast %247 : vector<4x8x8xf32> to vector<32x8xf32>
    %c1_160 = arith.constant 1 : index
    %c0_161 = arith.constant 0 : index
    %c0_162 = arith.constant 0 : index
    %249 = vector.load %arg28[%c1_160, %c0_161, %c0_162] : memref<2x16x8xf32, #tpu.memory_space<vmem>>, vector<1x16x8xf32>
    %250 = vector.shape_cast %249 : vector<1x16x8xf32> to vector<16x8xf32>
    %cst_163 = arith.constant dense<0.000000e+00> : vector<32x16xf32>
    %251 = tpu.matmul %248, %250, %cst_163 {dimension_numbers = #tpu.dot_dimension_numbers<[1], [1], [0], [0], [0, 0, 1, 0], [], []>} : vector<32x8xf32>, vector<16x8xf32>, vector<32x16xf32> -> vector<32x16xf32>
    %252 = arith.addf %209, %251 : vector<32x16xf32>
    %c0_164 = arith.constant 0 : index
    %c0_165 = arith.constant 0 : index
    %253 = vector.load %arg29[%c0_164, %c0_165] : memref<1x16xf32, #tpu.memory_space<vmem>>, vector<1x16xf32>
    %254 = vector.broadcast %253 : vector<1x16xf32> to vector<32x16xf32>
    %255 = arith.addf %252, %254 : vector<32x16xf32>
    %256 = arith.addf %165, %255 : vector<32x16xf32>
    %c0_166 = arith.constant 0 : index
    %c0_167 = arith.constant 0 : index
    %257 = vector.load %arg30[%c0_166, %c0_167] : memref<1x16xf32, #tpu.memory_space<vmem>>, vector<1x16xf32>
    %c0_168 = arith.constant 0 : index
    %c0_169 = arith.constant 0 : index
    %258 = vector.load %arg31[%c0_168, %c0_169] : memref<1x16xf32, #tpu.memory_space<vmem>>, vector<1x16xf32>
    %cst_170 = arith.constant dense<0.000000e+00> : vector<32xf32>
    %259 = vector.multi_reduction <add>, %256, %cst_170 [1] : vector<32x16xf32> to vector<32xf32>
    %260 = vector.shape_cast %259 : vector<32xf32> to vector<32x1xf32>
    %cst_171 = arith.constant 1.600000e+01 : f32
    %261 = vector.broadcast %cst_171 : f32 to vector<32x1xf32>
    %262 = arith.divf %260, %261 : vector<32x1xf32>
    %263 = vector.broadcast %262 : vector<32x1xf32> to vector<32x16xf32>
    %264 = arith.subf %256, %263 : vector<32x16xf32>
    %265 = arith.mulf %264, %264 : vector<32x16xf32>
    %cst_172 = arith.constant dense<0.000000e+00> : vector<32xf32>
    %266 = vector.multi_reduction <add>, %265, %cst_172 [1] : vector<32x16xf32> to vector<32xf32>
    %267 = vector.shape_cast %266 : vector<32xf32> to vector<32x1xf32>
    %cst_173 = arith.constant 1.600000e+01 : f32
    %268 = vector.broadcast %cst_173 : f32 to vector<32x1xf32>
    %269 = arith.divf %267, %268 : vector<32x1xf32>
    %270 = vector.broadcast %262 : vector<32x1xf32> to vector<32x16xf32>
    %271 = arith.subf %256, %270 : vector<32x16xf32>
    %cst_174 = arith.constant 9.99999974E-6 : f32
    %272 = vector.broadcast %cst_174 : f32 to vector<32x1xf32>
    %273 = arith.addf %269, %272 : vector<32x1xf32>
    %274 = math.rsqrt %273 : vector<32x1xf32>
    %275 = vector.broadcast %274 : vector<32x1xf32> to vector<32x16xf32>
    %276 = arith.mulf %271, %275 : vector<32x16xf32>
    %277 = vector.broadcast %257 : vector<1x16xf32> to vector<32x16xf32>
    %278 = arith.mulf %276, %277 : vector<32x16xf32>
    %279 = vector.broadcast %258 : vector<1x16xf32> to vector<32x16xf32>
    %280 = arith.addf %278, %279 : vector<32x16xf32>
    %c0_175 = arith.constant 0 : index
    %c0_176 = arith.constant 0 : index
    %281 = vector.load %arg32[%c0_175, %c0_176] : memref<64x16xf32, #tpu.memory_space<vmem>>, vector<64x16xf32>
    %cst_177 = arith.constant dense<0.000000e+00> : vector<32x64xf32>
    %282 = tpu.matmul %280, %281, %cst_177 {dimension_numbers = #tpu.dot_dimension_numbers<[1], [1], [0], [0], [0, 0, 1, 0], [], []>} : vector<32x16xf32>, vector<64x16xf32>, vector<32x64xf32> -> vector<32x64xf32>
    %c0_178 = arith.constant 0 : index
    %c0_179 = arith.constant 0 : index
    %283 = vector.load %arg33[%c0_178, %c0_179] : memref<1x64xf32, #tpu.memory_space<vmem>>, vector<1x64xf32>
    %284 = vector.broadcast %283 : vector<1x64xf32> to vector<32x64xf32>
    %285 = arith.addf %282, %284 : vector<32x64xf32>
    %cst_180 = arith.constant 0.000000e+00 : f32
    %286 = vector.broadcast %cst_180 : f32 to vector<32x64xf32>
    %287 = arith.maximumf %285, %286 : vector<32x64xf32>
    %c0_181 = arith.constant 0 : index
    %c0_182 = arith.constant 0 : index
    %288 = vector.load %arg34[%c0_181, %c0_182] : memref<16x64xf32, #tpu.memory_space<vmem>>, vector<16x64xf32>
    %cst_183 = arith.constant dense<0.000000e+00> : vector<32x16xf32>
    %289 = tpu.matmul %287, %288, %cst_183 {dimension_numbers = #tpu.dot_dimension_numbers<[1], [1], [0], [0], [0, 0, 1, 0], [], []>} : vector<32x64xf32>, vector<16x64xf32>, vector<32x16xf32> -> vector<32x16xf32>
    %c0_184 = arith.constant 0 : index
    %c0_185 = arith.constant 0 : index
    %290 = vector.load %arg35[%c0_184, %c0_185] : memref<1x16xf32, #tpu.memory_space<vmem>>, vector<1x16xf32>
    %291 = vector.broadcast %290 : vector<1x16xf32> to vector<32x16xf32>
    %292 = arith.addf %289, %291 : vector<32x16xf32>
    %293 = arith.addf %280, %292 : vector<32x16xf32>
    %c0_186 = arith.constant 0 : index
    %c0_187 = arith.constant 0 : index
    %294 = vector.load %arg36[%c0_186, %c0_187] : memref<1x16xf32, #tpu.memory_space<vmem>>, vector<1x16xf32>
    %c0_188 = arith.constant 0 : index
    %c0_189 = arith.constant 0 : index
    %295 = vector.load %arg37[%c0_188, %c0_189] : memref<1x16xf32, #tpu.memory_space<vmem>>, vector<1x16xf32>
    %cst_190 = arith.constant dense<0.000000e+00> : vector<32xf32>
    %296 = vector.multi_reduction <add>, %293, %cst_190 [1] : vector<32x16xf32> to vector<32xf32>
    %297 = vector.shape_cast %296 : vector<32xf32> to vector<32x1xf32>
    %cst_191 = arith.constant 1.600000e+01 : f32
    %298 = vector.broadcast %cst_191 : f32 to vector<32x1xf32>
    %299 = arith.divf %297, %298 : vector<32x1xf32>
    %300 = vector.broadcast %299 : vector<32x1xf32> to vector<32x16xf32>
    %301 = arith.subf %293, %300 : vector<32x16xf32>
    %302 = arith.mulf %301, %301 : vector<32x16xf32>
    %cst_192 = arith.constant dense<0.000000e+00> : vector<32xf32>
    %303 = vector.multi_reduction <add>, %302, %cst_192 [1] : vector<32x16xf32> to vector<32xf32>
    %304 = vector.shape_cast %303 : vector<32xf32> to vector<32x1xf32>
    %cst_193 = arith.constant 1.600000e+01 : f32
    %305 = vector.broadcast %cst_193 : f32 to vector<32x1xf32>
    %306 = arith.divf %304, %305 : vector<32x1xf32>
    %307 = vector.broadcast %299 : vector<32x1xf32> to vector<32x16xf32>
    %308 = arith.subf %293, %307 : vector<32x16xf32>
    %cst_194 = arith.constant 9.99999974E-6 : f32
    %309 = vector.broadcast %cst_194 : f32 to vector<32x1xf32>
    %310 = arith.addf %306, %309 : vector<32x1xf32>
    %311 = math.rsqrt %310 : vector<32x1xf32>
    %312 = vector.broadcast %311 : vector<32x1xf32> to vector<32x16xf32>
    %313 = arith.mulf %308, %312 : vector<32x16xf32>
    %314 = vector.broadcast %294 : vector<1x16xf32> to vector<32x16xf32>
    %315 = arith.mulf %313, %314 : vector<32x16xf32>
    %316 = vector.broadcast %295 : vector<1x16xf32> to vector<32x16xf32>
    %317 = arith.addf %315, %316 : vector<32x16xf32>
    %c0_195 = arith.constant 0 : index
    %c0_196 = arith.constant 0 : index
    %318 = vector.load %arg38[%c0_195, %c0_196] : memref<16x16xf32, #tpu.memory_space<vmem>>, vector<16x16xf32>
    %cst_197 = arith.constant dense<0.000000e+00> : vector<32x16xf32>
    %319 = tpu.matmul %317, %318, %cst_197 {dimension_numbers = #tpu.dot_dimension_numbers<[1], [1], [0], [0], [0, 0, 1, 0], [], []>} : vector<32x16xf32>, vector<16x16xf32>, vector<32x16xf32> -> vector<32x16xf32>
    %c0_198 = arith.constant 0 : index
    %c0_199 = arith.constant 0 : index
    %320 = vector.load %arg39[%c0_198, %c0_199] : memref<1x16xf32, #tpu.memory_space<vmem>>, vector<1x16xf32>
    %321 = vector.broadcast %320 : vector<1x16xf32> to vector<32x16xf32>
    %322 = arith.addf %319, %321 : vector<32x16xf32>
    %cst_200 = arith.constant 0.000000e+00 : f32
    %323 = vector.broadcast %cst_200 : f32 to vector<32x16xf32>
    %324 = arith.maximumf %322, %323 : vector<32x16xf32>
    %c0_201 = arith.constant 0 : index
    %c0_202 = arith.constant 0 : index
    %325 = vector.load %arg40[%c0_201, %c0_202] : memref<8x16xf32, #tpu.memory_space<vmem>>, vector<8x16xf32>
    %cst_203 = arith.constant dense<0.000000e+00> : vector<32x8xf32>
    %326 = tpu.matmul %324, %325, %cst_203 {dimension_numbers = #tpu.dot_dimension_numbers<[1], [1], [0], [0], [0, 0, 1, 0], [], []>} : vector<32x16xf32>, vector<8x16xf32>, vector<32x8xf32> -> vector<32x8xf32>
    %c0_204 = arith.constant 0 : index
    %c0_205 = arith.constant 0 : index
    %327 = vector.load %arg41[%c0_204, %c0_205] : memref<1x8xf32, #tpu.memory_space<vmem>>, vector<1x8xf32>
    %328 = vector.broadcast %327 : vector<1x8xf32> to vector<32x8xf32>
    %329 = arith.addf %326, %328 : vector<32x8xf32>
    %330 = vector.shape_cast %329 : vector<32x8xf32> to vector<4x8x8xf32>
    %c0_206 = arith.constant 0 : index
    %c0_207 = arith.constant 0 : index
    %c0_208 = arith.constant 0 : index
    %331 = vector.load %arg42[%c0_206, %c0_207, %c0_208] : memref<4x8x8xf32, #tpu.memory_space<vmem>>, vector<4x8x8xf32>
    tpu.vector_store %arg42[%c0_206, %c0_207, %c0_208], %330 {strides = array<i32>} : memref<4x8x8xf32, #tpu.memory_space<vmem>>, vector<4x8x8xf32>,
    return
  }
  func.func @transform_0(%arg0: i32) -> (i32, i32, i32) {
    %c0_i32 = arith.constant 0 : i32
    %c0_i32_0 = arith.constant 0 : i32
    %c0_i32_1 = arith.constant 0 : i32
    return %arg0, %c0_i32, %c0_i32_0 : i32, i32, i32
  }
  func.func @transform_1(%arg0: i32) -> (i32, i32, i32) {
    %c0_i32 = arith.constant 0 : i32
    %c0_i32_0 = arith.constant 0 : i32
    %c0_i32_1 = arith.constant 0 : i32
    %c0_i32_2 = arith.constant 0 : i32
    return %c0_i32, %c0_i32_0, %c0_i32_1 : i32, i32, i32
  }
  func.func @transform_2(%arg0: i32) -> (i32, i32, i32) {
    %c0_i32 = arith.constant 0 : i32
    %c0_i32_0 = arith.constant 0 : i32
    %c0_i32_1 = arith.constant 0 : i32
    %c0_i32_2 = arith.constant 0 : i32
    return %c0_i32, %c0_i32_0, %c0_i32_1 : i32, i32, i32
  }
  func.func @transform_3(%arg0: i32) -> (i32, i32, i32) {
    %c0_i32 = arith.constant 0 : i32
    %c0_i32_0 = arith.constant 0 : i32
    %c0_i32_1 = arith.constant 0 : i32
    %c0_i32_2 = arith.constant 0 : i32
    return %c0_i32, %c0_i32_0, %c0_i32_1 : i32, i32, i32
  }
  func.func @transform_4(%arg0: i32) -> (i32, i32, i32) {
    %c0_i32 = arith.constant 0 : i32
    %c0_i32_0 = arith.constant 0 : i32
    %c0_i32_1 = arith.constant 0 : i32
    %c0_i32_2 = arith.constant 0 : i32
    return %c0_i32, %c0_i32_0, %c0_i32_1 : i32, i32, i32
  }
  func.func @transform_5(%arg0: i32) -> (i32, i32, i32) {
    %c0_i32 = arith.constant 0 : i32
    %c0_i32_0 = arith.constant 0 : i32
    %c0_i32_1 = arith.constant 0 : i32
    %c0_i32_2 = arith.constant 0 : i32
    return %c0_i32, %c0_i32_0, %c0_i32_1 : i32, i32, i32
  }
  func.func @transform_6(%arg0: i32) -> (i32, i32, i32) {
    %c0_i32 = arith.constant 0 : i32
    %c0_i32_0 = arith.constant 0 : i32
    %c0_i32_1 = arith.constant 0 : i32
    %c0_i32_2 = arith.constant 0 : i32
    return %c0_i32, %c0_i32_0, %c0_i32_1 : i32, i32, i32
  }
  func.func @transform_7(%arg0: i32) -> (i32, i32, i32) {
    %c0_i32 = arith.constant 0 : i32
    %c0_i32_0 = arith.constant 0 : i32
    %c0_i32_1 = arith.constant 0 : i32
    %c0_i32_2 = arith.constant 0 : i32
    return %c0_i32, %c0_i32_0, %c0_i32_1 : i32, i32, i32
  }
  func.func @transform_8(%arg0: i32) -> (i32, i32) {
    %c0_i32 = arith.constant 0 : i32
    %c0_i32_0 = arith.constant 0 : i32
    %c0_i32_1 = arith.constant 0 : i32
    return %c0_i32, %c0_i32_0 : i32, i32
  }
  func.func @transform_9(%arg0: i32) -> (i32, i32) {
    %c0_i32 = arith.constant 0 : i32
    %c0_i32_0 = arith.constant 0 : i32
    %c0_i32_1 = arith.constant 0 : i32
    return %c0_i32, %c0_i32_0 : i32, i32
  }
  func.func @transform_10(%arg0: i32) -> (i32, i32) {
    %c0_i32 = arith.constant 0 : i32
    %c0_i32_0 = arith.constant 0 : i32
    %c0_i32_1 = arith.constant 0 : i32
    return %c0_i32, %c0_i32_0 : i32, i32
  }
  func.func @transform_11(%arg0: i32) -> (i32, i32) {
    %c0_i32 = arith.constant 0 : i32
    %c0_i32_0 = arith.constant 0 : i32
    %c0_i32_1 = arith.constant 0 : i32
    return %c0_i32, %c0_i32_0 : i32, i32
  }
  func.func @transform_12(%arg0: i32) -> (i32, i32) {
    %c0_i32 = arith.constant 0 : i32
    %c0_i32_0 = arith.constant 0 : i32
    %c0_i32_1 = arith.constant 0 : i32
    return %c0_i32, %c0_i32_0 : i32, i32
  }
  func.func @transform_13(%arg0: i32) -> (i32, i32) {
    %c0_i32 = arith.constant 0 : i32
    %c0_i32_0 = arith.constant 0 : i32
    %c0_i32_1 = arith.constant 0 : i32
    return %c0_i32, %c0_i32_0 : i32, i32
  }
  func.func @transform_14(%arg0: i32) -> (i32, i32) {
    %c0_i32 = arith.constant 0 : i32
    %c0_i32_0 = arith.constant 0 : i32
    %c0_i32_1 = arith.constant 0 : i32
    return %c0_i32, %c0_i32_0 : i32, i32
  }
  func.func @transform_15(%arg0: i32) -> (i32, i32) {
    %c0_i32 = arith.constant 0 : i32
    %c0_i32_0 = arith.constant 0 : i32
    %c0_i32_1 = arith.constant 0 : i32
    return %c0_i32, %c0_i32_0 : i32, i32
  }
  func.func @transform_16(%arg0: i32) -> (i32, i32) {
    %c0_i32 = arith.constant 0 : i32
    %c0_i32_0 = arith.constant 0 : i32
    %c0_i32_1 = arith.constant 0 : i32
    return %c0_i32, %c0_i32_0 : i32, i32
  }
  func.func @transform_17(%arg0: i32) -> (i32, i32) {
    %c0_i32 = arith.constant 0 : i32
    %c0_i32_0 = arith.constant 0 : i32
    %c0_i32_1 = arith.constant 0 : i32
    return %c0_i32, %c0_i32_0 : i32, i32
  }
  func.func @transform_18(%arg0: i32) -> (i32, i32) {
    %c0_i32 = arith.constant 0 : i32
    %c0_i32_0 = arith.constant 0 : i32
    %c0_i32_1 = arith.constant 0 : i32
    return %c0_i32, %c0_i32_0 : i32, i32
  }
  func.func @transform_19(%arg0: i32) -> (i32, i32) {
    %c0_i32 = arith.constant 0 : i32
    %c0_i32_0 = arith.constant 0 : i32
    %c0_i32_1 = arith.constant 0 : i32
    return %c0_i32, %c0_i32_0 : i32, i32
  }
  func.func @transform_20(%arg0: i32) -> (i32, i32) {
    %c0_i32 = arith.constant 0 : i32
    %c0_i32_0 = arith.constant 0 : i32
    %c0_i32_1 = arith.constant 0 : i32
    return %c0_i32, %c0_i32_0 : i32, i32
  }
  func.func @transform_21(%arg0: i32) -> (i32, i32, i32) {
    %c0_i32 = arith.constant 0 : i32
    %c0_i32_0 = arith.constant 0 : i32
    %c0_i32_1 = arith.constant 0 : i32
    %c0_i32_2 = arith.constant 0 : i32
    return %c0_i32, %c0_i32_0, %c0_i32_1 : i32, i32, i32
  }
  func.func @transform_22(%arg0: i32) -> (i32, i32, i32) {
    %c0_i32 = arith.constant 0 : i32
    %c0_i32_0 = arith.constant 0 : i32
    %c0_i32_1 = arith.constant 0 : i32
    %c0_i32_2 = arith.constant 0 : i32
    return %c0_i32, %c0_i32_0, %c0_i32_1 : i32, i32, i32
  }
  func.func @transform_23(%arg0: i32) -> (i32, i32, i32) {
    %c0_i32 = arith.constant 0 : i32
    %c0_i32_0 = arith.constant 0 : i32
    %c0_i32_1 = arith.constant 0 : i32
    %c0_i32_2 = arith.constant 0 : i32
    return %c0_i32, %c0_i32_0, %c0_i32_1 : i32, i32, i32
  }
  func.func @transform_24(%arg0: i32) -> (i32, i32, i32) {
    %c0_i32 = arith.constant 0 : i32
    %c0_i32_0 = arith.constant 0 : i32
    %c0_i32_1 = arith.constant 0 : i32
    %c0_i32_2 = arith.constant 0 : i32
    return %c0_i32, %c0_i32_0, %c0_i32_1 : i32, i32, i32
  }
  func.func @transform_25(%arg0: i32) -> (i32, i32, i32) {
    %c0_i32 = arith.constant 0 : i32
    %c0_i32_0 = arith.constant 0 : i32
    %c0_i32_1 = arith.constant 0 : i32
    %c0_i32_2 = arith.constant 0 : i32
    return %c0_i32, %c0_i32_0, %c0_i32_1 : i32, i32, i32
  }
  func.func @transform_26(%arg0: i32) -> (i32, i32, i32) {
    %c0_i32 = arith.constant 0 : i32
    %c0_i32_0 = arith.constant 0 : i32
    %c0_i32_1 = arith.constant 0 : i32
    %c0_i32_2 = arith.constant 0 : i32
    return %c0_i32, %c0_i32_0, %c0_i32_1 : i32, i32, i32
  }
  func.func @transform_27(%arg0: i32) -> (i32, i32, i32) {
    %c0_i32 = arith.constant 0 : i32
    %c0_i32_0 = arith.constant 0 : i32
    %c0_i32_1 = arith.constant 0 : i32
    %c0_i32_2 = arith.constant 0 : i32
    return %c0_i32, %c0_i32_0, %c0_i32_1 : i32, i32, i32
  }
  func.func @transform_28(%arg0: i32) -> (i32, i32) {
    %c0_i32 = arith.constant 0 : i32
    %c0_i32_0 = arith.constant 0 : i32
    %c0_i32_1 = arith.constant 0 : i32
    return %c0_i32, %c0_i32_0 : i32, i32
  }
  func.func @transform_29(%arg0: i32) -> (i32, i32) {
    %c0_i32 = arith.constant 0 : i32
    %c0_i32_0 = arith.constant 0 : i32
    %c0_i32_1 = arith.constant 0 : i32
    return %c0_i32, %c0_i32_0 : i32, i32
  }
  func.func @transform_30(%arg0: i32) -> (i32, i32) {
    %c0_i32 = arith.constant 0 : i32
    %c0_i32_0 = arith.constant 0 : i32
    %c0_i32_1 = arith.constant 0 : i32
    return %c0_i32, %c0_i32_0 : i32, i32
  }
  func.func @transform_31(%arg0: i32) -> (i32, i32) {
    %c0_i32 = arith.constant 0 : i32
    %c0_i32_0 = arith.constant 0 : i32
    %c0_i32_1 = arith.constant 0 : i32
    return %c0_i32, %c0_i32_0 : i32, i32
  }
  func.func @transform_32(%arg0: i32) -> (i32, i32) {
    %c0_i32 = arith.constant 0 : i32
    %c0_i32_0 = arith.constant 0 : i32
    %c0_i32_1 = arith.constant 0 : i32
    return %c0_i32, %c0_i32_0 : i32, i32
  }
  func.func @transform_33(%arg0: i32) -> (i32, i32) {
    %c0_i32 = arith.constant 0 : i32
    %c0_i32_0 = arith.constant 0 : i32
    %c0_i32_1 = arith.constant 0 : i32
    return %c0_i32, %c0_i32_0 : i32, i32
  }
  func.func @transform_34(%arg0: i32) -> (i32, i32) {
    %c0_i32 = arith.constant 0 : i32
    %c0_i32_0 = arith.constant 0 : i32
    %c0_i32_1 = arith.constant 0 : i32
    return %c0_i32, %c0_i32_0 : i32, i32
  }
  func.func @transform_35(%arg0: i32) -> (i32, i32) {
    %c0_i32 = arith.constant 0 : i32
    %c0_i32_0 = arith.constant 0 : i32
    %c0_i32_1 = arith.constant 0 : i32
    return %c0_i32, %c0_i32_0 : i32, i32
  }
  func.func @transform_36(%arg0: i32) -> (i32, i32) {
    %c0_i32 = arith.constant 0 : i32
    %c0_i32_0 = arith.constant 0 : i32
    %c0_i32_1 = arith.constant 0 : i32
    return %c0_i32, %c0_i32_0 : i32, i32
  }
  func.func @transform_37(%arg0: i32) -> (i32, i32) {
    %c0_i32 = arith.constant 0 : i32
    %c0_i32_0 = arith.constant 0 : i32
    %c0_i32_1 = arith.constant 0 : i32
    return %c0_i32, %c0_i32_0 : i32, i32
  }
  func.func @transform_38(%arg0: i32) -> (i32, i32) {
    %c0_i32 = arith.constant 0 : i32
    %c0_i32_0 = arith.constant 0 : i32
    %c0_i32_1 = arith.constant 0 : i32
    return %c0_i32, %c0_i32_0 : i32, i32
  }
  func.func @transform_39(%arg0: i32) -> (i32, i32) {
    %c0_i32 = arith.constant 0 : i32
    %c0_i32_0 = arith.constant 0 : i32
    %c0_i32_1 = arith.constant 0 : i32
    return %c0_i32, %c0_i32_0 : i32, i32
  }
  func.func @transform_40(%arg0: i32) -> (i32, i32) {
    %c0_i32 = arith.constant 0 : i32
    %c0_i32_0 = arith.constant 0 : i32
    %c0_i32_1 = arith.constant 0 : i32
    return %c0_i32, %c0_i32_0 : i32, i32
  }
  func.func @transform_41(%arg0: i32) -> (i32, i32, i32) {
    %c0_i32 = arith.constant 0 : i32
    %c0_i32_0 = arith.constant 0 : i32
    %c0_i32_1 = arith.constant 0 : i32
    return %arg0, %c0_i32, %c0_i32_0 : i32, i32, i32
  }
}

</mosaic_0001>

<llo_original>
// kernel: tpu_custom_call.1
$region0: #{tpu_custom_call.1}
  #allocation0 [shape = 'u32[]', space=smem, size = 0x4, offset = 0x4, fixed_abs, tag = 'smem constant byte address 0x4 - core index']
  #allocation1 [shape = 'u32[72,128]{1,0:T(1,128)}', space=vmem, size = 0x9000, scoped, tag = 'internal scratch']
  %s0 = inlined_call_operand.smem [shape: u32[42], index: -1, kind: input, shape index: {}]
  %s1 = sld [smem:[%s0]]
  %s2 = scalar_lea.smem %s0, 1
  %s3 = sld [smem:[%s2]]
  %s4 = scalar_lea.smem %s0, 2
  %s5 = sld [smem:[%s4]]
  %s6 = scalar_lea.smem %s0, 3
  %s7 = sld [smem:[%s6]]
  %s8 = scalar_lea.smem %s0, 4
  %s9 = sld [smem:[%s8]]
  %s10 = scalar_lea.smem %s0, 5
  %s11 = sld [smem:[%s10]]
  %s12 = scalar_lea.smem %s0, 6
  %s13 = sld [smem:[%s12]]
  %s14 = scalar_lea.smem %s0, 7
  %s15 = sld [smem:[%s14]]
  %s16 = scalar_lea.smem %s0, 8
  %s17 = sld [smem:[%s16]]
  %s18 = scalar_lea.smem %s0, 9
  %s19 = sld [smem:[%s18]]
  %s20 = scalar_lea.smem %s0, 10
  %s21 = sld [smem:[%s20]]
  %s22 = scalar_lea.smem %s0, 11
  %s23 = sld [smem:[%s22]]
  %s24 = scalar_lea.smem %s0, 12
  %s25 = sld [smem:[%s24]]
  %s26 = scalar_lea.smem %s0, 13
  %s27 = sld [smem:[%s26]]
  %s28 = scalar_lea.smem %s0, 14
  %s29 = sld [smem:[%s28]]
  %s30 = scalar_lea.smem %s0, 15
  %s31 = sld [smem:[%s30]]
  %s32 = scalar_lea.smem %s0, 16
  %s33 = sld [smem:[%s32]]
  %s34 = scalar_lea.smem %s0, 17
  %s35 = sld [smem:[%s34]]
  %s36 = scalar_lea.smem %s0, 18
  %s37 = sld [smem:[%s36]]
  %s38 = scalar_lea.smem %s0, 19
  %s39 = sld [smem:[%s38]]
  %s40 = scalar_lea.smem %s0, 20
  %s41 = sld [smem:[%s40]]
  %s42 = scalar_lea.smem %s0, 21
  %s43 = sld [smem:[%s42]]
  %s44 = scalar_lea.smem %s0, 22
  %s45 = sld [smem:[%s44]]
  %s46 = scalar_lea.smem %s0, 23
  %s47 = sld [smem:[%s46]]
  %s48 = scalar_lea.smem %s0, 24
  %s49 = sld [smem:[%s48]]
  %s50 = scalar_lea.smem %s0, 25
  %s51 = sld [smem:[%s50]]
  %s52 = scalar_lea.smem %s0, 26
  %s53 = sld [smem:[%s52]]
  %s54 = scalar_lea.smem %s0, 27
  %s55 = sld [smem:[%s54]]
  %s56 = scalar_lea.smem %s0, 28
  %s57 = sld [smem:[%s56]]
  %s58 = scalar_lea.smem %s0, 29
  %s59 = sld [smem:[%s58]]
  %s60 = scalar_lea.smem %s0, 30
  %s61 = sld [smem:[%s60]]
  %s62 = scalar_lea.smem %s0, 31
  %s63 = sld [smem:[%s62]]
  %s64 = scalar_lea.smem %s0, 32
  %s65 = sld [smem:[%s64]]
  %s66 = scalar_lea.smem %s0, 33
  %s67 = sld [smem:[%s66]]
  %s68 = scalar_lea.smem %s0, 34
  %s69 = sld [smem:[%s68]]
  %s70 = scalar_lea.smem %s0, 35
  %s71 = sld [smem:[%s70]]
  %s72 = scalar_lea.smem %s0, 36
  %s73 = sld [smem:[%s72]]
  %s74 = scalar_lea.smem %s0, 37
  %s75 = sld [smem:[%s74]]
  %s76 = scalar_lea.smem %s0, 38
  %s77 = sld [smem:[%s76]]
  %s78 = scalar_lea.smem %s0, 39
  %s79 = sld [smem:[%s78]]
  %s80 = scalar_lea.smem %s0, 40
  %s81 = sld [smem:[%s80]]
  %s82 = scalar_lea.smem %s0, 41
  %s83 = sld [smem:[%s82]]
  %s84 = sld [smem:[#allocation0]]
  $region261: #{tpu_custom_call.1} parent=0
    _
  %s86 = ssub.s32 1, %s84
  %s87 = scalar_select 0, %s86, %s84
  $region1: #{tpu_custom_call.1} parent=0
    #allocation2 [shape = 'u8[1024]{0}', space=vmem, size = 0x400, scoped, tag = 'input window, operand 2, single buffered']
    #allocation3 [shape = 's32[2]{0}', space=sflag, size = 0x8, scoped, tag = 'scoped memory for tpu_custom_call.1']
    #allocation4 [shape = 's32[2]{0}', space=sflag, size = 0x8, scoped, tag = 'scoped memory for tpu_custom_call.1']
    #allocation5 [shape = 'u8[1024]{0}', space=vmem, size = 0x400, scoped, tag = 'input window, operand 6, single buffered']
    #allocation6 [shape = 's32[1]{0}', space=sflag, size = 0x4, scoped, tag = 'scoped memory for tpu_custom_call.1']
    #allocation7 [shape = 'u8[512]{0}', space=vmem, size = 0x400, scoped, tag = 'input window, operand 8, single buffered']
    #allocation8 [shape = 'u8[512]{0}', space=vmem, size = 0x400, scoped, tag = 'input window, operand 9, single buffered']
    #allocation9 [shape = 's32[1]{0}', space=sflag, size = 0x4, scoped, tag = 'scoped memory for tpu_custom_call.1']
    #allocation10 [shape = 'u8[512]{0}', space=vmem, size = 0x400, scoped, tag = 'input window, operand 10, single buffered']
    #allocation11 [shape = 'u8[512]{0}', space=vmem, size = 0x400, scoped, tag = 'input window, operand 12, single buffered']
    #allocation12 [shape = 's32[1]{0}', space=sflag, size = 0x4, scoped, tag = 'scoped memory for tpu_custom_call.1']
    #allocation13 [shape = 'u8[512]{0}', space=vmem, size = 0x400, scoped, tag = 'input window, operand 14, single buffered']
    #allocation14 [shape = 'u8[512]{0}', space=vmem, size = 0x400, scoped, tag = 'input window, operand 15, single buffered']
    #allocation15 [shape = 's32[1]{0}', space=sflag, size = 0x4, scoped, tag = 'scoped memory for tpu_custom_call.1']
    #allocation16 [shape = 'u8[512]{0}', space=vmem, size = 0x400, scoped, tag = 'input window, operand 16, single buffered']
    #allocation17 [shape = 'u8[512]{0}', space=vmem, size = 0x400, scoped, tag = 'input window, operand 18, single buffered']
    #allocation18 [shape = 's32[1]{0}', space=sflag, size = 0x4, scoped, tag = 'scoped memory for tpu_custom_call.1']
    #allocation19 [shape = 'u8[512]{0}', space=vmem, size = 0x400, scoped, tag = 'input window, operand 20, single buffered']
    #allocation20 [shape = 'u8[1024]{0}', space=vmem, size = 0x400, scoped, tag = 'input window, operand 22, single buffered']
    #allocation21 [shape = 's32[1]{0}', space=sflag, size = 0x4, scoped, tag = 'scoped memory for tpu_custom_call.1']
    #allocation22 [shape = 'u8[1024]{0}', space=vmem, size = 0x400, scoped, tag = 'input window, operand 24, single buffered']
    #allocation23 [shape = 'u8[1024]{0}', space=vmem, size = 0x400, scoped, tag = 'input window, operand 26, single buffered']
    #allocation24 [shape = 's32[1]{0}', space=sflag, size = 0x4, scoped, tag = 'scoped memory for tpu_custom_call.1']
    #allocation25 [shape = 'u8[512]{0}', space=vmem, size = 0x400, scoped, tag = 'input window, operand 28, single buffered']
    #allocation26 [shape = 'u8[512]{0}', space=vmem, size = 0x400, scoped, tag = 'input window, operand 29, single buffered']
    #allocation27 [shape = 's32[1]{0}', space=sflag, size = 0x4, scoped, tag = 'scoped memory for tpu_custom_call.1']
    #allocation28 [shape = 'u8[32768]{0}', space=vmem, size = 0x8000, scoped, tag = 'output window, operand 0']
    %88 = vsyncpa [#allocation3], 0
    %89 = vsyncpa [#allocation6], 0
    %90 = vsyncpa [#allocation9], 0
    %91 = vsyncpa [#allocation12], 0
    %92 = vsyncpa [#allocation15], 0
    %93 = vsyncpa [#allocation18], 0
    %94 = vsyncpa [#allocation21], 0
    %95 = vsyncpa [#allocation24], 0
    %96 = vsyncpa [#allocation27], 0
    %97 = vsyncpa [#allocation4], 0
    %s98 = scalar_lea.sflag [#allocation4], 1
    %99 = vsyncpa %s98, 0
    loop: start=0, step=1, limit=4
    $region2: #{tpu_custom_call.1} parent=1 // loop_pre_header
      _
    $region3: #{tpu_custom_call.1} parent=1 // loop_header
      %s101 = sphi 0, %s105
      %p102 = scmp.ge.s32.totalorder %s101, 4
      %s111 = sphi 0, %s113
      %s114 = sphi 0, %s111
      %s115 = sphi 0, %s114
      %s131 = sphi 0, %s115
      %s135 = sphi 0, %s135
      %s137 = sphi 0, %s135
      %s138 = sphi 0, %s137
      %s152 = sphi 0, %s138
      %s156 = sphi 0, %s156
      %s158 = sphi 0, %s156
      %s159 = sphi 0, %s158
      %s173 = sphi 0, %s159
      %s177 = sphi 0, %s177
      %s179 = sphi 0, %s177
      %s180 = sphi 0, %s179
      %s194 = sphi 0, %s180
      %s198 = sphi 0, %s198
      %s200 = sphi 0, %s198
      %s201 = sphi 0, %s200
      %s215 = sphi 0, %s201
      %s219 = sphi 0, %s219
      %s221 = sphi 0, %s219
      %s222 = sphi 0, %s221
      %s236 = sphi 0, %s222
      %s240 = sphi 0, %s240
      %s242 = sphi 0, %s240
      %s243 = sphi 0, %s242
      %s257 = sphi 0, %s243
      %s261 = sphi 0, %s261
      %s263 = sphi 0, %s261
      %s264 = sphi 0, %s263
      %s278 = sphi 0, %s264
      %s282 = sphi 0, %s282
      %s284 = sphi 0, %s282
      %s285 = sphi 0, %s284
      %s299 = sphi 0, %s285
      %s303 = sphi 0, %s303
      %s305 = sphi 0, %s303
      %s306 = sphi 0, %s305
      %s320 = sphi 0, %s306
      %s324 = sphi 0, %s324
      %s326 = sphi 0, %s324
      %s327 = sphi 0, %s326
      %s341 = sphi 0, %s327
      %s345 = sphi 0, %s345
      %s347 = sphi 0, %s345
      %s348 = sphi 0, %s347
      %s362 = sphi 0, %s348
      %s366 = sphi 0, %s366
      %s368 = sphi 0, %s366
      %s369 = sphi 0, %s368
      %s383 = sphi 0, %s369
      %s387 = sphi 0, %s387
      %s389 = sphi 0, %s387
      %s390 = sphi 0, %s389
      %s404 = sphi 0, %s390
      %s408 = sphi 0, %s408
      %s410 = sphi 0, %s408
      %s411 = sphi 0, %s410
      %s425 = sphi 0, %s411
      %s429 = sphi 0, %s429
      %s431 = sphi 0, %s429
      %s432 = sphi 0, %s431
      %s446 = sphi 0, %s432
      %s450 = sphi 0, %s450
      %s452 = sphi 0, %s450
      %s453 = sphi 0, %s452
      %s467 = sphi 0, %s453
      %s471 = sphi 0, %s471
      %s473 = sphi 0, %s471
      %s474 = sphi 0, %s473
      %s488 = sphi 0, %s474
      %s492 = sphi 0, %s492
      %s494 = sphi 0, %s492
      %s495 = sphi 0, %s494
      %s509 = sphi 0, %s495
      %s513 = sphi 0, %s513
      %s515 = sphi 0, %s513
      %s516 = sphi 0, %s515
      %s530 = sphi 0, %s516
      %s534 = sphi 0, %s534
      %s536 = sphi 0, %s534
      %s537 = sphi 0, %s536
      %s551 = sphi 0, %s537
      %s555 = sphi 0, %s555
      %s557 = sphi 0, %s555
      %s558 = sphi 0, %s557
      %s572 = sphi 0, %s558
      %s576 = sphi 0, %s576
      %s578 = sphi 0, %s576
      %s579 = sphi 0, %s578
      %s593 = sphi 0, %s579
      %s597 = sphi 0, %s597
      %s599 = sphi 0, %s597
      %s600 = sphi 0, %s599
      %s614 = sphi 0, %s600
      %s618 = sphi 0, %s618
      %s620 = sphi 0, %s618
      %s621 = sphi 0, %s620
      %s635 = sphi 0, %s621
      %s639 = sphi 0, %s639
      %s641 = sphi 0, %s639
      %s642 = sphi 0, %s641
      %s656 = sphi 0, %s642
      %s660 = sphi 0, %s660
      %s662 = sphi 0, %s660
      %s663 = sphi 0, %s662
      %s677 = sphi 0, %s663
      %s681 = sphi 0, %s681
      %s683 = sphi 0, %s681
      %s684 = sphi 0, %s683
      %s698 = sphi 0, %s684
      %s702 = sphi 0, %s702
      %s704 = sphi 0, %s702
      %s705 = sphi 0, %s704
      %s719 = sphi 0, %s705
      %s723 = sphi 0, %s723
      %s725 = sphi 0, %s723
      %s726 = sphi 0, %s725
      %s740 = sphi 0, %s726
      %s744 = sphi 0, %s744
      %s746 = sphi 0, %s744
      %s747 = sphi 0, %s746
      %s761 = sphi 0, %s747
      %s765 = sphi 0, %s765
      %s767 = sphi 0, %s765
      %s768 = sphi 0, %s767
      %s782 = sphi 0, %s768
      %s786 = sphi 0, %s786
      %s788 = sphi 0, %s786
      %s789 = sphi 0, %s788
      %s803 = sphi 0, %s789
      %s807 = sphi 0, %s807
      %s809 = sphi 0, %s807
      %s810 = sphi 0, %s809
      %s824 = sphi 0, %s810
      %s828 = sphi 0, %s828
      %s830 = sphi 0, %s828
      %s831 = sphi 0, %s830
      %s845 = sphi 0, %s831
      %s849 = sphi 0, %s849
      %s851 = sphi 0, %s849
      %s852 = sphi 0, %s851
      %s866 = sphi 0, %s852
      %s870 = sphi 0, %s870
      %s872 = sphi 0, %s870
      %s873 = sphi 0, %s872
      %s887 = sphi 0, %s873
      %s891 = sphi 0, %s891
      %s893 = sphi 0, %s891
      %s894 = sphi 0, %s893
      %s908 = sphi 0, %s894
      %s912 = sphi 0, %s912
      %s914 = sphi 0, %s912
      %s915 = sphi 0, %s914
      %s929 = sphi 0, %s915
      %s933 = sphi 0, %s933
      %s935 = sphi 0, %s933
      %s936 = sphi 0, %s935
      %s950 = sphi 0, %s936
      %s954 = sphi 0, %s954
      %s956 = sphi 0, %s954
      %s957 = sphi 0, %s956
      %s971 = sphi 0, %s957
      %s977 = sphi 0, %s979
      %s980 = sphi 0, %s977
      %s981 = sphi 0, %s980
      %s997 = sphi 0, %s981
    $region4: #{tpu_custom_call.1} parent=1 // loop_header_branch
      %104 = sbr.rel (%p102) target = $region8
    $region5: #{tpu_custom_call.1} parent=1 // loop_body
      %s106 = ssub.s32 %s101, 1
      %s107 = ssub.s32 %s101, 2
      %s108 = sadd.s32 %s101, 1
      %s109 = ssub.s32 %s101, %s108
      %p110 = scmp.eq.s32.totalorder %s109, 0
      %s112 = sadd.s32 %s111, 1
      %s113 = scalar_select %p110, %s111, %s112
      %p116 = pneg %p110
      %p117 = scmp.eq.s32.totalorder %s101, 1
      %p118 = por %p116, %p117
      %p119 = scmp.ne.s32.totalorder %s111, %s114
      %p120 = scmp.eq.s32.totalorder %s101, 0
      %p121 = por %p119, %p120
      %p122 = scmp.ne.s32.totalorder %s111, %s114
      %p123 = scmp.eq.s32.totalorder %s106, 1
      %p124 = por %p122, %p123
      %p125 = scmp.ne.s32.totalorder %s114, %s115
      %p126 = scmp.eq.s32.totalorder %s106, 0
      %p127 = por %p125, %p126
      %p128 = scmp.ne.s32.totalorder %s114, %s115
      %p129 = scmp.eq.s32.totalorder %s107, 1
      %p130 = por %p128, %p129
      %p132 = scmp.ne.s32.totalorder %s115, %s131
      %p133 = scmp.eq.s32.totalorder %s107, 0
      %p134 = por %p132, %p133
      %s136 = sadd.s32 %s135, 1
      %p139 = scmp.eq.s32.totalorder %s101, 1
      %p140 = scmp.ne.s32.totalorder %s135, %s137
      %p141 = scmp.eq.s32.totalorder %s101, 0
      %p142 = por %p140, %p141
      %p143 = scmp.ne.s32.totalorder %s135, %s137
      %p144 = scmp.eq.s32.totalorder %s106, 1
      %p145 = por %p143, %p144
      %p146 = scmp.ne.s32.totalorder %s137, %s138
      %p147 = scmp.eq.s32.totalorder %s106, 0
      %p148 = por %p146, %p147
      %p149 = scmp.ne.s32.totalorder %s137, %s138
      %p150 = scmp.eq.s32.totalorder %s107, 1
      %p151 = por %p149, %p150
      %p153 = scmp.ne.s32.totalorder %s138, %s152
      %p154 = scmp.eq.s32.totalorder %s107, 0
      %p155 = por %p153, %p154
      %s157 = sadd.s32 %s156, 1
      %p160 = scmp.eq.s32.totalorder %s101, 1
      %p161 = scmp.ne.s32.totalorder %s156, %s158
      %p162 = scmp.eq.s32.totalorder %s101, 0
      %p163 = por %p161, %p162
      %p164 = scmp.ne.s32.totalorder %s156, %s158
      %p165 = scmp.eq.s32.totalorder %s106, 1
      %p166 = por %p164, %p165
      %p167 = scmp.ne.s32.totalorder %s158, %s159
      %p168 = scmp.eq.s32.totalorder %s106, 0
      %p169 = por %p167, %p168
      %p170 = scmp.ne.s32.totalorder %s158, %s159
      %p171 = scmp.eq.s32.totalorder %s107, 1
      %p172 = por %p170, %p171
      %p174 = scmp.ne.s32.totalorder %s159, %s173
      %p175 = scmp.eq.s32.totalorder %s107, 0
      %p176 = por %p174, %p175
      %s178 = sadd.s32 %s177, 1
      %p181 = scmp.eq.s32.totalorder %s101, 1
      %p182 = scmp.ne.s32.totalorder %s177, %s179
      %p183 = scmp.eq.s32.totalorder %s101, 0
      %p184 = por %p182, %p183
      %p185 = scmp.ne.s32.totalorder %s177, %s179
      %p186 = scmp.eq.s32.totalorder %s106, 1
      %p187 = por %p185, %p186
      %p188 = scmp.ne.s32.totalorder %s179, %s180
      %p189 = scmp.eq.s32.totalorder %s106, 0
      %p190 = por %p188, %p189
      %p191 = scmp.ne.s32.totalorder %s179, %s180
      %p192 = scmp.eq.s32.totalorder %s107, 1
      %p193 = por %p191, %p192
      %p195 = scmp.ne.s32.totalorder %s180, %s194
      %p196 = scmp.eq.s32.totalorder %s107, 0
      %p197 = por %p195, %p196
      %s199 = sadd.s32 %s198, 1
      %p202 = scmp.eq.s32.totalorder %s101, 1
      %p203 = scmp.ne.s32.totalorder %s198, %s200
      %p204 = scmp.eq.s32.totalorder %s101, 0
      %p205 = por %p203, %p204
      %p206 = scmp.ne.s32.totalorder %s198, %s200
      %p207 = scmp.eq.s32.totalorder %s106, 1
      %p208 = por %p206, %p207
      %p209 = scmp.ne.s32.totalorder %s200, %s201
      %p210 = scmp.eq.s32.totalorder %s106, 0
      %p211 = por %p209, %p210
      %p212 = scmp.ne.s32.totalorder %s200, %s201
      %p213 = scmp.eq.s32.totalorder %s107, 1
      %p214 = por %p212, %p213
      %p216 = scmp.ne.s32.totalorder %s201, %s215
      %p217 = scmp.eq.s32.totalorder %s107, 0
      %p218 = por %p216, %p217
      %s220 = sadd.s32 %s219, 1
      %p223 = scmp.eq.s32.totalorder %s101, 1
      %p224 = scmp.ne.s32.totalorder %s219, %s221
      %p225 = scmp.eq.s32.totalorder %s101, 0
      %p226 = por %p224, %p225
      %p227 = scmp.ne.s32.totalorder %s219, %s221
      %p228 = scmp.eq.s32.totalorder %s106, 1
      %p229 = por %p227, %p228
      %p230 = scmp.ne.s32.totalorder %s221, %s222
      %p231 = scmp.eq.s32.totalorder %s106, 0
      %p232 = por %p230, %p231
      %p233 = scmp.ne.s32.totalorder %s221, %s222
      %p234 = scmp.eq.s32.totalorder %s107, 1
      %p235 = por %p233, %p234
      %p237 = scmp.ne.s32.totalorder %s222, %s236
      %p238 = scmp.eq.s32.totalorder %s107, 0
      %p239 = por %p237, %p238
      %s241 = sadd.s32 %s240, 1
      %p244 = scmp.eq.s32.totalorder %s101, 1
      %p245 = scmp.ne.s32.totalorder %s240, %s242
      %p246 = scmp.eq.s32.totalorder %s101, 0
      %p247 = por %p245, %p246
      %p248 = scmp.ne.s32.totalorder %s240, %s242
      %p249 = scmp.eq.s32.totalorder %s106, 1
      %p250 = por %p248, %p249
      %p251 = scmp.ne.s32.totalorder %s242, %s243
      %p252 = scmp.eq.s32.totalorder %s106, 0
      %p253 = por %p251, %p252
      %p254 = scmp.ne.s32.totalorder %s242, %s243
      %p255 = scmp.eq.s32.totalorder %s107, 1
      %p256 = por %p254, %p255
      %p258 = scmp.ne.s32.totalorder %s243, %s257
      %p259 = scmp.eq.s32.totalorder %s107, 0
      %p260 = por %p258, %p259
      %s262 = sadd.s32 %s261, 1
      %p265 = scmp.eq.s32.totalorder %s101, 1
      %p266 = scmp.ne.s32.totalorder %s261, %s263
      %p267 = scmp.eq.s32.totalorder %s101, 0
      %p268 = por %p266, %p267
      %p269 = scmp.ne.s32.totalorder %s261, %s263
      %p270 = scmp.eq.s32.totalorder %s106, 1
      %p271 = por %p269, %p270
      %p272 = scmp.ne.s32.totalorder %s263, %s264
      %p273 = scmp.eq.s32.totalorder %s106, 0
      %p274 = por %p272, %p273
      %p275 = scmp.ne.s32.totalorder %s263, %s264
      %p276 = scmp.eq.s32.totalorder %s107, 1
      %p277 = por %p275, %p276
      %p279 = scmp.ne.s32.totalorder %s264, %s278
      %p280 = scmp.eq.s32.totalorder %s107, 0
      %p281 = por %p279, %p280
      %s283 = sadd.s32 %s282, 1
      %p286 = scmp.eq.s32.totalorder %s101, 1
      %p287 = scmp.ne.s32.totalorder %s282, %s284
      %p288 = scmp.eq.s32.totalorder %s101, 0
      %p289 = por %p287, %p288
      %p290 = scmp.ne.s32.totalorder %s282, %s284
      %p291 = scmp.eq.s32.totalorder %s106, 1
      %p292 = por %p290, %p291
      %p293 = scmp.ne.s32.totalorder %s284, %s285
      %p294 = scmp.eq.s32.totalorder %s106, 0
      %p295 = por %p293, %p294
      %p296 = scmp.ne.s32.totalorder %s284, %s285
      %p297 = scmp.eq.s32.totalorder %s107, 1
      %p298 = por %p296, %p297
      %p300 = scmp.ne.s32.totalorder %s285, %s299
      %p301 = scmp.eq.s32.totalorder %s107, 0
      %p302 = por %p300, %p301
      %s304 = sadd.s32 %s303, 1
      %p307 = scmp.eq.s32.totalorder %s101, 1
      %p308 = scmp.ne.s32.totalorder %s303, %s305
      %p309 = scmp.eq.s32.totalorder %s101, 0
      %p310 = por %p308, %p309
      %p311 = scmp.ne.s32.totalorder %s303, %s305
      %p312 = scmp.eq.s32.totalorder %s106, 1
      %p313 = por %p311, %p312
      %p314 = scmp.ne.s32.totalorder %s305, %s306
      %p315 = scmp.eq.s32.totalorder %s106, 0
      %p316 = por %p314, %p315
      %p317 = scmp.ne.s32.totalorder %s305, %s306
      %p318 = scmp.eq.s32.totalorder %s107, 1
      %p319 = por %p317, %p318
      %p321 = scmp.ne.s32.totalorder %s306, %s320
      %p322 = scmp.eq.s32.totalorder %s107, 0
      %p323 = por %p321, %p322
      %s325 = sadd.s32 %s324, 1
      %p328 = scmp.eq.s32.totalorder %s101, 1
      %p329 = scmp.ne.s32.totalorder %s324, %s326
      %p330 = scmp.eq.s32.totalorder %s101, 0
      %p331 = por %p329, %p330
      %p332 = scmp.ne.s32.totalorder %s324, %s326
      %p333 = scmp.eq.s32.totalorder %s106, 1
      %p334 = por %p332, %p333
      %p335 = scmp.ne.s32.totalorder %s326, %s327
      %p336 = scmp.eq.s32.totalorder %s106, 0
      %p337 = por %p335, %p336
      %p338 = scmp.ne.s32.totalorder %s326, %s327
      %p339 = scmp.eq.s32.totalorder %s107, 1
      %p340 = por %p338, %p339
      %p342 = scmp.ne.s32.totalorder %s327, %s341
      %p343 = scmp.eq.s32.totalorder %s107, 0
      %p344 = por %p342, %p343
      %s346 = sadd.s32 %s345, 1
      %p349 = scmp.eq.s32.totalorder %s101, 1
      %p350 = scmp.ne.s32.totalorder %s345, %s347
      %p351 = scmp.eq.s32.totalorder %s101, 0
      %p352 = por %p350, %p351
      %p353 = scmp.ne.s32.totalorder %s345, %s347
      %p354 = scmp.eq.s32.totalorder %s106, 1
      %p355 = por %p353, %p354
      %p356 = scmp.ne.s32.totalorder %s347, %s348
      %p357 = scmp.eq.s32.totalorder %s106, 0
      %p358 = por %p356, %p357
      %p359 = scmp.ne.s32.totalorder %s347, %s348
      %p360 = scmp.eq.s32.totalorder %s107, 1
      %p361 = por %p359, %p360
      %p363 = scmp.ne.s32.totalorder %s348, %s362
      %p364 = scmp.eq.s32.totalorder %s107, 0
      %p365 = por %p363, %p364
      %s367 = sadd.s32 %s366, 1
      %p370 = scmp.eq.s32.totalorder %s101, 1
      %p371 = scmp.ne.s32.totalorder %s366, %s368
      %p372 = scmp.eq.s32.totalorder %s101, 0
      %p373 = por %p371, %p372
      %p374 = scmp.ne.s32.totalorder %s366, %s368
      %p375 = scmp.eq.s32.totalorder %s106, 1
      %p376 = por %p374, %p375
      %p377 = scmp.ne.s32.totalorder %s368, %s369
      %p378 = scmp.eq.s32.totalorder %s106, 0
      %p379 = por %p377, %p378
      %p380 = scmp.ne.s32.totalorder %s368, %s369
      %p381 = scmp.eq.s32.totalorder %s107, 1
      %p382 = por %p380, %p381
      %p384 = scmp.ne.s32.totalorder %s369, %s383
      %p385 = scmp.eq.s32.totalorder %s107, 0
      %p386 = por %p384, %p385
      %s388 = sadd.s32 %s387, 1
      %p391 = scmp.eq.s32.totalorder %s101, 1
      %p392 = scmp.ne.s32.totalorder %s387, %s389
      %p393 = scmp.eq.s32.totalorder %s101, 0
      %p394 = por %p392, %p393
      %p395 = scmp.ne.s32.totalorder %s387, %s389
      %p396 = scmp.eq.s32.totalorder %s106, 1
      %p397 = por %p395, %p396
      %p398 = scmp.ne.s32.totalorder %s389, %s390
      %p399 = scmp.eq.s32.totalorder %s106, 0
      %p400 = por %p398, %p399
      %p401 = scmp.ne.s32.totalorder %s389, %s390
      %p402 = scmp.eq.s32.totalorder %s107, 1
      %p403 = por %p401, %p402
      %p405 = scmp.ne.s32.totalorder %s390, %s404
      %p406 = scmp.eq.s32.totalorder %s107, 0
      %p407 = por %p405, %p406
      %s409 = sadd.s32 %s408, 1
      %p412 = scmp.eq.s32.totalorder %s101, 1
      %p413 = scmp.ne.s32.totalorder %s408, %s410
      %p414 = scmp.eq.s32.totalorder %s101, 0
      %p415 = por %p413, %p414
      %p416 = scmp.ne.s32.totalorder %s408, %s410
      %p417 = scmp.eq.s32.totalorder %s106, 1
      %p418 = por %p416, %p417
      %p419 = scmp.ne.s32.totalorder %s410, %s411
      %p420 = scmp.eq.s32.totalorder %s106, 0
      %p421 = por %p419, %p420
      %p422 = scmp.ne.s32.totalorder %s410, %s411
      %p423 = scmp.eq.s32.totalorder %s107, 1
      %p424 = por %p422, %p423
      %p426 = scmp.ne.s32.totalorder %s411, %s425
      %p427 = scmp.eq.s32.totalorder %s107, 0
      %p428 = por %p426, %p427
      %s430 = sadd.s32 %s429, 1
      %p433 = scmp.eq.s32.totalorder %s101, 1
      %p434 = scmp.ne.s32.totalorder %s429, %s431
      %p435 = scmp.eq.s32.totalorder %s101, 0
      %p436 = por %p434, %p435
      %p437 = scmp.ne.s32.totalorder %s429, %s431
      %p438 = scmp.eq.s32.totalorder %s106, 1
      %p439 = por %p437, %p438
      %p440 = scmp.ne.s32.totalorder %s431, %s432
      %p441 = scmp.eq.s32.totalorder %s106, 0
      %p442 = por %p440, %p441
      %p443 = scmp.ne.s32.totalorder %s431, %s432
      %p444 = scmp.eq.s32.totalorder %s107, 1
      %p445 = por %p443, %p444
      %p447 = scmp.ne.s32.totalorder %s432, %s446
      %p448 = scmp.eq.s32.totalorder %s107, 0
      %p449 = por %p447, %p448
      %s451 = sadd.s32 %s450, 1
      %p454 = scmp.eq.s32.totalorder %s101, 1
      %p455 = scmp.ne.s32.totalorder %s450, %s452
      %p456 = scmp.eq.s32.totalorder %s101, 0
      %p457 = por %p455, %p456
      %p458 = scmp.ne.s32.totalorder %s450, %s452
      %p459 = scmp.eq.s32.totalorder %s106, 1
      %p460 = por %p458, %p459
      %p461 = scmp.ne.s32.totalorder %s452, %s453
      %p462 = scmp.eq.s32.totalorder %s106, 0
      %p463 = por %p461, %p462
      %p464 = scmp.ne.s32.totalorder %s452, %s453
      %p465 = scmp.eq.s32.totalorder %s107, 1
      %p466 = por %p464, %p465
      %p468 = scmp.ne.s32.totalorder %s453, %s467
      %p469 = scmp.eq.s32.totalorder %s107, 0
      %p470 = por %p468, %p469
      %s472 = sadd.s32 %s471, 1
      %p475 = scmp.eq.s32.totalorder %s101, 1
      %p476 = scmp.ne.s32.totalorder %s471, %s473
      %p477 = scmp.eq.s32.totalorder %s101, 0
      %p478 = por %p476, %p477
      %p479 = scmp.ne.s32.totalorder %s471, %s473
      %p480 = scmp.eq.s32.totalorder %s106, 1
      %p481 = por %p479, %p480
      %p482 = scmp.ne.s32.totalorder %s473, %s474
      %p483 = scmp.eq.s32.totalorder %s106, 0
      %p484 = por %p482, %p483
      %p485 = scmp.ne.s32.totalorder %s473, %s474
      %p486 = scmp.eq.s32.totalorder %s107, 1
      %p487 = por %p485, %p486
      %p489 = scmp.ne.s32.totalorder %s474, %s488
      %p490 = scmp.eq.s32.totalorder %s107, 0
      %p491 = por %p489, %p490
      %s493 = sadd.s32 %s492, 1
      %p496 = scmp.eq.s32.totalorder %s101, 1
      %p497 = scmp.ne.s32.totalorder %s492, %s494
      %p498 = scmp.eq.s32.totalorder %s101, 0
      %p499 = por %p497, %p498
      %p500 = scmp.ne.s32.totalorder %s492, %s494
      %p501 = scmp.eq.s32.totalorder %s106, 1
      %p502 = por %p500, %p501
      %p503 = scmp.ne.s32.totalorder %s494, %s495
      %p504 = scmp.eq.s32.totalorder %s106, 0
      %p505 = por %p503, %p504
      %p506 = scmp.ne.s32.totalorder %s494, %s495
      %p507 = scmp.eq.s32.totalorder %s107, 1
      %p508 = por %p506, %p507
      %p510 = scmp.ne.s32.totalorder %s495, %s509
      %p511 = scmp.eq.s32.totalorder %s107, 0
      %p512 = por %p510, %p511
      %s514 = sadd.s32 %s513, 1
      %p517 = scmp.eq.s32.totalorder %s101, 1
      %p518 = scmp.ne.s32.totalorder %s513, %s515
      %p519 = scmp.eq.s32.totalorder %s101, 0
      %p520 = por %p518, %p519
      %p521 = scmp.ne.s32.totalorder %s513, %s515
      %p522 = scmp.eq.s32.totalorder %s106, 1
      %p523 = por %p521, %p522
      %p524 = scmp.ne.s32.totalorder %s515, %s516
      %p525 = scmp.eq.s32.totalorder %s106, 0
      %p526 = por %p524, %p525
      %p527 = scmp.ne.s32.totalorder %s515, %s516
      %p528 = scmp.eq.s32.totalorder %s107, 1
      %p529 = por %p527, %p528
      %p531 = scmp.ne.s32.totalorder %s516, %s530
      %p532 = scmp.eq.s32.totalorder %s107, 0
      %p533 = por %p531, %p532
      %s535 = sadd.s32 %s534, 1
      %p538 = scmp.eq.s32.totalorder %s101, 1
      %p539 = scmp.ne.s32.totalorder %s534, %s536
      %p540 = scmp.eq.s32.totalorder %s101, 0
      %p541 = por %p539, %p540
      %p542 = scmp.ne.s32.totalorder %s534, %s536
      %p543 = scmp.eq.s32.totalorder %s106, 1
      %p544 = por %p542, %p543
      %p545 = scmp.ne.s32.totalorder %s536, %s537
      %p546 = scmp.eq.s32.totalorder %s106, 0
      %p547 = por %p545, %p546
      %p548 = scmp.ne.s32.totalorder %s536, %s537
      %p549 = scmp.eq.s32.totalorder %s107, 1
      %p550 = por %p548, %p549
      %p552 = scmp.ne.s32.totalorder %s537, %s551
      %p553 = scmp.eq.s32.totalorder %s107, 0
      %p554 = por %p552, %p553
      %s556 = sadd.s32 %s555, 1
      %p559 = scmp.eq.s32.totalorder %s101, 1
      %p560 = scmp.ne.s32.totalorder %s555, %s557
      %p561 = scmp.eq.s32.totalorder %s101, 0
      %p562 = por %p560, %p561
      %p563 = scmp.ne.s32.totalorder %s555, %s557
      %p564 = scmp.eq.s32.totalorder %s106, 1
      %p565 = por %p563, %p564
      %p566 = scmp.ne.s32.totalorder %s557, %s558
      %p567 = scmp.eq.s32.totalorder %s106, 0
      %p568 = por %p566, %p567
      %p569 = scmp.ne.s32.totalorder %s557, %s558
      %p570 = scmp.eq.s32.totalorder %s107, 1
      %p571 = por %p569, %p570
      %p573 = scmp.ne.s32.totalorder %s558, %s572
      %p574 = scmp.eq.s32.totalorder %s107, 0
      %p575 = por %p573, %p574
      %s577 = sadd.s32 %s576, 1
      %p580 = scmp.eq.s32.totalorder %s101, 1
      %p581 = scmp.ne.s32.totalorder %s576, %s578
      %p582 = scmp.eq.s32.totalorder %s101, 0
      %p583 = por %p581, %p582
      %p584 = scmp.ne.s32.totalorder %s576, %s578
      %p585 = scmp.eq.s32.totalorder %s106, 1
      %p586 = por %p584, %p585
      %p587 = scmp.ne.s32.totalorder %s578, %s579
      %p588 = scmp.eq.s32.totalorder %s106, 0
      %p589 = por %p587, %p588
      %p590 = scmp.ne.s32.totalorder %s578, %s579
      %p591 = scmp.eq.s32.totalorder %s107, 1
      %p592 = por %p590, %p591
      %p594 = scmp.ne.s32.totalorder %s579, %s593
      %p595 = scmp.eq.s32.totalorder %s107, 0
      %p596 = por %p594, %p595
      %s598 = sadd.s32 %s597, 1
      %p601 = scmp.eq.s32.totalorder %s101, 1
      %p602 = scmp.ne.s32.totalorder %s597, %s599
      %p603 = scmp.eq.s32.totalorder %s101, 0
      %p604 = por %p602, %p603
      %p605 = scmp.ne.s32.totalorder %s597, %s599
      %p606 = scmp.eq.s32.totalorder %s106, 1
      %p607 = por %p605, %p606
      %p608 = scmp.ne.s32.totalorder %s599, %s600
      %p609 = scmp.eq.s32.totalorder %s106, 0
      %p610 = por %p608, %p609
      %p611 = scmp.ne.s32.totalorder %s599, %s600
      %p612 = scmp.eq.s32.totalorder %s107, 1
      %p613 = por %p611, %p612
      %p615 = scmp.ne.s32.totalorder %s600, %s614
      %p616 = scmp.eq.s32.totalorder %s107, 0
      %p617 = por %p615, %p616
      %s619 = sadd.s32 %s618, 1
      %p622 = scmp.eq.s32.totalorder %s101, 1
      %p623 = scmp.ne.s32.totalorder %s618, %s620
      %p624 = scmp.eq.s32.totalorder %s101, 0
      %p625 = por %p623, %p624
      %p626 = scmp.ne.s32.totalorder %s618, %s620
      %p627 = scmp.eq.s32.totalorder %s106, 1
      %p628 = por %p626, %p627
      %p629 = scmp.ne.s32.totalorder %s620, %s621
      %p630 = scmp.eq.s32.totalorder %s106, 0
      %p631 = por %p629, %p630
      %p632 = scmp.ne.s32.totalorder %s620, %s621
      %p633 = scmp.eq.s32.totalorder %s107, 1
      %p634 = por %p632, %p633
      %p636 = scmp.ne.s32.totalorder %s621, %s635
      %p637 = scmp.eq.s32.totalorder %s107, 0
      %p638 = por %p636, %p637
      %s640 = sadd.s32 %s639, 1
      %p643 = scmp.eq.s32.totalorder %s101, 1
      %p644 = scmp.ne.s32.totalorder %s639, %s641
      %p645 = scmp.eq.s32.totalorder %s101, 0
      %p646 = por %p644, %p645
      %p647 = scmp.ne.s32.totalorder %s639, %s641
      %p648 = scmp.eq.s32.totalorder %s106, 1
      %p649 = por %p647, %p648
      %p650 = scmp.ne.s32.totalorder %s641, %s642
      %p651 = scmp.eq.s32.totalorder %s106, 0
      %p652 = por %p650, %p651
      %p653 = scmp.ne.s32.totalorder %s641, %s642
      %p654 = scmp.eq.s32.totalorder %s107, 1
      %p655 = por %p653, %p654
      %p657 = scmp.ne.s32.totalorder %s642, %s656
      %p658 = scmp.eq.s32.totalorder %s107, 0
      %p659 = por %p657, %p658
      %s661 = sadd.s32 %s660, 1
      %p664 = scmp.eq.s32.totalorder %s101, 1
      %p665 = scmp.ne.s32.totalorder %s660, %s662
      %p666 = scmp.eq.s32.totalorder %s101, 0
      %p667 = por %p665, %p666
      %p668 = scmp.ne.s32.totalorder %s660, %s662
      %p669 = scmp.eq.s32.totalorder %s106, 1
      %p670 = por %p668, %p669
      %p671 = scmp.ne.s32.totalorder %s662, %s663
      %p672 = scmp.eq.s32.totalorder %s106, 0
      %p673 = por %p671, %p672
      %p674 = scmp.ne.s32.totalorder %s662, %s663
      %p675 = scmp.eq.s32.totalorder %s107, 1
      %p676 = por %p674, %p675
      %p678 = scmp.ne.s32.totalorder %s663, %s677
      %p679 = scmp.eq.s32.totalorder %s107, 0
      %p680 = por %p678, %p679
      %s682 = sadd.s32 %s681, 1
      %p685 = scmp.eq.s32.totalorder %s101, 1
      %p686 = scmp.ne.s32.totalorder %s681, %s683
      %p687 = scmp.eq.s32.totalorder %s101, 0
      %p688 = por %p686, %p687
      %p689 = scmp.ne.s32.totalorder %s681, %s683
      %p690 = scmp.eq.s32.totalorder %s106, 1
      %p691 = por %p689, %p690
      %p692 = scmp.ne.s32.totalorder %s683, %s684
      %p693 = scmp.eq.s32.totalorder %s106, 0
      %p694 = por %p692, %p693
      %p695 = scmp.ne.s32.totalorder %s683, %s684
      %p696 = scmp.eq.s32.totalorder %s107, 1
      %p697 = por %p695, %p696
      %p699 = scmp.ne.s32.totalorder %s684, %s698
      %p700 = scmp.eq.s32.totalorder %s107, 0
      %p701 = por %p699, %p700
      %s703 = sadd.s32 %s702, 1
      %p706 = scmp.eq.s32.totalorder %s101, 1
      %p707 = scmp.ne.s32.totalorder %s702, %s704
      %p708 = scmp.eq.s32.totalorder %s101, 0
      %p709 = por %p707, %p708
      %p710 = scmp.ne.s32.totalorder %s702, %s704
      %p711 = scmp.eq.s32.totalorder %s106, 1
      %p712 = por %p710, %p711
      %p713 = scmp.ne.s32.totalorder %s704, %s705
      %p714 = scmp.eq.s32.totalorder %s106, 0
      %p715 = por %p713, %p714
      %p716 = scmp.ne.s32.totalorder %s704, %s705
      %p717 = scmp.eq.s32.totalorder %s107, 1
      %p718 = por %p716, %p717
      %p720 = scmp.ne.s32.totalorder %s705, %s719
      %p721 = scmp.eq.s32.totalorder %s107, 0
      %p722 = por %p720, %p721
      %s724 = sadd.s32 %s723, 1
      %p727 = scmp.eq.s32.totalorder %s101, 1
      %p728 = scmp.ne.s32.totalorder %s723, %s725
      %p729 = scmp.eq.s32.totalorder %s101, 0
      %p730 = por %p728, %p729
      %p731 = scmp.ne.s32.totalorder %s723, %s725
      %p732 = scmp.eq.s32.totalorder %s106, 1
      %p733 = por %p731, %p732
      %p734 = scmp.ne.s32.totalorder %s725, %s726
      %p735 = scmp.eq.s32.totalorder %s106, 0
      %p736 = por %p734, %p735
      %p737 = scmp.ne.s32.totalorder %s725, %s726
      %p738 = scmp.eq.s32.totalorder %s107, 1
      %p739 = por %p737, %p738
      %p741 = scmp.ne.s32.totalorder %s726, %s740
      %p742 = scmp.eq.s32.totalorder %s107, 0
      %p743 = por %p741, %p742
      %s745 = sadd.s32 %s744, 1
      %p748 = scmp.eq.s32.totalorder %s101, 1
      %p749 = scmp.ne.s32.totalorder %s744, %s746
      %p750 = scmp.eq.s32.totalorder %s101, 0
      %p751 = por %p749, %p750
      %p752 = scmp.ne.s32.totalorder %s744, %s746
      %p753 = scmp.eq.s32.totalorder %s106, 1
      %p754 = por %p752, %p753
      %p755 = scmp.ne.s32.totalorder %s746, %s747
      %p756 = scmp.eq.s32.totalorder %s106, 0
      %p757 = por %p755, %p756
      %p758 = scmp.ne.s32.totalorder %s746, %s747
      %p759 = scmp.eq.s32.totalorder %s107, 1
      %p760 = por %p758, %p759
      %p762 = scmp.ne.s32.totalorder %s747, %s761
      %p763 = scmp.eq.s32.totalorder %s107, 0
      %p764 = por %p762, %p763
      %s766 = sadd.s32 %s765, 1
      %p769 = scmp.eq.s32.totalorder %s101, 1
      %p770 = scmp.ne.s32.totalorder %s765, %s767
      %p771 = scmp.eq.s32.totalorder %s101, 0
      %p772 = por %p770, %p771
      %p773 = scmp.ne.s32.totalorder %s765, %s767
      %p774 = scmp.eq.s32.totalorder %s106, 1
      %p775 = por %p773, %p774
      %p776 = scmp.ne.s32.totalorder %s767, %s768
      %p777 = scmp.eq.s32.totalorder %s106, 0
      %p778 = por %p776, %p777
      %p779 = scmp.ne.s32.totalorder %s767, %s768
      %p780 = scmp.eq.s32.totalorder %s107, 1
      %p781 = por %p779, %p780
      %p783 = scmp.ne.s32.totalorder %s768, %s782
      %p784 = scmp.eq.s32.totalorder %s107, 0
      %p785 = por %p783, %p784
      %s787 = sadd.s32 %s786, 1
      %p790 = scmp.eq.s32.totalorder %s101, 1
      %p791 = scmp.ne.s32.totalorder %s786, %s788
      %p792 = scmp.eq.s32.totalorder %s101, 0
      %p793 = por %p791, %p792
      %p794 = scmp.ne.s32.totalorder %s786, %s788
      %p795 = scmp.eq.s32.totalorder %s106, 1
      %p796 = por %p794, %p795
      %p797 = scmp.ne.s32.totalorder %s788, %s789
      %p798 = scmp.eq.s32.totalorder %s106, 0
      %p799 = por %p797, %p798
      %p800 = scmp.ne.s32.totalorder %s788, %s789
      %p801 = scmp.eq.s32.totalorder %s107, 1
      %p802 = por %p800, %p801
      %p804 = scmp.ne.s32.totalorder %s789, %s803
      %p805 = scmp.eq.s32.totalorder %s107, 0
      %p806 = por %p804, %p805
      %s808 = sadd.s32 %s807, 1
      %p811 = scmp.eq.s32.totalorder %s101, 1
      %p812 = scmp.ne.s32.totalorder %s807, %s809
      %p813 = scmp.eq.s32.totalorder %s101, 0
      %p814 = por %p812, %p813
      %p815 = scmp.ne.s32.totalorder %s807, %s809
      %p816 = scmp.eq.s32.totalorder %s106, 1
      %p817 = por %p815, %p816
      %p818 = scmp.ne.s32.totalorder %s809, %s810
      %p819 = scmp.eq.s32.totalorder %s106, 0
      %p820 = por %p818, %p819
      %p821 = scmp.ne.s32.totalorder %s809, %s810
      %p822 = scmp.eq.s32.totalorder %s107, 1
      %p823 = por %p821, %p822
      %p825 = scmp.ne.s32.totalorder %s810, %s824
      %p826 = scmp.eq.s32.totalorder %s107, 0
      %p827 = por %p825, %p826
      %s829 = sadd.s32 %s828, 1
      %p832 = scmp.eq.s32.totalorder %s101, 1
      %p833 = scmp.ne.s32.totalorder %s828, %s830
      %p834 = scmp.eq.s32.totalorder %s101, 0
      %p835 = por %p833, %p834
      %p836 = scmp.ne.s32.totalorder %s828, %s830
      %p837 = scmp.eq.s32.totalorder %s106, 1
      %p838 = por %p836, %p837
      %p839 = scmp.ne.s32.totalorder %s830, %s831
      %p840 = scmp.eq.s32.totalorder %s106, 0
      %p841 = por %p839, %p840
      %p842 = scmp.ne.s32.totalorder %s830, %s831
      %p843 = scmp.eq.s32.totalorder %s107, 1
      %p844 = por %p842, %p843
      %p846 = scmp.ne.s32.totalorder %s831, %s845
      %p847 = scmp.eq.s32.totalorder %s107, 0
      %p848 = por %p846, %p847
      %s850 = sadd.s32 %s849, 1
      %p853 = scmp.eq.s32.totalorder %s101, 1
      %p854 = scmp.ne.s32.totalorder %s849, %s851
      %p855 = scmp.eq.s32.totalorder %s101, 0
      %p856 = por %p854, %p855
      %p857 = scmp.ne.s32.totalorder %s849, %s851
      %p858 = scmp.eq.s32.totalorder %s106, 1
      %p859 = por %p857, %p858
      %p860 = scmp.ne.s32.totalorder %s851, %s852
      %p861 = scmp.eq.s32.totalorder %s106, 0
      %p862 = por %p860, %p861
      %p863 = scmp.ne.s32.totalorder %s851, %s852
      %p864 = scmp.eq.s32.totalorder %s107, 1
      %p865 = por %p863, %p864
      %p867 = scmp.ne.s32.totalorder %s852, %s866
      %p868 = scmp.eq.s32.totalorder %s107, 0
      %p869 = por %p867, %p868
      %s871 = sadd.s32 %s870, 1
      %p874 = scmp.eq.s32.totalorder %s101, 1
      %p875 = scmp.ne.s32.totalorder %s870, %s872
      %p876 = scmp.eq.s32.totalorder %s101, 0
      %p877 = por %p875, %p876
      %p878 = scmp.ne.s32.totalorder %s870, %s872
      %p879 = scmp.eq.s32.totalorder %s106, 1
      %p880 = por %p878, %p879
      %p881 = scmp.ne.s32.totalorder %s872, %s873
      %p882 = scmp.eq.s32.totalorder %s106, 0
      %p883 = por %p881, %p882
      %p884 = scmp.ne.s32.totalorder %s872, %s873
      %p885 = scmp.eq.s32.totalorder %s107, 1
      %p886 = por %p884, %p885
      %p888 = scmp.ne.s32.totalorder %s873, %s887
      %p889 = scmp.eq.s32.totalorder %s107, 0
      %p890 = por %p888, %p889
      %s892 = sadd.s32 %s891, 1
      %p895 = scmp.eq.s32.totalorder %s101, 1
      %p896 = scmp.ne.s32.totalorder %s891, %s893
      %p897 = scmp.eq.s32.totalorder %s101, 0
      %p898 = por %p896, %p897
      %p899 = scmp.ne.s32.totalorder %s891, %s893
      %p900 = scmp.eq.s32.totalorder %s106, 1
      %p901 = por %p899, %p900
      %p902 = scmp.ne.s32.totalorder %s893, %s894
      %p903 = scmp.eq.s32.totalorder %s106, 0
      %p904 = por %p902, %p903
      %p905 = scmp.ne.s32.totalorder %s893, %s894
      %p906 = scmp.eq.s32.totalorder %s107, 1
      %p907 = por %p905, %p906
      %p909 = scmp.ne.s32.totalorder %s894, %s908
      %p910 = scmp.eq.s32.totalorder %s107, 0
      %p911 = por %p909, %p910
      %s913 = sadd.s32 %s912, 1
      %p916 = scmp.eq.s32.totalorder %s101, 1
      %p917 = scmp.ne.s32.totalorder %s912, %s914
      %p918 = scmp.eq.s32.totalorder %s101, 0
      %p919 = por %p917, %p918
      %p920 = scmp.ne.s32.totalorder %s912, %s914
      %p921 = scmp.eq.s32.totalorder %s106, 1
      %p922 = por %p920, %p921
      %p923 = scmp.ne.s32.totalorder %s914, %s915
      %p924 = scmp.eq.s32.totalorder %s106, 0
      %p925 = por %p923, %p924
      %p926 = scmp.ne.s32.totalorder %s914, %s915
      %p927 = scmp.eq.s32.totalorder %s107, 1
      %p928 = por %p926, %p927
      %p930 = scmp.ne.s32.totalorder %s915, %s929
      %p931 = scmp.eq.s32.totalorder %s107, 0
      %p932 = por %p930, %p931
      %s934 = sadd.s32 %s933, 1
      %p937 = scmp.eq.s32.totalorder %s101, 1
      %p938 = scmp.ne.s32.totalorder %s933, %s935
      %p939 = scmp.eq.s32.totalorder %s101, 0
      %p940 = por %p938, %p939
      %p941 = scmp.ne.s32.totalorder %s933, %s935
      %p942 = scmp.eq.s32.totalorder %s106, 1
      %p943 = por %p941, %p942
      %p944 = scmp.ne.s32.totalorder %s935, %s936
      %p945 = scmp.eq.s32.totalorder %s106, 0
      %p946 = por %p944, %p945
      %p947 = scmp.ne.s32.totalorder %s935, %s936
      %p948 = scmp.eq.s32.totalorder %s107, 1
      %p949 = por %p947, %p948
      %p951 = scmp.ne.s32.totalorder %s936, %s950
      %p952 = scmp.eq.s32.totalorder %s107, 0
      %p953 = por %p951, %p952
      %s955 = sadd.s32 %s954, 1
      %p958 = scmp.eq.s32.totalorder %s101, 1
      %p959 = scmp.ne.s32.totalorder %s954, %s956
      %p960 = scmp.eq.s32.totalorder %s101, 0
      %p961 = por %p959, %p960
      %p962 = scmp.ne.s32.totalorder %s954, %s956
      %p963 = scmp.eq.s32.totalorder %s106, 1
      %p964 = por %p962, %p963
      %p965 = scmp.ne.s32.totalorder %s956, %s957
      %p966 = scmp.eq.s32.totalorder %s106, 0
      %p967 = por %p965, %p966
      %p968 = scmp.ne.s32.totalorder %s956, %s957
      %p969 = scmp.eq.s32.totalorder %s107, 1
      %p970 = por %p968, %p969
      %p972 = scmp.ne.s32.totalorder %s957, %s971
      %p973 = scmp.eq.s32.totalorder %s107, 0
      %p974 = por %p972, %p973
      %s975 = ssub.s32 %s101, %s108
      %p976 = scmp.eq.s32.totalorder %s975, 0
      %s978 = sadd.s32 %s977, 1
      %s979 = scalar_select %p976, %s977, %s978
      %p982 = pneg %p976
      %p983 = scmp.eq.s32.totalorder %s101, 1
      %p984 = por %p982, %p983
      %p985 = scmp.ne.s32.totalorder %s977, %s980
      %p986 = scmp.eq.s32.totalorder %s101, 0
      %p987 = por %p985, %p986
      %p988 = scmp.ne.s32.totalorder %s977, %s980
      %p989 = scmp.eq.s32.totalorder %s106, 1
      %p990 = por %p988, %p989
      %p991 = scmp.ne.s32.totalorder %s980, %s981
      %p992 = scmp.eq.s32.totalorder %s106, 0
      %p993 = por %p991, %p992
      %p994 = scmp.ne.s32.totalorder %s980, %s981
      %p995 = scmp.eq.s32.totalorder %s107, 1
      %p996 = por %p994, %p995
      %p998 = scmp.ne.s32.totalorder %s981, %s997
      %p999 = scmp.eq.s32.totalorder %s107, 0
      %p1000 = por %p998, %p999
      %p1001 = scmp.le.s32.totalorder 1, %s101
      %p1002 = scmp.lt.s32.totalorder %s101, 3
      %p1003 = pnand %p1001, %p1002
      %p1004 = pneg %p1003
      // Predicated region
      $region9: #{tpu_custom_call.1} parent=5 // pred_check
        _
      $region10: #{tpu_custom_call.1} parent=5 // pred_check_branch
        %1006 = sbr.rel (%p1003) target = $region12
      $region11: #{tpu_custom_call.1} parent=5 // pred_region
        %s1007 = ssub.s32 %s101, 1
        // Predicated region
        $region13: #{tpu_custom_call.1} parent=11 // pred_check
          %p1008 = pneg %p148
        $region14: #{tpu_custom_call.1} parent=11 // pred_check_branch
          %1010 = sbr.rel (%p1008) target = $region16
        $region15: #{tpu_custom_call.1} parent=11 // pred_region
          _
        $region16: #{tpu_custom_call.1} parent=11 // pred_fallthru
          _
        // Predicated region
        $region17: #{tpu_custom_call.1} parent=11 // pred_check
          %p1011 = pneg %p169
        $region18: #{tpu_custom_call.1} parent=11 // pred_check_branch
          %1013 = sbr.rel (%p1011) target = $region20
        $region19: #{tpu_custom_call.1} parent=11 // pred_region
          %1015 = vsyncadd [#allocation3], 0
          %s1016 = sshll.u32 %s5, 4
          %s1017 = int_to_ptr.hbm [resolvable:$true] %s1016
          %s1018 = sshll.u32 [#allocation2], 4
          %s1019 = int_to_ptr.vmem [resolvable:$true] %s1018
          %1024 = dma.hbm_to_vmem [thread:$0]  %s1017, 32, %s1019, [#allocation3], 16, 16, 1
        $region20: #{tpu_custom_call.1} parent=11 // pred_fallthru
          _
        // Predicated region
        $region21: #{tpu_custom_call.1} parent=11 // pred_check
          %p1025 = pneg %p190
        $region22: #{tpu_custom_call.1} parent=11 // pred_check_branch
          %1027 = sbr.rel (%p1025) target = $region24
        $region23: #{tpu_custom_call.1} parent=11 // pred_region
          _
        $region24: #{tpu_custom_call.1} parent=11 // pred_fallthru
          _
        // Predicated region
        $region25: #{tpu_custom_call.1} parent=11 // pred_check
          %p1028 = pneg %p211
        $region26: #{tpu_custom_call.1} parent=11 // pred_check_branch
          %1030 = sbr.rel (%p1028) target = $region28
        $region27: #{tpu_custom_call.1} parent=11 // pred_region
          _
        $region28: #{tpu_custom_call.1} parent=11 // pred_fallthru
          _
        // Predicated region
        $region29: #{tpu_custom_call.1} parent=11 // pred_check
          %p1031 = pneg %p232
        $region30: #{tpu_custom_call.1} parent=11 // pred_check_branch
          %1033 = sbr.rel (%p1031) target = $region32
        $region31: #{tpu_custom_call.1} parent=11 // pred_region
          _
        $region32: #{tpu_custom_call.1} parent=11 // pred_fallthru
          _
        // Predicated region
        $region33: #{tpu_custom_call.1} parent=11 // pred_check
          %p1034 = pneg %p253
        $region34: #{tpu_custom_call.1} parent=11 // pred_check_branch
          %1036 = sbr.rel (%p1034) target = $region36
        $region35: #{tpu_custom_call.1} parent=11 // pred_region
          %1038 = vsyncadd [#allocation6], 0
          %s1039 = sshll.u32 %s13, 4
          %s1040 = int_to_ptr.hbm [resolvable:$true] %s1039
          %s1041 = sshll.u32 [#allocation5], 4
          %s1042 = int_to_ptr.vmem [resolvable:$true] %s1041
          %1047 = dma.hbm_to_vmem [thread:$0]  %s1040, 32, %s1042, [#allocation6], 16, 16, 1
        $region36: #{tpu_custom_call.1} parent=11 // pred_fallthru
          _
        // Predicated region
        $region37: #{tpu_custom_call.1} parent=11 // pred_check
          %p1048 = pneg %p274
        $region38: #{tpu_custom_call.1} parent=11 // pred_check_branch
          %1050 = sbr.rel (%p1048) target = $region40
        $region39: #{tpu_custom_call.1} parent=11 // pred_region
          _
        $region40: #{tpu_custom_call.1} parent=11 // pred_fallthru
          _
        // Predicated region
        $region41: #{tpu_custom_call.1} parent=11 // pred_check
          %p1051 = pneg %p295
        $region42: #{tpu_custom_call.1} parent=11 // pred_check_branch
          %1053 = sbr.rel (%p1051) target = $region44
        $region43: #{tpu_custom_call.1} parent=11 // pred_region
          %1055 = vsyncadd [#allocation6], 0
          %s1057 = sshll.u32 %s17, 4
          %s1058 = int_to_ptr.hbm [resolvable:$true] %s1057
          %s1059 = sshll.u32 [#allocation7], 4
          %s1060 = int_to_ptr.vmem [resolvable:$true] %s1059
          %1062 = dma.hbm_to_vmem [thread:$0]  %s1058, 16, %s1060, [#allocation6]
        $region44: #{tpu_custom_call.1} parent=11 // pred_fallthru
          _
        // Predicated region
        $region45: #{tpu_custom_call.1} parent=11 // pred_check
          %p1063 = pneg %p316
        $region46: #{tpu_custom_call.1} parent=11 // pred_check_branch
          %1065 = sbr.rel (%p1063) target = $region48
        $region47: #{tpu_custom_call.1} parent=11 // pred_region
          %1067 = vsyncadd [#allocation9], 0
          %s1069 = sshll.u32 %s19, 4
          %s1070 = int_to_ptr.hbm [resolvable:$true] %s1069
          %s1071 = sshll.u32 [#allocation8], 4
          %s1072 = int_to_ptr.vmem [resolvable:$true] %s1071
          %1074 = dma.hbm_to_vmem [thread:$0]  %s1070, 16, %s1072, [#allocation9]
        $region48: #{tpu_custom_call.1} parent=11 // pred_fallthru
          _
        // Predicated region
        $region49: #{tpu_custom_call.1} parent=11 // pred_check
          %p1075 = pneg %p337
        $region50: #{tpu_custom_call.1} parent=11 // pred_check_branch
          %1077 = sbr.rel (%p1075) target = $region52
        $region51: #{tpu_custom_call.1} parent=11 // pred_region
          %1079 = vsyncadd [#allocation9], 0
          %s1081 = sshll.u32 %s21, 4
          %s1082 = int_to_ptr.hbm [resolvable:$true] %s1081
          %s1083 = sshll.u32 [#allocation10], 4
          %s1084 = int_to_ptr.vmem [resolvable:$true] %s1083
          %1086 = dma.hbm_to_vmem [thread:$0]  %s1082, 16, %s1084, [#allocation9]
        $region52: #{tpu_custom_call.1} parent=11 // pred_fallthru
          _
        // Predicated region
        $region53: #{tpu_custom_call.1} parent=11 // pred_check
          %p1087 = pneg %p358
        $region54: #{tpu_custom_call.1} parent=11 // pred_check_branch
          %1089 = sbr.rel (%p1087) target = $region56
        $region55: #{tpu_custom_call.1} parent=11 // pred_region
          _
        $region56: #{tpu_custom_call.1} parent=11 // pred_fallthru
          _
        // Predicated region
        $region57: #{tpu_custom_call.1} parent=11 // pred_check
          %p1090 = pneg %p379
        $region58: #{tpu_custom_call.1} parent=11 // pred_check_branch
          %1092 = sbr.rel (%p1090) target = $region60
        $region59: #{tpu_custom_call.1} parent=11 // pred_region
          %1094 = vsyncadd [#allocation12], 0
          %s1096 = sshll.u32 %s25, 4
          %s1097 = int_to_ptr.hbm [resolvable:$true] %s1096
          %s1098 = sshll.u32 [#allocation11], 4
          %s1099 = int_to_ptr.vmem [resolvable:$true] %s1098
          %1101 = dma.hbm_to_vmem [thread:$0]  %s1097, 16, %s1099, [#allocation12]
        $region60: #{tpu_custom_call.1} parent=11 // pred_fallthru
          _
        // Predicated region
        $region61: #{tpu_custom_call.1} parent=11 // pred_check
          %p1102 = pneg %p400
        $region62: #{tpu_custom_call.1} parent=11 // pred_check_branch
          %1104 = sbr.rel (%p1102) target = $region64
        $region63: #{tpu_custom_call.1} parent=11 // pred_region
          _
        $region64: #{tpu_custom_call.1} parent=11 // pred_fallthru
          _
        // Predicated region
        $region65: #{tpu_custom_call.1} parent=11 // pred_check
          %p1105 = pneg %p421
        $region66: #{tpu_custom_call.1} parent=11 // pred_check_branch
          %1107 = sbr.rel (%p1105) target = $region68
        $region67: #{tpu_custom_call.1} parent=11 // pred_region
          %1109 = vsyncadd [#allocation12], 0
          %s1111 = sshll.u32 %s29, 4
          %s1112 = int_to_ptr.hbm [resolvable:$true] %s1111
          %s1113 = sshll.u32 [#allocation13], 4
          %s1114 = int_to_ptr.vmem [resolvable:$true] %s1113
          %1116 = dma.hbm_to_vmem [thread:$0]  %s1112, 16, %s1114, [#allocation12]
        $region68: #{tpu_custom_call.1} parent=11 // pred_fallthru
          _
        // Predicated region
        $region69: #{tpu_custom_call.1} parent=11 // pred_check
          %p1117 = pneg %p442
        $region70: #{tpu_custom_call.1} parent=11 // pred_check_branch
          %1119 = sbr.rel (%p1117) target = $region72
        $region71: #{tpu_custom_call.1} parent=11 // pred_region
          %1121 = vsyncadd [#allocation15], 0
          %s1123 = sshll.u32 %s31, 4
          %s1124 = int_to_ptr.hbm [resolvable:$true] %s1123
          %s1125 = sshll.u32 [#allocation14], 4
          %s1126 = int_to_ptr.vmem [resolvable:$true] %s1125
          %1128 = dma.hbm_to_vmem [thread:$0]  %s1124, 16, %s1126, [#allocation15]
        $region72: #{tpu_custom_call.1} parent=11 // pred_fallthru
          _
        // Predicated region
        $region73: #{tpu_custom_call.1} parent=11 // pred_check
          %p1129 = pneg %p463
        $region74: #{tpu_custom_call.1} parent=11 // pred_check_branch
          %1131 = sbr.rel (%p1129) target = $region76
        $region75: #{tpu_custom_call.1} parent=11 // pred_region
          %1133 = vsyncadd [#allocation15], 0
          %s1135 = sshll.u32 %s33, 4
          %s1136 = int_to_ptr.hbm [resolvable:$true] %s1135
          %s1137 = sshll.u32 [#allocation16], 4
          %s1138 = int_to_ptr.vmem [resolvable:$true] %s1137
          %1140 = dma.hbm_to_vmem [thread:$0]  %s1136, 16, %s1138, [#allocation15]
        $region76: #{tpu_custom_call.1} parent=11 // pred_fallthru
          _
        // Predicated region
        $region77: #{tpu_custom_call.1} parent=11 // pred_check
          %p1141 = pneg %p484
        $region78: #{tpu_custom_call.1} parent=11 // pred_check_branch
          %1143 = sbr.rel (%p1141) target = $region80
        $region79: #{tpu_custom_call.1} parent=11 // pred_region
          _
        $region80: #{tpu_custom_call.1} parent=11 // pred_fallthru
          _
        // Predicated region
        $region81: #{tpu_custom_call.1} parent=11 // pred_check
          %p1144 = pneg %p505
        $region82: #{tpu_custom_call.1} parent=11 // pred_check_branch
          %1146 = sbr.rel (%p1144) target = $region84
        $region83: #{tpu_custom_call.1} parent=11 // pred_region
          %1148 = vsyncadd [#allocation18], 0
          %s1150 = sshll.u32 %s37, 4
          %s1151 = int_to_ptr.hbm [resolvable:$true] %s1150
          %s1152 = sshll.u32 [#allocation17], 4
          %s1153 = int_to_ptr.vmem [resolvable:$true] %s1152
          %1155 = dma.hbm_to_vmem [thread:$0]  %s1151, 16, %s1153, [#allocation18]
        $region84: #{tpu_custom_call.1} parent=11 // pred_fallthru
          _
        // Predicated region
        $region85: #{tpu_custom_call.1} parent=11 // pred_check
          %p1156 = pneg %p526
        $region86: #{tpu_custom_call.1} parent=11 // pred_check_branch
          %1158 = sbr.rel (%p1156) target = $region88
        $region87: #{tpu_custom_call.1} parent=11 // pred_region
          _
        $region88: #{tpu_custom_call.1} parent=11 // pred_fallthru
          _
        // Predicated region
        $region89: #{tpu_custom_call.1} parent=11 // pred_check
          %p1159 = pneg %p547
        $region90: #{tpu_custom_call.1} parent=11 // pred_check_branch
          %1161 = sbr.rel (%p1159) target = $region92
        $region91: #{tpu_custom_call.1} parent=11 // pred_region
          %1163 = vsyncadd [#allocation18], 0
          %s1165 = sshll.u32 %s41, 4
          %s1166 = int_to_ptr.hbm [resolvable:$true] %s1165
          %s1167 = sshll.u32 [#allocation19], 4
          %s1168 = int_to_ptr.vmem [resolvable:$true] %s1167
          %1170 = dma.hbm_to_vmem [thread:$0]  %s1166, 16, %s1168, [#allocation18]
        $region92: #{tpu_custom_call.1} parent=11 // pred_fallthru
          _
        // Predicated region
        $region93: #{tpu_custom_call.1} parent=11 // pred_check
          %p1171 = pneg %p568
        $region94: #{tpu_custom_call.1} parent=11 // pred_check_branch
          %1173 = sbr.rel (%p1171) target = $region96
        $region95: #{tpu_custom_call.1} parent=11 // pred_region
          _
        $region96: #{tpu_custom_call.1} parent=11 // pred_fallthru
          _
        // Predicated region
        $region97: #{tpu_custom_call.1} parent=11 // pred_check
          %p1174 = pneg %p589
        $region98: #{tpu_custom_call.1} parent=11 // pred_check_branch
          %1176 = sbr.rel (%p1174) target = $region100
        $region99: #{tpu_custom_call.1} parent=11 // pred_region
          %1178 = vsyncadd [#allocation21], 0
          %s1179 = sshll.u32 %s45, 4
          %s1180 = int_to_ptr.hbm [resolvable:$true] %s1179
          %s1181 = sshll.u32 [#allocation20], 4
          %s1182 = int_to_ptr.vmem [resolvable:$true] %s1181
          %1187 = dma.hbm_to_vmem [thread:$0]  %s1180, 32, %s1182, [#allocation21], 16, 16, 1
        $region100: #{tpu_custom_call.1} parent=11 // pred_fallthru
          _
        // Predicated region
        $region101: #{tpu_custom_call.1} parent=11 // pred_check
          %p1188 = pneg %p610
        $region102: #{tpu_custom_call.1} parent=11 // pred_check_branch
          %1190 = sbr.rel (%p1188) target = $region104
        $region103: #{tpu_custom_call.1} parent=11 // pred_region
          _
        $region104: #{tpu_custom_call.1} parent=11 // pred_fallthru
          _
        // Predicated region
        $region105: #{tpu_custom_call.1} parent=11 // pred_check
          %p1191 = pneg %p631
        $region106: #{tpu_custom_call.1} parent=11 // pred_check_branch
          %1193 = sbr.rel (%p1191) target = $region108
        $region107: #{tpu_custom_call.1} parent=11 // pred_region
          %1195 = vsyncadd [#allocation21], 0
          %s1196 = sshll.u32 %s49, 4
          %s1197 = int_to_ptr.hbm [resolvable:$true] %s1196
          %s1198 = sshll.u32 [#allocation22], 4
          %s1199 = int_to_ptr.vmem [resolvable:$true] %s1198
          %1204 = dma.hbm_to_vmem [thread:$0]  %s1197, 32, %s1199, [#allocation21], 16, 16, 1
        $region108: #{tpu_custom_call.1} parent=11 // pred_fallthru
          _
        // Predicated region
        $region109: #{tpu_custom_call.1} parent=11 // pred_check
          %p1205 = pneg %p652
        $region110: #{tpu_custom_call.1} parent=11 // pred_check_branch
          %1207 = sbr.rel (%p1205) target = $region112
        $region111: #{tpu_custom_call.1} parent=11 // pred_region
          _
        $region112: #{tpu_custom_call.1} parent=11 // pred_fallthru
          _
        // Predicated region
        $region113: #{tpu_custom_call.1} parent=11 // pred_check
          %p1208 = pneg %p673
        $region114: #{tpu_custom_call.1} parent=11 // pred_check_branch
          %1210 = sbr.rel (%p1208) target = $region116
        $region115: #{tpu_custom_call.1} parent=11 // pred_region
          %1212 = vsyncadd [#allocation24], 0
          %s1213 = sshll.u32 %s53, 4
          %s1214 = int_to_ptr.hbm [resolvable:$true] %s1213
          %s1215 = sshll.u32 [#allocation23], 4
          %s1216 = int_to_ptr.vmem [resolvable:$true] %s1215
          %1221 = dma.hbm_to_vmem [thread:$0]  %s1214, 32, %s1216, [#allocation24], 16, 16, 1
        $region116: #{tpu_custom_call.1} parent=11 // pred_fallthru
          _
        // Predicated region
        $region117: #{tpu_custom_call.1} parent=11 // pred_check
          %p1222 = pneg %p694
        $region118: #{tpu_custom_call.1} parent=11 // pred_check_branch
          %1224 = sbr.rel (%p1222) target = $region120
        $region119: #{tpu_custom_call.1} parent=11 // pred_region
          _
        $region120: #{tpu_custom_call.1} parent=11 // pred_fallthru
          _
        // Predicated region
        $region121: #{tpu_custom_call.1} parent=11 // pred_check
          %p1225 = pneg %p715
        $region122: #{tpu_custom_call.1} parent=11 // pred_check_branch
          %1227 = sbr.rel (%p1225) target = $region124
        $region123: #{tpu_custom_call.1} parent=11 // pred_region
          %1229 = vsyncadd [#allocation24], 0
          %s1231 = sshll.u32 %s57, 4
          %s1232 = int_to_ptr.hbm [resolvable:$true] %s1231
          %s1233 = sshll.u32 [#allocation25], 4
          %s1234 = int_to_ptr.vmem [resolvable:$true] %s1233
          %1236 = dma.hbm_to_vmem [thread:$0]  %s1232, 16, %s1234, [#allocation24]
        $region124: #{tpu_custom_call.1} parent=11 // pred_fallthru
          _
        // Predicated region
        $region125: #{tpu_custom_call.1} parent=11 // pred_check
          %p1237 = pneg %p736
        $region126: #{tpu_custom_call.1} parent=11 // pred_check_branch
          %1239 = sbr.rel (%p1237) target = $region128
        $region127: #{tpu_custom_call.1} parent=11 // pred_region
          %1241 = vsyncadd [#allocation27], 0
          %s1243 = sshll.u32 %s59, 4
          %s1244 = int_to_ptr.hbm [resolvable:$true] %s1243
          %s1245 = sshll.u32 [#allocation26], 4
          %s1246 = int_to_ptr.vmem [resolvable:$true] %s1245
          %1248 = dma.hbm_to_vmem [thread:$0]  %s1244, 16, %s1246, [#allocation27]
        $region128: #{tpu_custom_call.1} parent=11 // pred_fallthru
          _
        // Predicated region
        $region129: #{tpu_custom_call.1} parent=11 // pred_check
          %p1249 = pneg %p757
        $region130: #{tpu_custom_call.1} parent=11 // pred_check_branch
          %1251 = sbr.rel (%p1249) target = $region132
        $region131: #{tpu_custom_call.1} parent=11 // pred_region
          _
        $region132: #{tpu_custom_call.1} parent=11 // pred_fallthru
          _
        // Predicated region
        $region133: #{tpu_custom_call.1} parent=11 // pred_check
          %p1252 = pneg %p778
        $region134: #{tpu_custom_call.1} parent=11 // pred_check_branch
          %1254 = sbr.rel (%p1252) target = $region136
        $region135: #{tpu_custom_call.1} parent=11 // pred_region
          _
        $region136: #{tpu_custom_call.1} parent=11 // pred_fallthru
          _
        // Predicated region
        $region137: #{tpu_custom_call.1} parent=11 // pred_check
          %p1255 = pneg %p799
        $region138: #{tpu_custom_call.1} parent=11 // pred_check_branch
          %1257 = sbr.rel (%p1255) target = $region140
        $region139: #{tpu_custom_call.1} parent=11 // pred_region
          _
        $region140: #{tpu_custom_call.1} parent=11 // pred_fallthru
          _
        // Predicated region
        $region141: #{tpu_custom_call.1} parent=11 // pred_check
          %p1258 = pneg %p820
        $region142: #{tpu_custom_call.1} parent=11 // pred_check_branch
          %1260 = sbr.rel (%p1258) target = $region144
        $region143: #{tpu_custom_call.1} parent=11 // pred_region
          _
        $region144: #{tpu_custom_call.1} parent=11 // pred_fallthru
          _
        // Predicated region
        $region145: #{tpu_custom_call.1} parent=11 // pred_check
          %p1261 = pneg %p841
        $region146: #{tpu_custom_call.1} parent=11 // pred_check_branch
          %1263 = sbr.rel (%p1261) target = $region148
        $region147: #{tpu_custom_call.1} parent=11 // pred_region
          _
        $region148: #{tpu_custom_call.1} parent=11 // pred_fallthru
          _
        // Predicated region
        $region149: #{tpu_custom_call.1} parent=11 // pred_check
          %p1264 = pneg %p862
        $region150: #{tpu_custom_call.1} parent=11 // pred_check_branch
          %1266 = sbr.rel (%p1264) target = $region152
        $region151: #{tpu_custom_call.1} parent=11 // pred_region
          _
        $region152: #{tpu_custom_call.1} parent=11 // pred_fallthru
          _
        // Predicated region
        $region153: #{tpu_custom_call.1} parent=11 // pred_check
          %p1267 = pneg %p883
        $region154: #{tpu_custom_call.1} parent=11 // pred_check_branch
          %1269 = sbr.rel (%p1267) target = $region156
        $region155: #{tpu_custom_call.1} parent=11 // pred_region
          _
        $region156: #{tpu_custom_call.1} parent=11 // pred_fallthru
          _
        // Predicated region
        $region157: #{tpu_custom_call.1} parent=11 // pred_check
          %p1270 = pneg %p904
        $region158: #{tpu_custom_call.1} parent=11 // pred_check_branch
          %1272 = sbr.rel (%p1270) target = $region160
        $region159: #{tpu_custom_call.1} parent=11 // pred_region
          _
        $region160: #{tpu_custom_call.1} parent=11 // pred_fallthru
          _
        // Predicated region
        $region161: #{tpu_custom_call.1} parent=11 // pred_check
          %p1273 = pneg %p925
        $region162: #{tpu_custom_call.1} parent=11 // pred_check_branch
          %1275 = sbr.rel (%p1273) target = $region164
        $region163: #{tpu_custom_call.1} parent=11 // pred_region
          _
        $region164: #{tpu_custom_call.1} parent=11 // pred_fallthru
          _
        // Predicated region
        $region165: #{tpu_custom_call.1} parent=11 // pred_check
          %p1276 = pneg %p946
        $region166: #{tpu_custom_call.1} parent=11 // pred_check_branch
          %1278 = sbr.rel (%p1276) target = $region168
        $region167: #{tpu_custom_call.1} parent=11 // pred_region
          _
        $region168: #{tpu_custom_call.1} parent=11 // pred_fallthru
          _
        // Predicated region
        $region169: #{tpu_custom_call.1} parent=11 // pred_check
          %p1279 = pneg %p967
        $region170: #{tpu_custom_call.1} parent=11 // pred_check_branch
          %1281 = sbr.rel (%p1279) target = $region172
        $region171: #{tpu_custom_call.1} parent=11 // pred_region
          _
        $region172: #{tpu_custom_call.1} parent=11 // pred_fallthru
          _
      $region12: #{tpu_custom_call.1} parent=5 // pred_fallthru
        _
      %p1282 = scmp.lt.s32.totalorder %s101, 2
      // Predicated region
      $region173: #{tpu_custom_call.1} parent=5 // pred_check
        %p1283 = pneg %p1282
      $region174: #{tpu_custom_call.1} parent=5 // pred_check_branch
        %1285 = sbr.rel (%p1283) target = $region176
      $region175: #{tpu_custom_call.1} parent=5 // pred_region
        // Predicated region
        $region177: #{tpu_custom_call.1} parent=175 // pred_check
          %p1286 = pneg %p121
        $region178: #{tpu_custom_call.1} parent=175 // pred_check_branch
          %1288 = sbr.rel (%p1286) target = $region180
        $region179: #{tpu_custom_call.1} parent=175 // pred_region
          %s1289 = smul.u32 4, %s101
          %p1290 = scmp.lt.s32.totalorder %s1289, 7
          %s1291 = scalar_select %p1290, %s1289, 7
          %s1292 = smul.addr %s1291, 8
          %s1293 = scalar_lea.vmem %s1, %s1292
          %s1294 = smul.u32 4, %s101
        $region180: #{tpu_custom_call.1} parent=175 // pred_fallthru
          _
      $region176: #{tpu_custom_call.1} parent=5 // pred_fallthru
        _
      %p1295 = scmp.le.s32.totalorder 1, %s101
      %p1296 = scmp.lt.s32.totalorder %s101, 3
      %p1297 = pnand %p1295, %p1296
      %p1298 = pneg %p1297
      // Predicated region
      $region181: #{tpu_custom_call.1} parent=5 // pred_check
        _
      $region182: #{tpu_custom_call.1} parent=5 // pred_check_branch
        %1300 = sbr.rel (%p1297) target = $region184
      $region183: #{tpu_custom_call.1} parent=5 // pred_region
        %s1301 = ssub.s32 %s101, 1
        // Predicated region
        $region185: #{tpu_custom_call.1} parent=183 // pred_check
          %p1302 = pneg %p169
        $region186: #{tpu_custom_call.1} parent=183 // pred_check_branch
          %1304 = sbr.rel (%p1302) target = $region188
        $region187: #{tpu_custom_call.1} parent=183 // pred_region
          %1306 = dma.done [#allocation3], 32
        $region188: #{tpu_custom_call.1} parent=183 // pred_fallthru
          _
        // Predicated region
        $region189: #{tpu_custom_call.1} parent=183 // pred_check
          %p1307 = pneg %p253
        $region190: #{tpu_custom_call.1} parent=183 // pred_check_branch
          %1309 = sbr.rel (%p1307) target = $region192
        $region191: #{tpu_custom_call.1} parent=183 // pred_region
          %1311 = dma.done [#allocation6], 32
        $region192: #{tpu_custom_call.1} parent=183 // pred_fallthru
          _
        // Predicated region
        $region193: #{tpu_custom_call.1} parent=183 // pred_check
          %p1312 = pneg %p295
        $region194: #{tpu_custom_call.1} parent=183 // pred_check_branch
          %1314 = sbr.rel (%p1312) target = $region196
        $region195: #{tpu_custom_call.1} parent=183 // pred_region
          %1316 = dma.done [#allocation6], 16
        $region196: #{tpu_custom_call.1} parent=183 // pred_fallthru
          _
        // Predicated region
        $region197: #{tpu_custom_call.1} parent=183 // pred_check
          %p1317 = pneg %p316
        $region198: #{tpu_custom_call.1} parent=183 // pred_check_branch
          %1319 = sbr.rel (%p1317) target = $region200
        $region199: #{tpu_custom_call.1} parent=183 // pred_region
          %1321 = dma.done [#allocation9], 16
        $region200: #{tpu_custom_call.1} parent=183 // pred_fallthru
          _
        // Predicated region
        $region201: #{tpu_custom_call.1} parent=183 // pred_check
          %p1322 = pneg %p337
        $region202: #{tpu_custom_call.1} parent=183 // pred_check_branch
          %1324 = sbr.rel (%p1322) target = $region204
        $region203: #{tpu_custom_call.1} parent=183 // pred_region
          %1326 = dma.done [#allocation9], 16
        $region204: #{tpu_custom_call.1} parent=183 // pred_fallthru
          _
        // Predicated region
        $region205: #{tpu_custom_call.1} parent=183 // pred_check
          %p1327 = pneg %p379
        $region206: #{tpu_custom_call.1} parent=183 // pred_check_branch
          %1329 = sbr.rel (%p1327) target = $region208
        $region207: #{tpu_custom_call.1} parent=183 // pred_region
          %1331 = dma.done [#allocation12], 16
        $region208: #{tpu_custom_call.1} parent=183 // pred_fallthru
          _
        // Predicated region
        $region209: #{tpu_custom_call.1} parent=183 // pred_check
          %p1332 = pneg %p421
        $region210: #{tpu_custom_call.1} parent=183 // pred_check_branch
          %1334 = sbr.rel (%p1332) target = $region212
        $region211: #{tpu_custom_call.1} parent=183 // pred_region
          %1336 = dma.done [#allocation12], 16
        $region212: #{tpu_custom_call.1} parent=183 // pred_fallthru
          _
        // Predicated region
        $region213: #{tpu_custom_call.1} parent=183 // pred_check
          %p1337 = pneg %p442
        $region214: #{tpu_custom_call.1} parent=183 // pred_check_branch
          %1339 = sbr.rel (%p1337) target = $region216
        $region215: #{tpu_custom_call.1} parent=183 // pred_region
          %1341 = dma.done [#allocation15], 16
        $region216: #{tpu_custom_call.1} parent=183 // pred_fallthru
          _
        // Predicated region
        $region217: #{tpu_custom_call.1} parent=183 // pred_check
          %p1342 = pneg %p463
        $region218: #{tpu_custom_call.1} parent=183 // pred_check_branch
          %1344 = sbr.rel (%p1342) target = $region220
        $region219: #{tpu_custom_call.1} parent=183 // pred_region
          %1346 = dma.done [#allocation15], 16
        $region220: #{tpu_custom_call.1} parent=183 // pred_fallthru
          _
        // Predicated region
        $region221: #{tpu_custom_call.1} parent=183 // pred_check
          %p1347 = pneg %p505
        $region222: #{tpu_custom_call.1} parent=183 // pred_check_branch
          %1349 = sbr.rel (%p1347) target = $region224
        $region223: #{tpu_custom_call.1} parent=183 // pred_region
          %1351 = dma.done [#allocation18], 16
        $region224: #{tpu_custom_call.1} parent=183 // pred_fallthru
          _
        // Predicated region
        $region225: #{tpu_custom_call.1} parent=183 // pred_check
          %p1352 = pneg %p547
        $region226: #{tpu_custom_call.1} parent=183 // pred_check_branch
          %1354 = sbr.rel (%p1352) target = $region228
        $region227: #{tpu_custom_call.1} parent=183 // pred_region
          %1356 = dma.done [#allocation18], 16
        $region228: #{tpu_custom_call.1} parent=183 // pred_fallthru
          _
        // Predicated region
        $region229: #{tpu_custom_call.1} parent=183 // pred_check
          %p1357 = pneg %p589
        $region230: #{tpu_custom_call.1} parent=183 // pred_check_branch
          %1359 = sbr.rel (%p1357) target = $region232
        $region231: #{tpu_custom_call.1} parent=183 // pred_region
          %1361 = dma.done [#allocation21], 32
        $region232: #{tpu_custom_call.1} parent=183 // pred_fallthru
          _
        // Predicated region
        $region233: #{tpu_custom_call.1} parent=183 // pred_check
          %p1362 = pneg %p631
        $region234: #{tpu_custom_call.1} parent=183 // pred_check_branch
          %1364 = sbr.rel (%p1362) target = $region236
        $region235: #{tpu_custom_call.1} parent=183 // pred_region
          %1366 = dma.done [#allocation21], 32
        $region236: #{tpu_custom_call.1} parent=183 // pred_fallthru
          _
        // Predicated region
        $region237: #{tpu_custom_call.1} parent=183 // pred_check
          %p1367 = pneg %p673
        $region238: #{tpu_custom_call.1} parent=183 // pred_check_branch
          %1369 = sbr.rel (%p1367) target = $region240
        $region239: #{tpu_custom_call.1} parent=183 // pred_region
          %1371 = dma.done [#allocation24], 32
        $region240: #{tpu_custom_call.1} parent=183 // pred_fallthru
          _
        // Predicated region
        $region241: #{tpu_custom_call.1} parent=183 // pred_check
          %p1372 = pneg %p715
        $region242: #{tpu_custom_call.1} parent=183 // pred_check_branch
          %1374 = sbr.rel (%p1372) target = $region244
        $region243: #{tpu_custom_call.1} parent=183 // pred_region
          %1376 = dma.done [#allocation24], 16
        $region244: #{tpu_custom_call.1} parent=183 // pred_fallthru
          _
        // Predicated region
        $region245: #{tpu_custom_call.1} parent=183 // pred_check
          %p1377 = pneg %p736
        $region246: #{tpu_custom_call.1} parent=183 // pred_check_branch
          %1379 = sbr.rel (%p1377) target = $region248
        $region247: #{tpu_custom_call.1} parent=183 // pred_region
          %1381 = dma.done [#allocation27], 16
        $region248: #{tpu_custom_call.1} parent=183 // pred_fallthru
          _
        %s1382 = smul.u32 4, %s106
        %p1383 = scmp.lt.s32.totalorder %s1382, 7
        %s1384 = scalar_select %p1383, %s1382, 7
        %s1385 = smul.addr %s1384, 8
        %s1386 = scalar_lea.vmem %s1, %s1385
        %p1387 = pneg %p127
        %p1388 = pneg %p124
        %p1389 = pneg %p148
        %p1390 = pneg %p145
        %p1391 = pneg %p169
        %p1392 = pneg %p166
        %p1393 = pneg %p190
        %p1394 = pneg %p187
        %p1395 = pneg %p211
        %p1396 = pneg %p208
        %p1397 = pneg %p232
        %p1398 = pneg %p229
        %p1399 = pneg %p253
        %p1400 = pneg %p250
        %p1401 = pneg %p274
        %p1402 = pneg %p271
        %p1403 = pneg %p295
        %p1404 = pneg %p292
        %p1405 = pneg %p316
        %p1406 = pneg %p313
        %p1407 = pneg %p337
        %p1408 = pneg %p334
        %p1409 = pneg %p358
        %p1410 = pneg %p355
        %p1411 = pneg %p379
        %p1412 = pneg %p376
        %p1413 = pneg %p400
        %p1414 = pneg %p397
        %p1415 = pneg %p421
        %p1416 = pneg %p418
        %p1417 = pneg %p442
        %p1418 = pneg %p439
        %p1419 = pneg %p463
        %p1420 = pneg %p460
        %p1421 = pneg %p484
        %p1422 = pneg %p481
        %p1423 = pneg %p505
        %p1424 = pneg %p502
        %p1425 = pneg %p526
        %p1426 = pneg %p523
        %p1427 = pneg %p547
        %p1428 = pneg %p544
        %p1429 = pneg %p568
        %p1430 = pneg %p565
        %p1431 = pneg %p589
        %p1432 = pneg %p586
        %p1433 = pneg %p610
        %p1434 = pneg %p607
        %p1435 = pneg %p631
        %p1436 = pneg %p628
        %p1437 = pneg %p652
        %p1438 = pneg %p649
        %p1439 = pneg %p673
        %p1440 = pneg %p670
        %p1441 = pneg %p694
        %p1442 = pneg %p691
        %p1443 = pneg %p715
        %p1444 = pneg %p712
        %p1445 = pneg %p736
        %p1446 = pneg %p733
        %p1447 = pneg %p757
        %p1448 = pneg %p754
        %p1449 = pneg %p778
        %p1450 = pneg %p775
        %p1451 = pneg %p799
        %p1452 = pneg %p796
        %p1453 = pneg %p820
        %p1454 = pneg %p817
        %p1455 = pneg %p841
        %p1456 = pneg %p838
        %p1457 = pneg %p862
        %p1458 = pneg %p859
        %p1459 = pneg %p883
        %p1460 = pneg %p880
        %p1461 = pneg %p904
        %p1462 = pneg %p901
        %p1463 = pneg %p925
        %p1464 = pneg %p922
        %p1465 = pneg %p946
        %p1466 = pneg %p943
        %p1467 = pneg %p967
        %p1468 = pneg %p964
        %p1469 = pneg %p993
        %p1470 = pneg %p990
        %s1471 = sand.u32 %s980, 1
        %s1472 = scalar_lea.sflag [#allocation4], %s1471
        %s1473 = sand.u32 %s980, 1
        %s1474 = smul.addr %s1473, 32
        %s1475 = scalar_lea.vmem [#allocation28], %s1474
        %s1476 = smul.u32 4, %s106
        %p1477 = scmp.lt.s32.totalorder %s1476, 7
        %s1478 = scalar_select %p1477, %s1476, 7
        %s1479 = smul.addr %s1478, 8
        %s1480 = scalar_lea.vmem %s1, %s1479
        %s1481 = smul.u32 4, %s106
        %s1482 = smul.u32 4, %s106
        %v1483 = vld [vmem:[%s1480] sm:$0xff]
        %v1484 = vld [vmem:[%s1480 + $0x8] sm:$0xff]
        %v1485 = vld [vmem:[%s1480 + $0x10] sm:$0xff]
        %v1486 = vld [vmem:[%s1480 + $0x18] sm:$0xff]
        %v1487 = vld [vmem:[%s3] sm:$0xff]
        %v1488 = vld [vmem:[#allocation2] sm:$0x1]
        %v1490 = vperm.slane %v1488, 0
        %vm1492 = vcmask 130048
        %v1494 = vsel %vm1492, %v1483, 0
        %v1497 = vsel %vm1492, %v1484, 0
        %v1500 = vsel %vm1492, %v1485, 0
        %v1503 = vsel %vm1492, %v1486, 0
        %v1506 = vsel %vm1492, %v1487, 0
        %1508 = vmatpush.xpose.msra.mxu0 0.0
        %1509 = vmatpush.xpose.msra.mxu0 0.0
        %1510 = vmatpush.xpose.msra.mxu0 0.0
        %1511 = vmatpush.xpose.msra.mxu0 0.0
        %1512 = vmatpush.xpose.msra.mxu0 0.0
        %1513 = vmatpush.xpose.msra.mxu0 0.0
        %1514 = vmatpush.xpose.msra.mxu0 0.0
        %1515 = vmatpush.xpose.msra.mxu0 0.0
        %1516 = vmatpush.xpose.msra.mxu0 0.0
        %1517 = vmatpush.xpose.msra.mxu0 0.0
        %1518 = vmatpush.xpose.msra.mxu0 0.0
        %1519 = vmatpush.xpose.msra.mxu0 0.0
        %1520 = vmatpush.xpose.msra.mxu0 0.0
        %1521 = vmatpush.xpose.msra.mxu0 0.0
        %1522 = vmatpush.xpose.msra.mxu0 0.0
        %1523 = vmatpush.xpose.msra.mxu0 %v1506
        %1524 = vmatmul.f32.gmra.mxu0 %v1494
        %v1525 = vpop.f32.mrf.mxu0
        %v1526 = vadd.f32 %v1490, %v1525
        %1527 = vmatmul.f32.gmra.mxu0 %v1497
        %v1528 = vpop.f32.mrf.mxu0
        %v1529 = vadd.f32 %v1490, %v1528
        %1530 = vmatmul.f32.gmra.mxu0 %v1500
        %v1531 = vpop.f32.mrf.mxu0
        %v1532 = vadd.f32 %v1490, %v1531
        %1533 = vmatmul.f32.gmra.mxu0 %v1503
        %v1534 = vpop.f32.mrf.mxu0
        %v1535 = vadd.f32 %v1490, %v1534
        %1536 = vdwg.mxu0
        %v1537 = vmul.f32 %v1526, 0.35355338
        %v1538 = vmul.f32 %v1529, 0.35355338
        %v1539 = vmul.f32 %v1532, 0.35355338
        %v1540 = vmul.f32 %v1535, 0.35355338
        %v1541 = vld [vmem:[%s7] sm:$0xff]
        %v1542 = vld [vmem:[%s9] sm:$0x1]
        %v1544 = vperm.slane %v1542, 0
        %v1547 = vsel %vm1492, %v1541, 0
        %1549 = vmatpush.xpose.msra.mxu0 0.0
        %1550 = vmatpush.xpose.msra.mxu0 0.0
        %1551 = vmatpush.xpose.msra.mxu0 0.0
        %1552 = vmatpush.xpose.msra.mxu0 0.0
        %1553 = vmatpush.xpose.msra.mxu0 0.0
        %1554 = vmatpush.xpose.msra.mxu0 0.0
        %1555 = vmatpush.xpose.msra.mxu0 0.0
        %1556 = vmatpush.xpose.msra.mxu0 0.0
        %1557 = vmatpush.xpose.msra.mxu0 0.0
        %1558 = vmatpush.xpose.msra.mxu0 0.0
        %1559 = vmatpush.xpose.msra.mxu0 0.0
        %1560 = vmatpush.xpose.msra.mxu0 0.0
        %1561 = vmatpush.xpose.msra.mxu0 0.0
        %1562 = vmatpush.xpose.msra.mxu0 0.0
        %1563 = vmatpush.xpose.msra.mxu0 0.0
        %1564 = vmatpush.xpose.msra.mxu0 %v1547
        %1565 = vmatmul.f32.gmra.mxu0 %v1494
        %v1566 = vpop.f32.mrf.mxu0
        %v1567 = vadd.f32 %v1544, %v1566
        %1568 = vmatmul.f32.gmra.mxu0 %v1497
        %v1569 = vpop.f32.mrf.mxu0
        %v1570 = vadd.f32 %v1544, %v1569
        %1571 = vmatmul.f32.gmra.mxu0 %v1500
        %v1572 = vpop.f32.mrf.mxu0
        %v1573 = vadd.f32 %v1544, %v1572
        %1574 = vmatmul.f32.gmra.mxu0 %v1503
        %v1575 = vpop.f32.mrf.mxu0
        %v1576 = vadd.f32 %v1544, %v1575
        %1577 = vdwg.mxu0
        %v1578 = vld [vmem:[%s11] sm:$0xff]
        %v1579 = vld [vmem:[#allocation5] sm:$0x1]
        %v1581 = vperm.slane %v1579, 0
        %v1584 = vsel %vm1492, %v1578, 0
        %1586 = vmatpush.xpose.msra.mxu0 0.0
        %1587 = vmatpush.xpose.msra.mxu0 0.0
        %1588 = vmatpush.xpose.msra.mxu0 0.0
        %1589 = vmatpush.xpose.msra.mxu0 0.0
        %1590 = vmatpush.xpose.msra.mxu0 0.0
        %1591 = vmatpush.xpose.msra.mxu0 0.0
        %1592 = vmatpush.xpose.msra.mxu0 0.0
        %1593 = vmatpush.xpose.msra.mxu0 0.0
        %1594 = vmatpush.xpose.msra.mxu0 0.0
        %1595 = vmatpush.xpose.msra.mxu0 0.0
        %1596 = vmatpush.xpose.msra.mxu0 0.0
        %1597 = vmatpush.xpose.msra.mxu0 0.0
        %1598 = vmatpush.xpose.msra.mxu0 0.0
        %1599 = vmatpush.xpose.msra.mxu0 0.0
        %1600 = vmatpush.xpose.msra.mxu0 0.0
        %1601 = vmatpush.xpose.msra.mxu0 %v1584
        %1602 = vmatmul.f32.gmra.mxu0 %v1494
        %v1603 = vpop.f32.mrf.mxu0
        %v1604 = vadd.f32 %v1581, %v1603
        %1605 = vmatmul.f32.gmra.mxu0 %v1497
        %v1606 = vpop.f32.mrf.mxu0
        %v1607 = vadd.f32 %v1581, %v1606
        %1608 = vmatmul.f32.gmra.mxu0 %v1500
        %v1609 = vpop.f32.mrf.mxu0
        %v1610 = vadd.f32 %v1581, %v1609
        %1611 = vmatmul.f32.gmra.mxu0 %v1503
        %v1612 = vpop.f32.mrf.mxu0
        %v1613 = vadd.f32 %v1581, %v1612
        %1614 = vdwg.mxu0
        %vm1615 = vcmask 64512
        %v1617 = vsel %vm1615, %v1537, 0
        %v1620 = vsel %vm1615, %v1567, 0
        %1622 = vmatpush.xpose.msra.mxu0 0.0
        %1623 = vmatpush.xpose.msra.mxu0 0.0
        %1624 = vmatpush.xpose.msra.mxu0 0.0
        %1625 = vmatpush.xpose.msra.mxu0 0.0
        %1626 = vmatpush.xpose.msra.mxu0 0.0
        %1627 = vmatpush.xpose.msra.mxu0 0.0
        %1628 = vmatpush.xpose.msra.mxu0 0.0
        %1629 = vmatpush.xpose.msra.mxu0 0.0
        %1630 = vmatpush.xpose.msra.mxu0 0.0
        %1631 = vmatpush.xpose.msra.mxu0 0.0
        %1632 = vmatpush.xpose.msra.mxu0 0.0
        %1633 = vmatpush.xpose.msra.mxu0 0.0
        %1634 = vmatpush.xpose.msra.mxu0 0.0
        %1635 = vmatpush.xpose.msra.mxu0 0.0
        %1636 = vmatpush.xpose.msra.mxu0 0.0
        %1637 = vmatpush.xpose.msra.mxu0 %v1620
        %1638 = vmatmul.f32.gmra.mxu0 %v1617
        %v1639 = vpop.f32.mrf.mxu0
        %v1640 = vadd.f32 0.0, %v1639
        %1641 = vdwg.mxu0
        %v1643 = vsel %vm1615, %v1538, 0
        %v1646 = vsel %vm1615, %v1570, 0
        %1648 = vmatpush.xpose.msra.mxu0 0.0
        %1649 = vmatpush.xpose.msra.mxu0 0.0
        %1650 = vmatpush.xpose.msra.mxu0 0.0
        %1651 = vmatpush.xpose.msra.mxu0 0.0
        %1652 = vmatpush.xpose.msra.mxu0 0.0
        %1653 = vmatpush.xpose.msra.mxu0 0.0
        %1654 = vmatpush.xpose.msra.mxu0 0.0
        %1655 = vmatpush.xpose.msra.mxu0 0.0
        %1656 = vmatpush.xpose.msra.mxu0 0.0
        %1657 = vmatpush.xpose.msra.mxu0 0.0
        %1658 = vmatpush.xpose.msra.mxu0 0.0
        %1659 = vmatpush.xpose.msra.mxu0 0.0
        %1660 = vmatpush.xpose.msra.mxu0 0.0
        %1661 = vmatpush.xpose.msra.mxu0 0.0
        %1662 = vmatpush.xpose.msra.mxu0 0.0
        %1663 = vmatpush.xpose.msra.mxu0 %v1646
        %1664 = vmatmul.f32.gmra.mxu0 %v1643
        %v1665 = vpop.f32.mrf.mxu0
        %v1666 = vadd.f32 0.0, %v1665
        %1667 = vdwg.mxu0
        %v1669 = vsel %vm1615, %v1539, 0
        %v1672 = vsel %vm1615, %v1573, 0
        %1674 = vmatpush.xpose.msra.mxu0 0.0
        %1675 = vmatpush.xpose.msra.mxu0 0.0
        %1676 = vmatpush.xpose.msra.mxu0 0.0
        %1677 = vmatpush.xpose.msra.mxu0 0.0
        %1678 = vmatpush.xpose.msra.mxu0 0.0
        %1679 = vmatpush.xpose.msra.mxu0 0.0
        %1680 = vmatpush.xpose.msra.mxu0 0.0
        %1681 = vmatpush.xpose.msra.mxu0 0.0
        %1682 = vmatpush.xpose.msra.mxu0 0.0
        %1683 = vmatpush.xpose.msra.mxu0 0.0
        %1684 = vmatpush.xpose.msra.mxu0 0.0
        %1685 = vmatpush.xpose.msra.mxu0 0.0
        %1686 = vmatpush.xpose.msra.mxu0 0.0
        %1687 = vmatpush.xpose.msra.mxu0 0.0
        %1688 = vmatpush.xpose.msra.mxu0 0.0
        %1689 = vmatpush.xpose.msra.mxu0 %v1672
        %1690 = vmatmul.f32.gmra.mxu0 %v1669
        %v1691 = vpop.f32.mrf.mxu0
        %v1692 = vadd.f32 0.0, %v1691
        %1693 = vdwg.mxu0
        %v1695 = vsel %vm1615, %v1540, 0
        %v1698 = vsel %vm1615, %v1576, 0
        %1700 = vmatpush.xpose.msra.mxu0 0.0
        %1701 = vmatpush.xpose.msra.mxu0 0.0
        %1702 = vmatpush.xpose.msra.mxu0 0.0
        %1703 = vmatpush.xpose.msra.mxu0 0.0
        %1704 = vmatpush.xpose.msra.mxu0 0.0
        %1705 = vmatpush.xpose.msra.mxu0 0.0
        %1706 = vmatpush.xpose.msra.mxu0 0.0
        %1707 = vmatpush.xpose.msra.mxu0 0.0
        %1708 = vmatpush.xpose.msra.mxu0 0.0
        %1709 = vmatpush.xpose.msra.mxu0 0.0
        %1710 = vmatpush.xpose.msra.mxu0 0.0
        %1711 = vmatpush.xpose.msra.mxu0 0.0
        %1712 = vmatpush.xpose.msra.mxu0 0.0
        %1713 = vmatpush.xpose.msra.mxu0 0.0
        %1714 = vmatpush.xpose.msra.mxu0 0.0
        %1715 = vmatpush.xpose.msra.mxu0 %v1698
        %1716 = vmatmul.f32.gmra.mxu0 %v1695
        %v1717 = vpop.f32.mrf.mxu0
        %v1718 = vadd.f32 0.0, %v1717
        %1719 = vdwg.mxu0
        %v1720 = vsel %vm1615, %v1640, -inf
        %1721 = vmax.xlane.f32.xlu0 %v1720
        %v1722 = vpop.xlane.xlu0 %1721
        %v1723 = vsel %vm1615, %v1666, -inf
        %1724 = vmax.xlane.f32.xlu0 %v1723
        %v1725 = vpop.xlane.xlu0 %1724
        %v1726 = vsel %vm1615, %v1692, -inf
        %1727 = vmax.xlane.f32.xlu0 %v1726
        %v1728 = vpop.xlane.xlu0 %1727
        %v1729 = vsel %vm1615, %v1718, -inf
        %1730 = vmax.xlane.f32.xlu0 %v1729
        %v1731 = vpop.xlane.xlu0 %1730
        %v1732 = vsub.f32 %v1640, %v1722
        %v1733 = vsub.f32 %v1666, %v1725
        %v1734 = vsub.f32 %v1692, %v1728
        %v1735 = vsub.f32 %v1718, %v1731
        %v1736 = vmul.f32 %v1732, 1.442695
        %v1737 = vpow.pop %v1736
        %v1738 = vmul.f32 %v1733, 1.442695
        %v1739 = vpow.pop %v1738
        %v1740 = vmul.f32 %v1734, 1.442695
        %v1741 = vpow.pop %v1740
        %v1742 = vmul.f32 %v1735, 1.442695
        %v1743 = vpow.pop %v1742
        %v1744 = vsel %vm1615, %v1737, 0.0
        %1745 = vadd.xlane.f32.xlu0 %v1744
        %v1746 = vpop.xlane.xlu0 %1745
        %v1747 = vsel %vm1615, %v1739, 0.0
        %1748 = vadd.xlane.f32.xlu0 %v1747
        %v1749 = vpop.xlane.xlu0 %1748
        %v1750 = vsel %vm1615, %v1741, 0.0
        %1751 = vadd.xlane.f32.xlu0 %v1750
        %v1752 = vpop.xlane.xlu0 %1751
        %v1753 = vsel %vm1615, %v1743, 0.0
        %1754 = vadd.xlane.f32.xlu0 %v1753
        %v1755 = vpop.xlane.xlu0 %1754
        %v1756 = vrcp.pop %v1746
        %v1757 = vrcp.pop %v1749
        %v1758 = vrcp.pop %v1752
        %v1759 = vrcp.pop %v1755
        %v1760 = vmul.f32 %v1737, %v1756
        %v1761 = vmul.f32 %v1739, %v1757
        %v1762 = vmul.f32 %v1741, %v1758
        %v1763 = vmul.f32 %v1743, %v1759
        %v1765 = vsel %vm1615, %v1760, 0
        %1767 = vmatpush.msra.mxu0 0.0
        %1768 = vmatpush.msra.mxu0 0.0
        %1769 = vmatpush.msra.mxu0 0.0
        %1770 = vmatpush.msra.mxu0 0.0
        %1771 = vmatpush.msra.mxu0 0.0
        %1772 = vmatpush.msra.mxu0 0.0
        %1773 = vmatpush.msra.mxu0 0.0
        %1774 = vmatpush.msra.mxu0 0.0
        %1775 = vmatpush.msra.mxu0 0.0
        %1776 = vmatpush.msra.mxu0 0.0
        %1777 = vmatpush.msra.mxu0 0.0
        %1778 = vmatpush.msra.mxu0 0.0
        %1779 = vmatpush.msra.mxu0 0.0
        %1780 = vmatpush.msra.mxu0 0.0
        %1781 = vmatpush.msra.mxu0 0.0
        %1782 = vmatpush.msra.mxu0 %v1604
        %1783 = vmatmul.f32.gmra.mxu0 %v1765
        %v1784 = vpop.f32.mrf.mxu0
        %v1785 = vadd.f32 0.0, %v1784
        %1786 = vdwg.mxu0
        %v1788 = vsel %vm1615, %v1761, 0
        %1790 = vmatpush.msra.mxu0 0.0
        %1791 = vmatpush.msra.mxu0 0.0
        %1792 = vmatpush.msra.mxu0 0.0
        %1793 = vmatpush.msra.mxu0 0.0
        %1794 = vmatpush.msra.mxu0 0.0
        %1795 = vmatpush.msra.mxu0 0.0
        %1796 = vmatpush.msra.mxu0 0.0
        %1797 = vmatpush.msra.mxu0 0.0
        %1798 = vmatpush.msra.mxu0 0.0
        %1799 = vmatpush.msra.mxu0 0.0
        %1800 = vmatpush.msra.mxu0 0.0
        %1801 = vmatpush.msra.mxu0 0.0
        %1802 = vmatpush.msra.mxu0 0.0
        %1803 = vmatpush.msra.mxu0 0.0
        %1804 = vmatpush.msra.mxu0 0.0
        %1805 = vmatpush.msra.mxu0 %v1607
        %1806 = vmatmul.f32.gmra.mxu0 %v1788
        %v1807 = vpop.f32.mrf.mxu0
        %v1808 = vadd.f32 0.0, %v1807
        %1809 = vdwg.mxu0
        %v1811 = vsel %vm1615, %v1762, 0
        %1813 = vmatpush.msra.mxu0 0.0
        %1814 = vmatpush.msra.mxu0 0.0
        %1815 = vmatpush.msra.mxu0 0.0
        %1816 = vmatpush.msra.mxu0 0.0
        %1817 = vmatpush.msra.mxu0 0.0
        %1818 = vmatpush.msra.mxu0 0.0
        %1819 = vmatpush.msra.mxu0 0.0
        %1820 = vmatpush.msra.mxu0 0.0
        %1821 = vmatpush.msra.mxu0 0.0
        %1822 = vmatpush.msra.mxu0 0.0
        %1823 = vmatpush.msra.mxu0 0.0
        %1824 = vmatpush.msra.mxu0 0.0
        %1825 = vmatpush.msra.mxu0 0.0
        %1826 = vmatpush.msra.mxu0 0.0
        %1827 = vmatpush.msra.mxu0 0.0
        %1828 = vmatpush.msra.mxu0 %v1610
        %1829 = vmatmul.f32.gmra.mxu0 %v1811
        %v1830 = vpop.f32.mrf.mxu0
        %v1831 = vadd.f32 0.0, %v1830
        %1832 = vdwg.mxu0
        %v1834 = vsel %vm1615, %v1763, 0
        %1836 = vmatpush.msra.mxu0 0.0
        %1837 = vmatpush.msra.mxu0 0.0
        %1838 = vmatpush.msra.mxu0 0.0
        %1839 = vmatpush.msra.mxu0 0.0
        %1840 = vmatpush.msra.mxu0 0.0
        %1841 = vmatpush.msra.mxu0 0.0
        %1842 = vmatpush.msra.mxu0 0.0
        %1843 = vmatpush.msra.mxu0 0.0
        %1844 = vmatpush.msra.mxu0 0.0
        %1845 = vmatpush.msra.mxu0 0.0
        %1846 = vmatpush.msra.mxu0 0.0
        %1847 = vmatpush.msra.mxu0 0.0
        %1848 = vmatpush.msra.mxu0 0.0
        %1849 = vmatpush.msra.mxu0 0.0
        %1850 = vmatpush.msra.mxu0 0.0
        %1851 = vmatpush.msra.mxu0 %v1613
        %1852 = vmatmul.f32.gmra.mxu0 %v1834
        %v1853 = vpop.f32.mrf.mxu0
        %v1854 = vadd.f32 0.0, %v1853
        %1855 = vdwg.mxu0
        %v1856 = vld [vmem:[%s15] sm:$0xff]
        %v1857 = vld [vmem:[%s15 + $0x8] sm:$0xff]
        %s1858 = scalar_lea.vmem %s3, 8
        %v1859 = vld [vmem:[%s1858] sm:$0xff]
        %s1860 = scalar_lea.vmem [#allocation2], 1
        %v1861 = vld [vmem:[%s1860] sm:$0x1]
        %v1863 = vperm.slane %v1861, 0
        %v1866 = vsel %vm1492, %v1859, 0
        %1868 = vmatpush.xpose.msra.mxu0 0.0
        %1869 = vmatpush.xpose.msra.mxu0 0.0
        %1870 = vmatpush.xpose.msra.mxu0 0.0
        %1871 = vmatpush.xpose.msra.mxu0 0.0
        %1872 = vmatpush.xpose.msra.mxu0 0.0
        %1873 = vmatpush.xpose.msra.mxu0 0.0
        %1874 = vmatpush.xpose.msra.mxu0 0.0
        %1875 = vmatpush.xpose.msra.mxu0 0.0
        %1876 = vmatpush.xpose.msra.mxu0 0.0
        %1877 = vmatpush.xpose.msra.mxu0 0.0
        %1878 = vmatpush.xpose.msra.mxu0 0.0
        %1879 = vmatpush.xpose.msra.mxu0 0.0
        %1880 = vmatpush.xpose.msra.mxu0 0.0
        %1881 = vmatpush.xpose.msra.mxu0 0.0
        %1882 = vmatpush.xpose.msra.mxu0 0.0
        %1883 = vmatpush.xpose.msra.mxu0 %v1866
        %1884 = vmatmul.f32.gmra.mxu0 %v1494
        %v1885 = vpop.f32.mrf.mxu0
        %v1886 = vadd.f32 %v1863, %v1885
        %1887 = vmatmul.f32.gmra.mxu0 %v1497
        %v1888 = vpop.f32.mrf.mxu0
        %v1889 = vadd.f32 %v1863, %v1888
        %1890 = vmatmul.f32.gmra.mxu0 %v1500
        %v1891 = vpop.f32.mrf.mxu0
        %v1892 = vadd.f32 %v1863, %v1891
        %1893 = vmatmul.f32.gmra.mxu0 %v1503
        %v1894 = vpop.f32.mrf.mxu0
        %v1895 = vadd.f32 %v1863, %v1894
        %1896 = vdwg.mxu0
        %v1897 = vmul.f32 %v1886, 0.35355338
        %v1898 = vmul.f32 %v1889, 0.35355338
        %v1899 = vmul.f32 %v1892, 0.35355338
        %v1900 = vmul.f32 %v1895, 0.35355338
        %s1901 = scalar_lea.vmem %s7, 8
        %v1902 = vld [vmem:[%s1901] sm:$0xff]
        %s1903 = scalar_lea.vmem %s9, 1
        %v1904 = vld [vmem:[%s1903] sm:$0x1]
        %v1906 = vperm.slane %v1904, 0
        %v1909 = vsel %vm1492, %v1902, 0
        %1911 = vmatpush.xpose.msra.mxu0 0.0
        %1912 = vmatpush.xpose.msra.mxu0 0.0
        %1913 = vmatpush.xpose.msra.mxu0 0.0
        %1914 = vmatpush.xpose.msra.mxu0 0.0
        %1915 = vmatpush.xpose.msra.mxu0 0.0
        %1916 = vmatpush.xpose.msra.mxu0 0.0
        %1917 = vmatpush.xpose.msra.mxu0 0.0
        %1918 = vmatpush.xpose.msra.mxu0 0.0
        %1919 = vmatpush.xpose.msra.mxu0 0.0
        %1920 = vmatpush.xpose.msra.mxu0 0.0
        %1921 = vmatpush.xpose.msra.mxu0 0.0
        %1922 = vmatpush.xpose.msra.mxu0 0.0
        %1923 = vmatpush.xpose.msra.mxu0 0.0
        %1924 = vmatpush.xpose.msra.mxu0 0.0
        %1925 = vmatpush.xpose.msra.mxu0 0.0
        %1926 = vmatpush.xpose.msra.mxu0 %v1909
        %1927 = vmatmul.f32.gmra.mxu0 %v1494
        %v1928 = vpop.f32.mrf.mxu0
        %v1929 = vadd.f32 %v1906, %v1928
        %1930 = vmatmul.f32.gmra.mxu0 %v1497
        %v1931 = vpop.f32.mrf.mxu0
        %v1932 = vadd.f32 %v1906, %v1931
        %1933 = vmatmul.f32.gmra.mxu0 %v1500
        %v1934 = vpop.f32.mrf.mxu0
        %v1935 = vadd.f32 %v1906, %v1934
        %1936 = vmatmul.f32.gmra.mxu0 %v1503
        %v1937 = vpop.f32.mrf.mxu0
        %v1938 = vadd.f32 %v1906, %v1937
        %1939 = vdwg.mxu0
        %s1940 = scalar_lea.vmem %s11, 8
        %v1941 = vld [vmem:[%s1940] sm:$0xff]
        %s1942 = scalar_lea.vmem [#allocation5], 1
        %v1943 = vld [vmem:[%s1942] sm:$0x1]
        %v1945 = vperm.slane %v1943, 0
        %v1948 = vsel %vm1492, %v1941, 0
        %1950 = vmatpush.xpose.msra.mxu0 0.0
        %1951 = vmatpush.xpose.msra.mxu0 0.0
        %1952 = vmatpush.xpose.msra.mxu0 0.0
        %1953 = vmatpush.xpose.msra.mxu0 0.0
        %1954 = vmatpush.xpose.msra.mxu0 0.0
        %1955 = vmatpush.xpose.msra.mxu0 0.0
        %1956 = vmatpush.xpose.msra.mxu0 0.0
        %1957 = vmatpush.xpose.msra.mxu0 0.0
        %1958 = vmatpush.xpose.msra.mxu0 0.0
        %1959 = vmatpush.xpose.msra.mxu0 0.0
        %1960 = vmatpush.xpose.msra.mxu0 0.0
        %1961 = vmatpush.xpose.msra.mxu0 0.0
        %1962 = vmatpush.xpose.msra.mxu0 0.0
        %1963 = vmatpush.xpose.msra.mxu0 0.0
        %1964 = vmatpush.xpose.msra.mxu0 0.0
        %1965 = vmatpush.xpose.msra.mxu0 %v1948
        %1966 = vmatmul.f32.gmra.mxu0 %v1494
        %v1967 = vpop.f32.mrf.mxu0
        %v1968 = vadd.f32 %v1945, %v1967
        %1969 = vmatmul.f32.gmra.mxu0 %v1497
        %v1970 = vpop.f32.mrf.mxu0
        %v1971 = vadd.f32 %v1945, %v1970
        %1972 = vmatmul.f32.gmra.mxu0 %v1500
        %v1973 = vpop.f32.mrf.mxu0
        %v1974 = vadd.f32 %v1945, %v1973
        %1975 = vmatmul.f32.gmra.mxu0 %v1503
        %v1976 = vpop.f32.mrf.mxu0
        %v1977 = vadd.f32 %v1945, %v1976
        %1978 = vdwg.mxu0
        %v1980 = vsel %vm1615, %v1897, 0
        %v1983 = vsel %vm1615, %v1929, 0
        %1985 = vmatpush.xpose.msra.mxu0 0.0
        %1986 = vmatpush.xpose.msra.mxu0 0.0
        %1987 = vmatpush.xpose.msra.mxu0 0.0
        %1988 = vmatpush.xpose.msra.mxu0 0.0
        %1989 = vmatpush.xpose.msra.mxu0 0.0
        %1990 = vmatpush.xpose.msra.mxu0 0.0
        %1991 = vmatpush.xpose.msra.mxu0 0.0
        %1992 = vmatpush.xpose.msra.mxu0 0.0
        %1993 = vmatpush.xpose.msra.mxu0 0.0
        %1994 = vmatpush.xpose.msra.mxu0 0.0
        %1995 = vmatpush.xpose.msra.mxu0 0.0
        %1996 = vmatpush.xpose.msra.mxu0 0.0
        %1997 = vmatpush.xpose.msra.mxu0 0.0
        %1998 = vmatpush.xpose.msra.mxu0 0.0
        %1999 = vmatpush.xpose.msra.mxu0 0.0
        %2000 = vmatpush.xpose.msra.mxu0 %v1983
        %2001 = vmatmul.f32.gmra.mxu0 %v1980
        %v2002 = vpop.f32.mrf.mxu0
        %v2003 = vadd.f32 0.0, %v2002
        %2004 = vdwg.mxu0
        %v2006 = vsel %vm1615, %v1898, 0
        %v2009 = vsel %vm1615, %v1932, 0
        %2011 = vmatpush.xpose.msra.mxu0 0.0
        %2012 = vmatpush.xpose.msra.mxu0 0.0
        %2013 = vmatpush.xpose.msra.mxu0 0.0
        %2014 = vmatpush.xpose.msra.mxu0 0.0
        %2015 = vmatpush.xpose.msra.mxu0 0.0
        %2016 = vmatpush.xpose.msra.mxu0 0.0
        %2017 = vmatpush.xpose.msra.mxu0 0.0
        %2018 = vmatpush.xpose.msra.mxu0 0.0
        %2019 = vmatpush.xpose.msra.mxu0 0.0
        %2020 = vmatpush.xpose.msra.mxu0 0.0
        %2021 = vmatpush.xpose.msra.mxu0 0.0
        %2022 = vmatpush.xpose.msra.mxu0 0.0
        %2023 = vmatpush.xpose.msra.mxu0 0.0
        %2024 = vmatpush.xpose.msra.mxu0 0.0
        %2025 = vmatpush.xpose.msra.mxu0 0.0
        %2026 = vmatpush.xpose.msra.mxu0 %v2009
        %2027 = vmatmul.f32.gmra.mxu0 %v2006
        %v2028 = vpop.f32.mrf.mxu0
        %v2029 = vadd.f32 0.0, %v2028
        %2030 = vdwg.mxu0
        %v2032 = vsel %vm1615, %v1899, 0
        %v2035 = vsel %vm1615, %v1935, 0
        %2037 = vmatpush.xpose.msra.mxu0 0.0
        %2038 = vmatpush.xpose.msra.mxu0 0.0
        %2039 = vmatpush.xpose.msra.mxu0 0.0
        %2040 = vmatpush.xpose.msra.mxu0 0.0
        %2041 = vmatpush.xpose.msra.mxu0 0.0
        %2042 = vmatpush.xpose.msra.mxu0 0.0
        %2043 = vmatpush.xpose.msra.mxu0 0.0
        %2044 = vmatpush.xpose.msra.mxu0 0.0
        %2045 = vmatpush.xpose.msra.mxu0 0.0
        %2046 = vmatpush.xpose.msra.mxu0 0.0
        %2047 = vmatpush.xpose.msra.mxu0 0.0
        %2048 = vmatpush.xpose.msra.mxu0 0.0
        %2049 = vmatpush.xpose.msra.mxu0 0.0
        %2050 = vmatpush.xpose.msra.mxu0 0.0
        %2051 = vmatpush.xpose.msra.mxu0 0.0
        %2052 = vmatpush.xpose.msra.mxu0 %v2035
        %2053 = vmatmul.f32.gmra.mxu0 %v2032
        %v2054 = vpop.f32.mrf.mxu0
        %v2055 = vadd.f32 0.0, %v2054
        %2056 = vdwg.mxu0
        %v2058 = vsel %vm1615, %v1900, 0
        %v2061 = vsel %vm1615, %v1938, 0
        %2063 = vmatpush.xpose.msra.mxu0 0.0
        %2064 = vmatpush.xpose.msra.mxu0 0.0
        %2065 = vmatpush.xpose.msra.mxu0 0.0
        %2066 = vmatpush.xpose.msra.mxu0 0.0
        %2067 = vmatpush.xpose.msra.mxu0 0.0
        %2068 = vmatpush.xpose.msra.mxu0 0.0
        %2069 = vmatpush.xpose.msra.mxu0 0.0
        %2070 = vmatpush.xpose.msra.mxu0 0.0
        %2071 = vmatpush.xpose.msra.mxu0 0.0
        %2072 = vmatpush.xpose.msra.mxu0 0.0
        %2073 = vmatpush.xpose.msra.mxu0 0.0
        %2074 = vmatpush.xpose.msra.mxu0 0.0
        %2075 = vmatpush.xpose.msra.mxu0 0.0
        %2076 = vmatpush.xpose.msra.mxu0 0.0
        %2077 = vmatpush.xpose.msra.mxu0 0.0
        %2078 = vmatpush.xpose.msra.mxu0 %v2061
        %2079 = vmatmul.f32.gmra.mxu0 %v2058
        %v2080 = vpop.f32.mrf.mxu0
        %v2081 = vadd.f32 0.0, %v2080
        %2082 = vdwg.mxu0
        %v2083 = vsel %vm1615, %v2003, -inf
        %2084 = vmax.xlane.f32.xlu0 %v2083
        %v2085 = vpop.xlane.xlu0 %2084
        %v2086 = vsel %vm1615, %v2029, -inf
        %2087 = vmax.xlane.f32.xlu0 %v2086
        %v2088 = vpop.xlane.xlu0 %2087
        %v2089 = vsel %vm1615, %v2055, -inf
        %2090 = vmax.xlane.f32.xlu0 %v2089
        %v2091 = vpop.xlane.xlu0 %2090
        %v2092 = vsel %vm1615, %v2081, -inf
        %2093 = vmax.xlane.f32.xlu0 %v2092
        %v2094 = vpop.xlane.xlu0 %2093
        %v2095 = vsub.f32 %v2003, %v2085
        %v2096 = vsub.f32 %v2029, %v2088
        %v2097 = vsub.f32 %v2055, %v2091
        %v2098 = vsub.f32 %v2081, %v2094
        %v2099 = vmul.f32 %v2095, 1.442695
        %v2100 = vpow.pop %v2099
        %v2101 = vmul.f32 %v2096, 1.442695
        %v2102 = vpow.pop %v2101
        %v2103 = vmul.f32 %v2097, 1.442695
        %v2104 = vpow.pop %v2103
        %v2105 = vmul.f32 %v2098, 1.442695
        %v2106 = vpow.pop %v2105
        %v2107 = vsel %vm1615, %v2100, 0.0
        %2108 = vadd.xlane.f32.xlu0 %v2107
        %v2109 = vpop.xlane.xlu0 %2108
        %v2110 = vsel %vm1615, %v2102, 0.0
        %2111 = vadd.xlane.f32.xlu0 %v2110
        %v2112 = vpop.xlane.xlu0 %2111
        %v2113 = vsel %vm1615, %v2104, 0.0
        %2114 = vadd.xlane.f32.xlu0 %v2113
        %v2115 = vpop.xlane.xlu0 %2114
        %v2116 = vsel %vm1615, %v2106, 0.0
        %2117 = vadd.xlane.f32.xlu0 %v2116
        %v2118 = vpop.xlane.xlu0 %2117
        %v2119 = vrcp.pop %v2109
        %v2120 = vrcp.pop %v2112
        %v2121 = vrcp.pop %v2115
        %v2122 = vrcp.pop %v2118
        %v2123 = vmul.f32 %v2100, %v2119
        %v2124 = vmul.f32 %v2102, %v2120
        %v2125 = vmul.f32 %v2104, %v2121
        %v2126 = vmul.f32 %v2106, %v2122
        %v2128 = vsel %vm1615, %v2123, 0
        %2130 = vmatpush.msra.mxu0 0.0
        %2131 = vmatpush.msra.mxu0 0.0
        %2132 = vmatpush.msra.mxu0 0.0
        %2133 = vmatpush.msra.mxu0 0.0
        %2134 = vmatpush.msra.mxu0 0.0
        %2135 = vmatpush.msra.mxu0 0.0
        %2136 = vmatpush.msra.mxu0 0.0
        %2137 = vmatpush.msra.mxu0 0.0
        %2138 = vmatpush.msra.mxu0 0.0
        %2139 = vmatpush.msra.mxu0 0.0
        %2140 = vmatpush.msra.mxu0 0.0
        %2141 = vmatpush.msra.mxu0 0.0
        %2142 = vmatpush.msra.mxu0 0.0
        %2143 = vmatpush.msra.mxu0 0.0
        %2144 = vmatpush.msra.mxu0 0.0
        %2145 = vmatpush.msra.mxu0 %v1968
        %2146 = vmatmul.f32.gmra.mxu0 %v2128
        %v2147 = vpop.f32.mrf.mxu0
        %v2148 = vadd.f32 0.0, %v2147
        %2149 = vdwg.mxu0
        %v2151 = vsel %vm1615, %v2124, 0
        %2153 = vmatpush.msra.mxu0 0.0
        %2154 = vmatpush.msra.mxu0 0.0
        %2155 = vmatpush.msra.mxu0 0.0
        %2156 = vmatpush.msra.mxu0 0.0
        %2157 = vmatpush.msra.mxu0 0.0
        %2158 = vmatpush.msra.mxu0 0.0
        %2159 = vmatpush.msra.mxu0 0.0
        %2160 = vmatpush.msra.mxu0 0.0
        %2161 = vmatpush.msra.mxu0 0.0
        %2162 = vmatpush.msra.mxu0 0.0
        %2163 = vmatpush.msra.mxu0 0.0
        %2164 = vmatpush.msra.mxu0 0.0
        %2165 = vmatpush.msra.mxu0 0.0
        %2166 = vmatpush.msra.mxu0 0.0
        %2167 = vmatpush.msra.mxu0 0.0
        %2168 = vmatpush.msra.mxu0 %v1971
        %2169 = vmatmul.f32.gmra.mxu0 %v2151
        %v2170 = vpop.f32.mrf.mxu0
        %v2171 = vadd.f32 0.0, %v2170
        %2172 = vdwg.mxu0
        %v2174 = vsel %vm1615, %v2125, 0
        %2176 = vmatpush.msra.mxu0 0.0
        %2177 = vmatpush.msra.mxu0 0.0
        %2178 = vmatpush.msra.mxu0 0.0
        %2179 = vmatpush.msra.mxu0 0.0
        %2180 = vmatpush.msra.mxu0 0.0
        %2181 = vmatpush.msra.mxu0 0.0
        %2182 = vmatpush.msra.mxu0 0.0
        %2183 = vmatpush.msra.mxu0 0.0
        %2184 = vmatpush.msra.mxu0 0.0
        %2185 = vmatpush.msra.mxu0 0.0
        %2186 = vmatpush.msra.mxu0 0.0
        %2187 = vmatpush.msra.mxu0 0.0
        %2188 = vmatpush.msra.mxu0 0.0
        %2189 = vmatpush.msra.mxu0 0.0
        %2190 = vmatpush.msra.mxu0 0.0
        %2191 = vmatpush.msra.mxu0 %v1974
        %2192 = vmatmul.f32.gmra.mxu0 %v2174
        %v2193 = vpop.f32.mrf.mxu0
        %v2194 = vadd.f32 0.0, %v2193
        %2195 = vdwg.mxu0
        %v2197 = vsel %vm1615, %v2126, 0
        %2199 = vmatpush.msra.mxu0 0.0
        %2200 = vmatpush.msra.mxu0 0.0
        %2201 = vmatpush.msra.mxu0 0.0
        %2202 = vmatpush.msra.mxu0 0.0
        %2203 = vmatpush.msra.mxu0 0.0
        %2204 = vmatpush.msra.mxu0 0.0
        %2205 = vmatpush.msra.mxu0 0.0
        %2206 = vmatpush.msra.mxu0 0.0
        %2207 = vmatpush.msra.mxu0 0.0
        %2208 = vmatpush.msra.mxu0 0.0
        %2209 = vmatpush.msra.mxu0 0.0
        %2210 = vmatpush.msra.mxu0 0.0
        %2211 = vmatpush.msra.mxu0 0.0
        %2212 = vmatpush.msra.mxu0 0.0
        %2213 = vmatpush.msra.mxu0 0.0
        %2214 = vmatpush.msra.mxu0 %v1977
        %2215 = vmatmul.f32.gmra.mxu0 %v2197
        %v2216 = vpop.f32.mrf.mxu0
        %v2217 = vadd.f32 0.0, %v2216
        %2218 = vdwg.mxu0
        %s2219 = scalar_lea.vmem %s15, 16
        %v2220 = vld [vmem:[%s2219] sm:$0xff]
        %v2221 = vld [vmem:[%s2219 + $0x8] sm:$0xff]
        %v2223 = vsel %vm1615, %v2148, 0
        %v2226 = vsel %vm1615, %v2171, 0
        %v2229 = vsel %vm1615, %v2194, 0
        %v2232 = vsel %vm1615, %v2217, 0
        %v2235 = vsel %vm1615, %v2220, 0
        %v2238 = vsel %vm1615, %v2221, 0
        %2240 = vmatpush.xpose.msra.mxu0 0.0
        %2241 = vmatpush.xpose.msra.mxu0 0.0
        %2242 = vmatpush.xpose.msra.mxu0 0.0
        %2243 = vmatpush.xpose.msra.mxu0 0.0
        %2244 = vmatpush.xpose.msra.mxu0 0.0
        %2245 = vmatpush.xpose.msra.mxu0 0.0
        %2246 = vmatpush.xpose.msra.mxu0 0.0
        %2247 = vmatpush.xpose.msra.mxu0 0.0
        %2248 = vmatpush.xpose.msra.mxu0 0.0
        %2249 = vmatpush.xpose.msra.mxu0 0.0
        %2250 = vmatpush.xpose.msra.mxu0 0.0
        %2251 = vmatpush.xpose.msra.mxu0 0.0
        %2252 = vmatpush.xpose.msra.mxu0 0.0
        %2253 = vmatpush.xpose.msra.mxu0 0.0
        %2254 = vmatpush.xpose.msra.mxu0 %v2238
        %2255 = vmatpush.xpose.msra.mxu0 %v2235
        %2256 = vmatmul.f32.gmra.mxu0 %v2223
        %v2257 = vpop.f32.mrf.mxu0
        %v2258 = vadd.f32 0.0, %v2257
        %2259 = vmatmul.f32.gmra.mxu0 %v2226
        %v2260 = vpop.f32.mrf.mxu0
        %v2261 = vadd.f32 0.0, %v2260
        %2262 = vmatmul.f32.gmra.mxu0 %v2229
        %v2263 = vpop.f32.mrf.mxu0
        %v2264 = vadd.f32 0.0, %v2263
        %2265 = vmatmul.f32.gmra.mxu0 %v2232
        %v2266 = vpop.f32.mrf.mxu0
        %v2267 = vadd.f32 0.0, %v2266
        %2268 = vdwg.mxu0
        %v2270 = vsel %vm1615, %v1785, 0
        %v2273 = vsel %vm1615, %v1808, 0
        %v2276 = vsel %vm1615, %v1831, 0
        %v2279 = vsel %vm1615, %v1854, 0
        %v2282 = vsel %vm1615, %v1856, 0
        %v2285 = vsel %vm1615, %v1857, 0
        %2287 = vmatpush.xpose.msra.mxu0 0.0
        %2288 = vmatpush.xpose.msra.mxu0 0.0
        %2289 = vmatpush.xpose.msra.mxu0 0.0
        %2290 = vmatpush.xpose.msra.mxu0 0.0
        %2291 = vmatpush.xpose.msra.mxu0 0.0
        %2292 = vmatpush.xpose.msra.mxu0 0.0
        %2293 = vmatpush.xpose.msra.mxu0 0.0
        %2294 = vmatpush.xpose.msra.mxu0 0.0
        %2295 = vmatpush.xpose.msra.mxu0 0.0
        %2296 = vmatpush.xpose.msra.mxu0 0.0
        %2297 = vmatpush.xpose.msra.mxu0 0.0
        %2298 = vmatpush.xpose.msra.mxu0 0.0
        %2299 = vmatpush.xpose.msra.mxu0 0.0
        %2300 = vmatpush.xpose.msra.mxu0 0.0
        %2301 = vmatpush.xpose.msra.mxu0 %v2285
        %2302 = vmatpush.xpose.msra.mxu0 %v2282
        %2303 = vmatmul.f32.gmra.mxu0 %v2270
        %v2304 = vpop.f32.mrf.mxu0
        %v2305 = vadd.f32 %v2258, %v2304
        %2306 = vmatmul.f32.gmra.mxu0 %v2273
        %v2307 = vpop.f32.mrf.mxu0
        %v2308 = vadd.f32 %v2261, %v2307
        %2309 = vmatmul.f32.gmra.mxu0 %v2276
        %v2310 = vpop.f32.mrf.mxu0
        %v2311 = vadd.f32 %v2264, %v2310
        %2312 = vmatmul.f32.gmra.mxu0 %v2279
        %v2313 = vpop.f32.mrf.mxu0
        %v2314 = vadd.f32 %v2267, %v2313
        %2315 = vdwg.mxu0
        %v2316 = vld [vmem:[#allocation7] sm:$0x1]
        %v2318 = vperm.slane %v2316, 0
        %v2320 = vadd.f32 %v2305, %v2318
        %v2321 = vadd.f32 %v2308, %v2318
        %v2322 = vadd.f32 %v2311, %v2318
        %v2323 = vadd.f32 %v2314, %v2318
        %v2324 = vadd.f32 %v1483, %v2320
        %v2325 = vadd.f32 %v1484, %v2321
        %v2326 = vadd.f32 %v1485, %v2322
        %v2327 = vadd.f32 %v1486, %v2323
        %v2328 = vld [vmem:[#allocation8] sm:$0x1]
        %v2329 = vld [vmem:[#allocation10] sm:$0x1]
        %v2330 = vsel %vm1492, %v2324, 0.0
        %2331 = vadd.xlane.f32.xlu0 %v2330
        %v2332 = vpop.xlane.xlu0 %2331
        %v2333 = vsel %vm1492, %v2325, 0.0
        %2334 = vadd.xlane.f32.xlu0 %v2333
        %v2335 = vpop.xlane.xlu0 %2334
        %v2336 = vsel %vm1492, %v2326, 0.0
        %2337 = vadd.xlane.f32.xlu0 %v2336
        %v2338 = vpop.xlane.xlu0 %2337
        %v2339 = vsel %vm1492, %v2327, 0.0
        %2340 = vadd.xlane.f32.xlu0 %v2339
        %v2341 = vpop.xlane.xlu0 %2340
        %v2342 = vrcp.pop 16.0
        %v2343 = vmul.f32 16.0, %v2342
        %v2344 = vsub.f32 1.0, %v2343
        %v2345 = vmul.f32 %v2342, %v2344
        %v2346 = vadd.f32 %v2342, %v2345
        %vm2347 = vweird.f32 %v2342
        %v2348 = vsel %vm2347, %v2342, %v2346
        %v2349 = vmul.f32 %v2332, %v2348
        %v2350 = vmul.f32 %v2335, %v2348
        %v2351 = vmul.f32 %v2338, %v2348
        %v2352 = vmul.f32 %v2341, %v2348
        %v2353 = vsub.f32 %v2324, %v2349
        %v2354 = vsub.f32 %v2325, %v2350
        %v2355 = vsub.f32 %v2326, %v2351
        %v2356 = vsub.f32 %v2327, %v2352
        %v2357 = vmul.f32 %v2353, %v2353
        %v2358 = vmul.f32 %v2354, %v2354
        %v2359 = vmul.f32 %v2355, %v2355
        %v2360 = vmul.f32 %v2356, %v2356
        %v2361 = vsel %vm1492, %v2357, 0.0
        %2362 = vadd.xlane.f32.xlu0 %v2361
        %v2363 = vpop.xlane.xlu0 %2362
        %v2364 = vsel %vm1492, %v2358, 0.0
        %2365 = vadd.xlane.f32.xlu0 %v2364
        %v2366 = vpop.xlane.xlu0 %2365
        %v2367 = vsel %vm1492, %v2359, 0.0
        %2368 = vadd.xlane.f32.xlu0 %v2367
        %v2369 = vpop.xlane.xlu0 %2368
        %v2370 = vsel %vm1492, %v2360, 0.0
        %2371 = vadd.xlane.f32.xlu0 %v2370
        %v2372 = vpop.xlane.xlu0 %2371
        %v2373 = vmul.f32 %v2363, %v2348
        %v2374 = vmul.f32 %v2366, %v2348
        %v2375 = vmul.f32 %v2369, %v2348
        %v2376 = vmul.f32 %v2372, %v2348
        %v2377 = vadd.f32 %v2373, 1e-05
        %v2378 = vadd.f32 %v2374, 1e-05
        %v2379 = vadd.f32 %v2375, 1e-05
        %v2380 = vadd.f32 %v2376, 1e-05
        %v2381 = vrsqrt.pop %v2377
        %v2382 = vmul.f32 %v2381, %v2377
        %v2383 = vmul.f32 %v2382, %v2381
        %v2384 = vmul.f32 0.5, %v2383
        %v2385 = vsub.f32 1.5, %v2384
        %v2386 = vmul.f32 %v2381, %v2385
        %vm2387 = vweird.f32 %v2377
        %vm2388 = vweird.f32 %v2381
        %vm2389 = vmor %vm2387, %vm2388
        %v2390 = vsel %vm2389, %v2381, %v2386
        %v2391 = vrsqrt.pop %v2378
        %v2392 = vmul.f32 %v2391, %v2378
        %v2393 = vmul.f32 %v2392, %v2391
        %v2394 = vmul.f32 0.5, %v2393
        %v2395 = vsub.f32 1.5, %v2394
        %v2396 = vmul.f32 %v2391, %v2395
        %vm2397 = vweird.f32 %v2378
        %vm2398 = vweird.f32 %v2391
        %vm2399 = vmor %vm2397, %vm2398
        %v2400 = vsel %vm2399, %v2391, %v2396
        %v2401 = vrsqrt.pop %v2379
        %v2402 = vmul.f32 %v2401, %v2379
        %v2403 = vmul.f32 %v2402, %v2401
        %v2404 = vmul.f32 0.5, %v2403
        %v2405 = vsub.f32 1.5, %v2404
        %v2406 = vmul.f32 %v2401, %v2405
        %vm2407 = vweird.f32 %v2379
        %vm2408 = vweird.f32 %v2401
        %vm2409 = vmor %vm2407, %vm2408
        %v2410 = vsel %vm2409, %v2401, %v2406
        %v2411 = vrsqrt.pop %v2380
        %v2412 = vmul.f32 %v2411, %v2380
        %v2413 = vmul.f32 %v2412, %v2411
        %v2414 = vmul.f32 0.5, %v2413
        %v2415 = vsub.f32 1.5, %v2414
        %v2416 = vmul.f32 %v2411, %v2415
        %vm2417 = vweird.f32 %v2380
        %vm2418 = vweird.f32 %v2411
        %vm2419 = vmor %vm2417, %vm2418
        %v2420 = vsel %vm2419, %v2411, %v2416
        %v2421 = vmul.f32 %v2353, %v2390
        %v2422 = vmul.f32 %v2354, %v2400
        %v2423 = vmul.f32 %v2355, %v2410
        %v2424 = vmul.f32 %v2356, %v2420
        %v2426 = vperm.slane %v2328, 0
        %v2428 = vmul.f32 %v2421, %v2426
        %v2429 = vmul.f32 %v2422, %v2426
        %v2430 = vmul.f32 %v2423, %v2426
        %v2431 = vmul.f32 %v2424, %v2426
        %v2433 = vperm.slane %v2329, 0
        %v2435 = vadd.f32 %v2428, %v2433
        %v2436 = vadd.f32 %v2429, %v2433
        %v2437 = vadd.f32 %v2430, %v2433
        %v2438 = vadd.f32 %v2431, %v2433
        %v2439 = vld [vmem:[%s23] sm:$0xff]
        %v2440 = vld [vmem:[%s23 + $0x8] sm:$0xff]
        %v2441 = vld [vmem:[%s23 + $0x10] sm:$0xff]
        %v2442 = vld [vmem:[%s23 + $0x18] sm:$0xff]
        %v2443 = vld [vmem:[%s23 + $0x20] sm:$0xff]
        %v2444 = vld [vmem:[%s23 + $0x28] sm:$0xff]
        %v2445 = vld [vmem:[%s23 + $0x30] sm:$0xff]
        %v2446 = vld [vmem:[%s23 + $0x38] sm:$0xff]
        %v2447 = vld [vmem:[#allocation11] sm:$0x1]
        %v2449 = vperm.slane %v2447, 0
        %v2452 = vsel %vm1492, %v2435, 0
        %v2455 = vsel %vm1492, %v2436, 0
        %v2458 = vsel %vm1492, %v2437, 0
        %v2461 = vsel %vm1492, %v2438, 0
        %v2464 = vsel %vm1492, %v2439, 0
        %v2467 = vsel %vm1492, %v2440, 0
        %v2470 = vsel %vm1492, %v2441, 0
        %v2473 = vsel %vm1492, %v2442, 0
        %v2476 = vsel %vm1492, %v2443, 0
        %v2479 = vsel %vm1492, %v2444, 0
        %v2482 = vsel %vm1492, %v2445, 0
        %v2485 = vsel %vm1492, %v2446, 0
        %2487 = vmatpush.xpose.msra.mxu0 0.0
        %2488 = vmatpush.xpose.msra.mxu0 0.0
        %2489 = vmatpush.xpose.msra.mxu0 0.0
        %2490 = vmatpush.xpose.msra.mxu0 0.0
        %2491 = vmatpush.xpose.msra.mxu0 0.0
        %2492 = vmatpush.xpose.msra.mxu0 0.0
        %2493 = vmatpush.xpose.msra.mxu0 0.0
        %2494 = vmatpush.xpose.msra.mxu0 0.0
        %2495 = vmatpush.xpose.msra.mxu0 %v2485
        %2496 = vmatpush.xpose.msra.mxu0 %v2482
        %2497 = vmatpush.xpose.msra.mxu0 %v2479
        %2498 = vmatpush.xpose.msra.mxu0 %v2476
        %2499 = vmatpush.xpose.msra.mxu0 %v2473
        %2500 = vmatpush.xpose.msra.mxu0 %v2470
        %2501 = vmatpush.xpose.msra.mxu0 %v2467
        %2502 = vmatpush.xpose.msra.mxu0 %v2464
        %2503 = vmatmul.f32.gmra.mxu0 %v2452
        %v2504 = vpop.f32.mrf.mxu0
        %v2505 = vadd.f32 %v2449, %v2504
        %2506 = vmatmul.f32.gmra.mxu0 %v2455
        %v2507 = vpop.f32.mrf.mxu0
        %v2508 = vadd.f32 %v2449, %v2507
        %2509 = vmatmul.f32.gmra.mxu0 %v2458
        %v2510 = vpop.f32.mrf.mxu0
        %v2511 = vadd.f32 %v2449, %v2510
        %2512 = vmatmul.f32.gmra.mxu0 %v2461
        %v2513 = vpop.f32.mrf.mxu0
        %v2514 = vadd.f32 %v2449, %v2513
        %2515 = vdwg.mxu0
        %v2516 = vmax.f32 %v2505, 0.0
        %v2517 = vmax.f32 %v2508, 0.0
        %v2518 = vmax.f32 %v2511, 0.0
        %v2519 = vmax.f32 %v2514, 0.0
        %v2520 = vld [vmem:[%s27] sm:$0xff]
        %v2521 = vld [vmem:[%s27 + $0x8] sm:$0xff]
        %v2522 = vld [vmem:[#allocation13] sm:$0x1]
        %v2524 = vperm.slane %v2522, 0
        %vm2526 = vcmask 523264
        %v2528 = vsel %vm2526, %v2516, 0
        %v2531 = vsel %vm2526, %v2517, 0
        %v2534 = vsel %vm2526, %v2518, 0
        %v2537 = vsel %vm2526, %v2519, 0
        %v2540 = vsel %vm2526, %v2520, 0
        %v2543 = vsel %vm2526, %v2521, 0
        %2545 = vmatpush.xpose.msra.mxu0 0.0
        %2546 = vmatpush.xpose.msra.mxu0 0.0
        %2547 = vmatpush.xpose.msra.mxu0 0.0
        %2548 = vmatpush.xpose.msra.mxu0 0.0
        %2549 = vmatpush.xpose.msra.mxu0 0.0
        %2550 = vmatpush.xpose.msra.mxu0 0.0
        %2551 = vmatpush.xpose.msra.mxu0 0.0
        %2552 = vmatpush.xpose.msra.mxu0 0.0
        %2553 = vmatpush.xpose.msra.mxu0 0.0
        %2554 = vmatpush.xpose.msra.mxu0 0.0
        %2555 = vmatpush.xpose.msra.mxu0 0.0
        %2556 = vmatpush.xpose.msra.mxu0 0.0
        %2557 = vmatpush.xpose.msra.mxu0 0.0
        %2558 = vmatpush.xpose.msra.mxu0 0.0
        %2559 = vmatpush.xpose.msra.mxu0 %v2543
        %2560 = vmatpush.xpose.msra.mxu0 %v2540
        %2561 = vmatmul.f32.gmra.mxu0 %v2528
        %v2562 = vpop.f32.mrf.mxu0
        %v2563 = vadd.f32 %v2524, %v2562
        %2564 = vmatmul.f32.gmra.mxu0 %v2531
        %v2565 = vpop.f32.mrf.mxu0
        %v2566 = vadd.f32 %v2524, %v2565
        %2567 = vmatmul.f32.gmra.mxu0 %v2534
        %v2568 = vpop.f32.mrf.mxu0
        %v2569 = vadd.f32 %v2524, %v2568
        %2570 = vmatmul.f32.gmra.mxu0 %v2537
        %v2571 = vpop.f32.mrf.mxu0
        %v2572 = vadd.f32 %v2524, %v2571
        %2573 = vdwg.mxu0
        %v2574 = vadd.f32 %v2435, %v2563
        %v2575 = vadd.f32 %v2436, %v2566
        %v2576 = vadd.f32 %v2437, %v2569
        %v2577 = vadd.f32 %v2438, %v2572
        %v2578 = vld [vmem:[#allocation14] sm:$0x1]
        %v2579 = vld [vmem:[#allocation16] sm:$0x1]
        %v2580 = vsel %vm1492, %v2574, 0.0
        %2581 = vadd.xlane.f32.xlu0 %v2580
        %v2582 = vpop.xlane.xlu0 %2581
        %v2583 = vsel %vm1492, %v2575, 0.0
        %2584 = vadd.xlane.f32.xlu0 %v2583
        %v2585 = vpop.xlane.xlu0 %2584
        %v2586 = vsel %vm1492, %v2576, 0.0
        %2587 = vadd.xlane.f32.xlu0 %v2586
        %v2588 = vpop.xlane.xlu0 %2587
        %v2589 = vsel %vm1492, %v2577, 0.0
        %2590 = vadd.xlane.f32.xlu0 %v2589
        %v2591 = vpop.xlane.xlu0 %2590
        %v2592 = vmul.f32 %v2582, %v2348
        %v2593 = vmul.f32 %v2585, %v2348
        %v2594 = vmul.f32 %v2588, %v2348
        %v2595 = vmul.f32 %v2591, %v2348
        %v2596 = vsub.f32 %v2574, %v2592
        %v2597 = vsub.f32 %v2575, %v2593
        %v2598 = vsub.f32 %v2576, %v2594
        %v2599 = vsub.f32 %v2577, %v2595
        %v2600 = vmul.f32 %v2596, %v2596
        %v2601 = vmul.f32 %v2597, %v2597
        %v2602 = vmul.f32 %v2598, %v2598
        %v2603 = vmul.f32 %v2599, %v2599
        %v2604 = vsel %vm1492, %v2600, 0.0
        %2605 = vadd.xlane.f32.xlu0 %v2604
        %v2606 = vpop.xlane.xlu0 %2605
        %v2607 = vsel %vm1492, %v2601, 0.0
        %2608 = vadd.xlane.f32.xlu0 %v2607
        %v2609 = vpop.xlane.xlu0 %2608
        %v2610 = vsel %vm1492, %v2602, 0.0
        %2611 = vadd.xlane.f32.xlu0 %v2610
        %v2612 = vpop.xlane.xlu0 %2611
        %v2613 = vsel %vm1492, %v2603, 0.0
        %2614 = vadd.xlane.f32.xlu0 %v2613
        %v2615 = vpop.xlane.xlu0 %2614
        %v2616 = vmul.f32 %v2606, %v2348
        %v2617 = vmul.f32 %v2609, %v2348
        %v2618 = vmul.f32 %v2612, %v2348
        %v2619 = vmul.f32 %v2615, %v2348
        %v2620 = vadd.f32 %v2616, 1e-05
        %v2621 = vadd.f32 %v2617, 1e-05
        %v2622 = vadd.f32 %v2618, 1e-05
        %v2623 = vadd.f32 %v2619, 1e-05
        %v2624 = vrsqrt.pop %v2620
        %v2625 = vmul.f32 %v2624, %v2620
        %v2626 = vmul.f32 %v2625, %v2624
        %v2627 = vmul.f32 0.5, %v2626
        %v2628 = vsub.f32 1.5, %v2627
        %v2629 = vmul.f32 %v2624, %v2628
        %vm2630 = vweird.f32 %v2620
        %vm2631 = vweird.f32 %v2624
        %vm2632 = vmor %vm2630, %vm2631
        %v2633 = vsel %vm2632, %v2624, %v2629
        %v2634 = vrsqrt.pop %v2621
        %v2635 = vmul.f32 %v2634, %v2621
        %v2636 = vmul.f32 %v2635, %v2634
        %v2637 = vmul.f32 0.5, %v2636
        %v2638 = vsub.f32 1.5, %v2637
        %v2639 = vmul.f32 %v2634, %v2638
        %vm2640 = vweird.f32 %v2621
        %vm2641 = vweird.f32 %v2634
        %vm2642 = vmor %vm2640, %vm2641
        %v2643 = vsel %vm2642, %v2634, %v2639
        %v2644 = vrsqrt.pop %v2622
        %v2645 = vmul.f32 %v2644, %v2622
        %v2646 = vmul.f32 %v2645, %v2644
        %v2647 = vmul.f32 0.5, %v2646
        %v2648 = vsub.f32 1.5, %v2647
        %v2649 = vmul.f32 %v2644, %v2648
        %vm2650 = vweird.f32 %v2622
        %vm2651 = vweird.f32 %v2644
        %vm2652 = vmor %vm2650, %vm2651
        %v2653 = vsel %vm2652, %v2644, %v2649
        %v2654 = vrsqrt.pop %v2623
        %v2655 = vmul.f32 %v2654, %v2623
        %v2656 = vmul.f32 %v2655, %v2654
        %v2657 = vmul.f32 0.5, %v2656
        %v2658 = vsub.f32 1.5, %v2657
        %v2659 = vmul.f32 %v2654, %v2658
        %vm2660 = vweird.f32 %v2623
        %vm2661 = vweird.f32 %v2654
        %vm2662 = vmor %vm2660, %vm2661
        %v2663 = vsel %vm2662, %v2654, %v2659
        %v2664 = vmul.f32 %v2596, %v2633
        %v2665 = vmul.f32 %v2597, %v2643
        %v2666 = vmul.f32 %v2598, %v2653
        %v2667 = vmul.f32 %v2599, %v2663
        %v2669 = vperm.slane %v2578, 0
        %v2671 = vmul.f32 %v2664, %v2669
        %v2672 = vmul.f32 %v2665, %v2669
        %v2673 = vmul.f32 %v2666, %v2669
        %v2674 = vmul.f32 %v2667, %v2669
        %v2676 = vperm.slane %v2579, 0
        %v2678 = vadd.f32 %v2671, %v2676
        %v2679 = vadd.f32 %v2672, %v2676
        %v2680 = vadd.f32 %v2673, %v2676
        %v2681 = vadd.f32 %v2674, %v2676
        %v2682 = vld [vmem:[%s35] sm:$0xff]
        %v2683 = vld [vmem:[%s35 + $0x8] sm:$0xff]
        %v2684 = vld [vmem:[#allocation17] sm:$0x1]
        %v2686 = vperm.slane %v2684, 0
        %v2689 = vsel %vm1492, %v2678, 0
        %v2692 = vsel %vm1492, %v2679, 0
        %v2695 = vsel %vm1492, %v2680, 0
        %v2698 = vsel %vm1492, %v2681, 0
        %v2701 = vsel %vm1492, %v2682, 0
        %v2704 = vsel %vm1492, %v2683, 0
        %2706 = vmatpush.xpose.msra.mxu0 0.0
        %2707 = vmatpush.xpose.msra.mxu0 0.0
        %2708 = vmatpush.xpose.msra.mxu0 0.0
        %2709 = vmatpush.xpose.msra.mxu0 0.0
        %2710 = vmatpush.xpose.msra.mxu0 0.0
        %2711 = vmatpush.xpose.msra.mxu0 0.0
        %2712 = vmatpush.xpose.msra.mxu0 0.0
        %2713 = vmatpush.xpose.msra.mxu0 0.0
        %2714 = vmatpush.xpose.msra.mxu0 0.0
        %2715 = vmatpush.xpose.msra.mxu0 0.0
        %2716 = vmatpush.xpose.msra.mxu0 0.0
        %2717 = vmatpush.xpose.msra.mxu0 0.0
        %2718 = vmatpush.xpose.msra.mxu0 0.0
        %2719 = vmatpush.xpose.msra.mxu0 0.0
        %2720 = vmatpush.xpose.msra.mxu0 %v2704
        %2721 = vmatpush.xpose.msra.mxu0 %v2701
        %2722 = vmatmul.f32.gmra.mxu0 %v2689
        %v2723 = vpop.f32.mrf.mxu0
        %v2724 = vadd.f32 %v2686, %v2723
        %2725 = vmatmul.f32.gmra.mxu0 %v2692
        %v2726 = vpop.f32.mrf.mxu0
        %v2727 = vadd.f32 %v2686, %v2726
        %2728 = vmatmul.f32.gmra.mxu0 %v2695
        %v2729 = vpop.f32.mrf.mxu0
        %v2730 = vadd.f32 %v2686, %v2729
        %2731 = vmatmul.f32.gmra.mxu0 %v2698
        %v2732 = vpop.f32.mrf.mxu0
        %v2733 = vadd.f32 %v2686, %v2732
        %2734 = vdwg.mxu0
        %v2735 = vmax.f32 %v2724, 0.0
        %v2736 = vmax.f32 %v2727, 0.0
        %v2737 = vmax.f32 %v2730, 0.0
        %v2738 = vmax.f32 %v2733, 0.0
        %v2739 = vld [vmem:[%s39] sm:$0xff]
        %v2740 = vld [vmem:[%s39 + $0x8] sm:$0xff]
        %v2741 = vld [vmem:[#allocation19] sm:$0x1]
        %v2743 = vperm.slane %v2741, 0
        %v2746 = vsel %vm1492, %v2735, 0
        %v2749 = vsel %vm1492, %v2736, 0
        %v2752 = vsel %vm1492, %v2737, 0
        %v2755 = vsel %vm1492, %v2738, 0
        %v2758 = vsel %vm1492, %v2739, 0
        %v2761 = vsel %vm1492, %v2740, 0
        %2763 = vmatpush.xpose.msra.mxu0 0.0
        %2764 = vmatpush.xpose.msra.mxu0 0.0
        %2765 = vmatpush.xpose.msra.mxu0 0.0
        %2766 = vmatpush.xpose.msra.mxu0 0.0
        %2767 = vmatpush.xpose.msra.mxu0 0.0
        %2768 = vmatpush.xpose.msra.mxu0 0.0
        %2769 = vmatpush.xpose.msra.mxu0 0.0
        %2770 = vmatpush.xpose.msra.mxu0 0.0
        %2771 = vmatpush.xpose.msra.mxu0 0.0
        %2772 = vmatpush.xpose.msra.mxu0 0.0
        %2773 = vmatpush.xpose.msra.mxu0 0.0
        %2774 = vmatpush.xpose.msra.mxu0 0.0
        %2775 = vmatpush.xpose.msra.mxu0 0.0
        %2776 = vmatpush.xpose.msra.mxu0 0.0
        %2777 = vmatpush.xpose.msra.mxu0 %v2761
        %2778 = vmatpush.xpose.msra.mxu0 %v2758
        %2779 = vmatmul.f32.gmra.mxu0 %v2746
        %v2780 = vpop.f32.mrf.mxu0
        %v2781 = vadd.f32 %v2743, %v2780
        %2782 = vmatmul.f32.gmra.mxu0 %v2749
        %v2783 = vpop.f32.mrf.mxu0
        %v2784 = vadd.f32 %v2743, %v2783
        %2785 = vmatmul.f32.gmra.mxu0 %v2752
        %v2786 = vpop.f32.mrf.mxu0
        %v2787 = vadd.f32 %v2743, %v2786
        %2788 = vmatmul.f32.gmra.mxu0 %v2755
        %v2789 = vpop.f32.mrf.mxu0
        %v2790 = vadd.f32 %v2743, %v2789
        %2791 = vdwg.mxu0
        %v2792 = vld [vmem:[%s43] sm:$0xff]
        %v2793 = vld [vmem:[#allocation20] sm:$0x1]
        %v2795 = vperm.slane %v2793, 0
        %v2798 = vsel %vm1492, %v2781, 0
        %v2801 = vsel %vm1492, %v2784, 0
        %v2804 = vsel %vm1492, %v2787, 0
        %v2807 = vsel %vm1492, %v2790, 0
        %v2810 = vsel %vm1492, %v2792, 0
        %2812 = vmatpush.xpose.msra.mxu0 0.0
        %2813 = vmatpush.xpose.msra.mxu0 0.0
        %2814 = vmatpush.xpose.msra.mxu0 0.0
        %2815 = vmatpush.xpose.msra.mxu0 0.0
        %2816 = vmatpush.xpose.msra.mxu0 0.0
        %2817 = vmatpush.xpose.msra.mxu0 0.0
        %2818 = vmatpush.xpose.msra.mxu0 0.0
        %2819 = vmatpush.xpose.msra.mxu0 0.0
        %2820 = vmatpush.xpose.msra.mxu0 0.0
        %2821 = vmatpush.xpose.msra.mxu0 0.0
        %2822 = vmatpush.xpose.msra.mxu0 0.0
        %2823 = vmatpush.xpose.msra.mxu0 0.0
        %2824 = vmatpush.xpose.msra.mxu0 0.0
        %2825 = vmatpush.xpose.msra.mxu0 0.0
        %2826 = vmatpush.xpose.msra.mxu0 0.0
        %2827 = vmatpush.xpose.msra.mxu0 %v2810
        %2828 = vmatmul.f32.gmra.mxu0 %v2798
        %v2829 = vpop.f32.mrf.mxu0
        %v2830 = vadd.f32 %v2795, %v2829
        %2831 = vmatmul.f32.gmra.mxu0 %v2801
        %v2832 = vpop.f32.mrf.mxu0
        %v2833 = vadd.f32 %v2795, %v2832
        %2834 = vmatmul.f32.gmra.mxu0 %v2804
        %v2835 = vpop.f32.mrf.mxu0
        %v2836 = vadd.f32 %v2795, %v2835
        %2837 = vmatmul.f32.gmra.mxu0 %v2807
        %v2838 = vpop.f32.mrf.mxu0
        %v2839 = vadd.f32 %v2795, %v2838
        %2840 = vdwg.mxu0
        %v2841 = vmul.f32 %v2830, 0.35355338
        %v2842 = vmul.f32 %v2833, 0.35355338
        %v2843 = vmul.f32 %v2836, 0.35355338
        %v2844 = vmul.f32 %v2839, 0.35355338
        %v2845 = vld [vmem:[%s47] sm:$0xff]
        %v2846 = vld [vmem:[#allocation22] sm:$0x1]
        %v2848 = vperm.slane %v2846, 0
        %v2851 = vsel %vm1492, %v2845, 0
        %2853 = vmatpush.xpose.msra.mxu0 0.0
        %2854 = vmatpush.xpose.msra.mxu0 0.0
        %2855 = vmatpush.xpose.msra.mxu0 0.0
        %2856 = vmatpush.xpose.msra.mxu0 0.0
        %2857 = vmatpush.xpose.msra.mxu0 0.0
        %2858 = vmatpush.xpose.msra.mxu0 0.0
        %2859 = vmatpush.xpose.msra.mxu0 0.0
        %2860 = vmatpush.xpose.msra.mxu0 0.0
        %2861 = vmatpush.xpose.msra.mxu0 0.0
        %2862 = vmatpush.xpose.msra.mxu0 0.0
        %2863 = vmatpush.xpose.msra.mxu0 0.0
        %2864 = vmatpush.xpose.msra.mxu0 0.0
        %2865 = vmatpush.xpose.msra.mxu0 0.0
        %2866 = vmatpush.xpose.msra.mxu0 0.0
        %2867 = vmatpush.xpose.msra.mxu0 0.0
        %2868 = vmatpush.xpose.msra.mxu0 %v2851
        %2869 = vmatmul.f32.gmra.mxu0 %v2798
        %v2870 = vpop.f32.mrf.mxu0
        %v2871 = vadd.f32 %v2848, %v2870
        %2872 = vmatmul.f32.gmra.mxu0 %v2801
        %v2873 = vpop.f32.mrf.mxu0
        %v2874 = vadd.f32 %v2848, %v2873
        %2875 = vmatmul.f32.gmra.mxu0 %v2804
        %v2876 = vpop.f32.mrf.mxu0
        %v2877 = vadd.f32 %v2848, %v2876
        %2878 = vmatmul.f32.gmra.mxu0 %v2807
        %v2879 = vpop.f32.mrf.mxu0
        %v2880 = vadd.f32 %v2848, %v2879
        %2881 = vdwg.mxu0
        %v2882 = vld [vmem:[%s51] sm:$0xff]
        %v2883 = vld [vmem:[#allocation23] sm:$0x1]
        %v2885 = vperm.slane %v2883, 0
        %v2888 = vsel %vm1492, %v2882, 0
        %2890 = vmatpush.xpose.msra.mxu0 0.0
        %2891 = vmatpush.xpose.msra.mxu0 0.0
        %2892 = vmatpush.xpose.msra.mxu0 0.0
        %2893 = vmatpush.xpose.msra.mxu0 0.0
        %2894 = vmatpush.xpose.msra.mxu0 0.0
        %2895 = vmatpush.xpose.msra.mxu0 0.0
        %2896 = vmatpush.xpose.msra.mxu0 0.0
        %2897 = vmatpush.xpose.msra.mxu0 0.0
        %2898 = vmatpush.xpose.msra.mxu0 0.0
        %2899 = vmatpush.xpose.msra.mxu0 0.0
        %2900 = vmatpush.xpose.msra.mxu0 0.0
        %2901 = vmatpush.xpose.msra.mxu0 0.0
        %2902 = vmatpush.xpose.msra.mxu0 0.0
        %2903 = vmatpush.xpose.msra.mxu0 0.0
        %2904 = vmatpush.xpose.msra.mxu0 0.0
        %2905 = vmatpush.xpose.msra.mxu0 %v2888
        %2906 = vmatmul.f32.gmra.mxu0 %v2798
        %v2907 = vpop.f32.mrf.mxu0
        %v2908 = vadd.f32 %v2885, %v2907
        %2909 = vmatmul.f32.gmra.mxu0 %v2801
        %v2910 = vpop.f32.mrf.mxu0
        %v2911 = vadd.f32 %v2885, %v2910
        %2912 = vmatmul.f32.gmra.mxu0 %v2804
        %v2913 = vpop.f32.mrf.mxu0
        %v2914 = vadd.f32 %v2885, %v2913
        %2915 = vmatmul.f32.gmra.mxu0 %v2807
        %v2916 = vpop.f32.mrf.mxu0
        %v2917 = vadd.f32 %v2885, %v2916
        %2918 = vdwg.mxu0
        %v2920 = vsel %vm1615, %v2841, 0
        %v2923 = vsel %vm1615, %v2871, 0
        %2925 = vmatpush.xpose.msra.mxu0 0.0
        %2926 = vmatpush.xpose.msra.mxu0 0.0
        %2927 = vmatpush.xpose.msra.mxu0 0.0
        %2928 = vmatpush.xpose.msra.mxu0 0.0
        %2929 = vmatpush.xpose.msra.mxu0 0.0
        %2930 = vmatpush.xpose.msra.mxu0 0.0
        %2931 = vmatpush.xpose.msra.mxu0 0.0
        %2932 = vmatpush.xpose.msra.mxu0 0.0
        %2933 = vmatpush.xpose.msra.mxu0 0.0
        %2934 = vmatpush.xpose.msra.mxu0 0.0
        %2935 = vmatpush.xpose.msra.mxu0 0.0
        %2936 = vmatpush.xpose.msra.mxu0 0.0
        %2937 = vmatpush.xpose.msra.mxu0 0.0
        %2938 = vmatpush.xpose.msra.mxu0 0.0
        %2939 = vmatpush.xpose.msra.mxu0 0.0
        %2940 = vmatpush.xpose.msra.mxu0 %v2923
        %2941 = vmatmul.f32.gmra.mxu0 %v2920
        %v2942 = vpop.f32.mrf.mxu0
        %v2943 = vadd.f32 0.0, %v2942
        %2944 = vdwg.mxu0
        %v2946 = vsel %vm1615, %v2842, 0
        %v2949 = vsel %vm1615, %v2874, 0
        %2951 = vmatpush.xpose.msra.mxu0 0.0
        %2952 = vmatpush.xpose.msra.mxu0 0.0
        %2953 = vmatpush.xpose.msra.mxu0 0.0
        %2954 = vmatpush.xpose.msra.mxu0 0.0
        %2955 = vmatpush.xpose.msra.mxu0 0.0
        %2956 = vmatpush.xpose.msra.mxu0 0.0
        %2957 = vmatpush.xpose.msra.mxu0 0.0
        %2958 = vmatpush.xpose.msra.mxu0 0.0
        %2959 = vmatpush.xpose.msra.mxu0 0.0
        %2960 = vmatpush.xpose.msra.mxu0 0.0
        %2961 = vmatpush.xpose.msra.mxu0 0.0
        %2962 = vmatpush.xpose.msra.mxu0 0.0
        %2963 = vmatpush.xpose.msra.mxu0 0.0
        %2964 = vmatpush.xpose.msra.mxu0 0.0
        %2965 = vmatpush.xpose.msra.mxu0 0.0
        %2966 = vmatpush.xpose.msra.mxu0 %v2949
        %2967 = vmatmul.f32.gmra.mxu0 %v2946
        %v2968 = vpop.f32.mrf.mxu0
        %v2969 = vadd.f32 0.0, %v2968
        %2970 = vdwg.mxu0
        %v2972 = vsel %vm1615, %v2843, 0
        %v2975 = vsel %vm1615, %v2877, 0
        %2977 = vmatpush.xpose.msra.mxu0 0.0
        %2978 = vmatpush.xpose.msra.mxu0 0.0
        %2979 = vmatpush.xpose.msra.mxu0 0.0
        %2980 = vmatpush.xpose.msra.mxu0 0.0
        %2981 = vmatpush.xpose.msra.mxu0 0.0
        %2982 = vmatpush.xpose.msra.mxu0 0.0
        %2983 = vmatpush.xpose.msra.mxu0 0.0
        %2984 = vmatpush.xpose.msra.mxu0 0.0
        %2985 = vmatpush.xpose.msra.mxu0 0.0
        %2986 = vmatpush.xpose.msra.mxu0 0.0
        %2987 = vmatpush.xpose.msra.mxu0 0.0
        %2988 = vmatpush.xpose.msra.mxu0 0.0
        %2989 = vmatpush.xpose.msra.mxu0 0.0
        %2990 = vmatpush.xpose.msra.mxu0 0.0
        %2991 = vmatpush.xpose.msra.mxu0 0.0
        %2992 = vmatpush.xpose.msra.mxu0 %v2975
        %2993 = vmatmul.f32.gmra.mxu0 %v2972
        %v2994 = vpop.f32.mrf.mxu0
        %v2995 = vadd.f32 0.0, %v2994
        %2996 = vdwg.mxu0
        %v2998 = vsel %vm1615, %v2844, 0
        %v3001 = vsel %vm1615, %v2880, 0
        %3003 = vmatpush.xpose.msra.mxu0 0.0
        %3004 = vmatpush.xpose.msra.mxu0 0.0
        %3005 = vmatpush.xpose.msra.mxu0 0.0
        %3006 = vmatpush.xpose.msra.mxu0 0.0
        %3007 = vmatpush.xpose.msra.mxu0 0.0
        %3008 = vmatpush.xpose.msra.mxu0 0.0
        %3009 = vmatpush.xpose.msra.mxu0 0.0
        %3010 = vmatpush.xpose.msra.mxu0 0.0
        %3011 = vmatpush.xpose.msra.mxu0 0.0
        %3012 = vmatpush.xpose.msra.mxu0 0.0
        %3013 = vmatpush.xpose.msra.mxu0 0.0
        %3014 = vmatpush.xpose.msra.mxu0 0.0
        %3015 = vmatpush.xpose.msra.mxu0 0.0
        %3016 = vmatpush.xpose.msra.mxu0 0.0
        %3017 = vmatpush.xpose.msra.mxu0 0.0
        %3018 = vmatpush.xpose.msra.mxu0 %v3001
        %3019 = vmatmul.f32.gmra.mxu0 %v2998
        %v3020 = vpop.f32.mrf.mxu0
        %v3021 = vadd.f32 0.0, %v3020
        %3022 = vdwg.mxu0
        %v3023 = vsel %vm1615, %v2943, -inf
        %3024 = vmax.xlane.f32.xlu0 %v3023
        %v3025 = vpop.xlane.xlu0 %3024
        %v3026 = vsel %vm1615, %v2969, -inf
        %3027 = vmax.xlane.f32.xlu0 %v3026
        %v3028 = vpop.xlane.xlu0 %3027
        %v3029 = vsel %vm1615, %v2995, -inf
        %3030 = vmax.xlane.f32.xlu0 %v3029
        %v3031 = vpop.xlane.xlu0 %3030
        %v3032 = vsel %vm1615, %v3021, -inf
        %3033 = vmax.xlane.f32.xlu0 %v3032
        %v3034 = vpop.xlane.xlu0 %3033
        %v3035 = vsub.f32 %v2943, %v3025
        %v3036 = vsub.f32 %v2969, %v3028
        %v3037 = vsub.f32 %v2995, %v3031
        %v3038 = vsub.f32 %v3021, %v3034
        %v3039 = vmul.f32 %v3035, 1.442695
        %v3040 = vpow.pop %v3039
        %v3041 = vmul.f32 %v3036, 1.442695
        %v3042 = vpow.pop %v3041
        %v3043 = vmul.f32 %v3037, 1.442695
        %v3044 = vpow.pop %v3043
        %v3045 = vmul.f32 %v3038, 1.442695
        %v3046 = vpow.pop %v3045
        %v3047 = vsel %vm1615, %v3040, 0.0
        %3048 = vadd.xlane.f32.xlu0 %v3047
        %v3049 = vpop.xlane.xlu0 %3048
        %v3050 = vsel %vm1615, %v3042, 0.0
        %3051 = vadd.xlane.f32.xlu0 %v3050
        %v3052 = vpop.xlane.xlu0 %3051
        %v3053 = vsel %vm1615, %v3044, 0.0
        %3054 = vadd.xlane.f32.xlu0 %v3053
        %v3055 = vpop.xlane.xlu0 %3054
        %v3056 = vsel %vm1615, %v3046, 0.0
        %3057 = vadd.xlane.f32.xlu0 %v3056
        %v3058 = vpop.xlane.xlu0 %3057
        %v3059 = vrcp.pop %v3049
        %v3060 = vrcp.pop %v3052
        %v3061 = vrcp.pop %v3055
        %v3062 = vrcp.pop %v3058
        %v3063 = vmul.f32 %v3040, %v3059
        %v3064 = vmul.f32 %v3042, %v3060
        %v3065 = vmul.f32 %v3044, %v3061
        %v3066 = vmul.f32 %v3046, %v3062
        %v3068 = vsel %vm1615, %v3063, 0
        %3070 = vmatpush.msra.mxu0 0.0
        %3071 = vmatpush.msra.mxu0 0.0
        %3072 = vmatpush.msra.mxu0 0.0
        %3073 = vmatpush.msra.mxu0 0.0
        %3074 = vmatpush.msra.mxu0 0.0
        %3075 = vmatpush.msra.mxu0 0.0
        %3076 = vmatpush.msra.mxu0 0.0
        %3077 = vmatpush.msra.mxu0 0.0
        %3078 = vmatpush.msra.mxu0 0.0
        %3079 = vmatpush.msra.mxu0 0.0
        %3080 = vmatpush.msra.mxu0 0.0
        %3081 = vmatpush.msra.mxu0 0.0
        %3082 = vmatpush.msra.mxu0 0.0
        %3083 = vmatpush.msra.mxu0 0.0
        %3084 = vmatpush.msra.mxu0 0.0
        %3085 = vmatpush.msra.mxu0 %v2908
        %3086 = vmatmul.f32.gmra.mxu0 %v3068
        %v3087 = vpop.f32.mrf.mxu0
        %v3088 = vadd.f32 0.0, %v3087
        %3089 = vdwg.mxu0
        %v3091 = vsel %vm1615, %v3064, 0
        %3093 = vmatpush.msra.mxu0 0.0
        %3094 = vmatpush.msra.mxu0 0.0
        %3095 = vmatpush.msra.mxu0 0.0
        %3096 = vmatpush.msra.mxu0 0.0
        %3097 = vmatpush.msra.mxu0 0.0
        %3098 = vmatpush.msra.mxu0 0.0
        %3099 = vmatpush.msra.mxu0 0.0
        %3100 = vmatpush.msra.mxu0 0.0
        %3101 = vmatpush.msra.mxu0 0.0
        %3102 = vmatpush.msra.mxu0 0.0
        %3103 = vmatpush.msra.mxu0 0.0
        %3104 = vmatpush.msra.mxu0 0.0
        %3105 = vmatpush.msra.mxu0 0.0
        %3106 = vmatpush.msra.mxu0 0.0
        %3107 = vmatpush.msra.mxu0 0.0
        %3108 = vmatpush.msra.mxu0 %v2911
        %3109 = vmatmul.f32.gmra.mxu0 %v3091
        %v3110 = vpop.f32.mrf.mxu0
        %v3111 = vadd.f32 0.0, %v3110
        %3112 = vdwg.mxu0
        %v3114 = vsel %vm1615, %v3065, 0
        %3116 = vmatpush.msra.mxu0 0.0
        %3117 = vmatpush.msra.mxu0 0.0
        %3118 = vmatpush.msra.mxu0 0.0
        %3119 = vmatpush.msra.mxu0 0.0
        %3120 = vmatpush.msra.mxu0 0.0
        %3121 = vmatpush.msra.mxu0 0.0
        %3122 = vmatpush.msra.mxu0 0.0
        %3123 = vmatpush.msra.mxu0 0.0
        %3124 = vmatpush.msra.mxu0 0.0
        %3125 = vmatpush.msra.mxu0 0.0
        %3126 = vmatpush.msra.mxu0 0.0
        %3127 = vmatpush.msra.mxu0 0.0
        %3128 = vmatpush.msra.mxu0 0.0
        %3129 = vmatpush.msra.mxu0 0.0
        %3130 = vmatpush.msra.mxu0 0.0
        %3131 = vmatpush.msra.mxu0 %v2914
        %3132 = vmatmul.f32.gmra.mxu0 %v3114
        %v3133 = vpop.f32.mrf.mxu0
        %v3134 = vadd.f32 0.0, %v3133
        %3135 = vdwg.mxu0
        %v3137 = vsel %vm1615, %v3066, 0
        %3139 = vmatpush.msra.mxu0 0.0
        %3140 = vmatpush.msra.mxu0 0.0
        %3141 = vmatpush.msra.mxu0 0.0
        %3142 = vmatpush.msra.mxu0 0.0
        %3143 = vmatpush.msra.mxu0 0.0
        %3144 = vmatpush.msra.mxu0 0.0
        %3145 = vmatpush.msra.mxu0 0.0
        %3146 = vmatpush.msra.mxu0 0.0
        %3147 = vmatpush.msra.mxu0 0.0
        %3148 = vmatpush.msra.mxu0 0.0
        %3149 = vmatpush.msra.mxu0 0.0
        %3150 = vmatpush.msra.mxu0 0.0
        %3151 = vmatpush.msra.mxu0 0.0
        %3152 = vmatpush.msra.mxu0 0.0
        %3153 = vmatpush.msra.mxu0 0.0
        %3154 = vmatpush.msra.mxu0 %v2917
        %3155 = vmatmul.f32.gmra.mxu0 %v3137
        %v3156 = vpop.f32.mrf.mxu0
        %v3157 = vadd.f32 0.0, %v3156
        %3158 = vdwg.mxu0
        %v3159 = vld [vmem:[%s55] sm:$0xff]
        %v3160 = vld [vmem:[%s55 + $0x8] sm:$0xff]
        %s3161 = scalar_lea.vmem %s43, 8
        %v3162 = vld [vmem:[%s3161] sm:$0xff]
        %s3163 = scalar_lea.vmem [#allocation20], 1
        %v3164 = vld [vmem:[%s3163] sm:$0x1]
        %v3166 = vperm.slane %v3164, 0
        %v3169 = vsel %vm1492, %v3162, 0
        %3171 = vmatpush.xpose.msra.mxu0 0.0
        %3172 = vmatpush.xpose.msra.mxu0 0.0
        %3173 = vmatpush.xpose.msra.mxu0 0.0
        %3174 = vmatpush.xpose.msra.mxu0 0.0
        %3175 = vmatpush.xpose.msra.mxu0 0.0
        %3176 = vmatpush.xpose.msra.mxu0 0.0
        %3177 = vmatpush.xpose.msra.mxu0 0.0
        %3178 = vmatpush.xpose.msra.mxu0 0.0
        %3179 = vmatpush.xpose.msra.mxu0 0.0
        %3180 = vmatpush.xpose.msra.mxu0 0.0
        %3181 = vmatpush.xpose.msra.mxu0 0.0
        %3182 = vmatpush.xpose.msra.mxu0 0.0
        %3183 = vmatpush.xpose.msra.mxu0 0.0
        %3184 = vmatpush.xpose.msra.mxu0 0.0
        %3185 = vmatpush.xpose.msra.mxu0 0.0
        %3186 = vmatpush.xpose.msra.mxu0 %v3169
        %3187 = vmatmul.f32.gmra.mxu0 %v2798
        %v3188 = vpop.f32.mrf.mxu0
        %v3189 = vadd.f32 %v3166, %v3188
        %3190 = vmatmul.f32.gmra.mxu0 %v2801
        %v3191 = vpop.f32.mrf.mxu0
        %v3192 = vadd.f32 %v3166, %v3191
        %3193 = vmatmul.f32.gmra.mxu0 %v2804
        %v3194 = vpop.f32.mrf.mxu0
        %v3195 = vadd.f32 %v3166, %v3194
        %3196 = vmatmul.f32.gmra.mxu0 %v2807
        %v3197 = vpop.f32.mrf.mxu0
        %v3198 = vadd.f32 %v3166, %v3197
        %3199 = vdwg.mxu0
        %v3200 = vmul.f32 %v3189, 0.35355338
        %v3201 = vmul.f32 %v3192, 0.35355338
        %v3202 = vmul.f32 %v3195, 0.35355338
        %v3203 = vmul.f32 %v3198, 0.35355338
        %s3204 = scalar_lea.vmem %s47, 8
        %v3205 = vld [vmem:[%s3204] sm:$0xff]
        %s3206 = scalar_lea.vmem [#allocation22], 1
        %v3207 = vld [vmem:[%s3206] sm:$0x1]
        %v3209 = vperm.slane %v3207, 0
        %v3212 = vsel %vm1492, %v3205, 0
        %3214 = vmatpush.xpose.msra.mxu0 0.0
        %3215 = vmatpush.xpose.msra.mxu0 0.0
        %3216 = vmatpush.xpose.msra.mxu0 0.0
        %3217 = vmatpush.xpose.msra.mxu0 0.0
        %3218 = vmatpush.xpose.msra.mxu0 0.0
        %3219 = vmatpush.xpose.msra.mxu0 0.0
        %3220 = vmatpush.xpose.msra.mxu0 0.0
        %3221 = vmatpush.xpose.msra.mxu0 0.0
        %3222 = vmatpush.xpose.msra.mxu0 0.0
        %3223 = vmatpush.xpose.msra.mxu0 0.0
        %3224 = vmatpush.xpose.msra.mxu0 0.0
        %3225 = vmatpush.xpose.msra.mxu0 0.0
        %3226 = vmatpush.xpose.msra.mxu0 0.0
        %3227 = vmatpush.xpose.msra.mxu0 0.0
        %3228 = vmatpush.xpose.msra.mxu0 0.0
        %3229 = vmatpush.xpose.msra.mxu0 %v3212
        %3230 = vmatmul.f32.gmra.mxu0 %v2798
        %v3231 = vpop.f32.mrf.mxu0
        %v3232 = vadd.f32 %v3209, %v3231
        %3233 = vmatmul.f32.gmra.mxu0 %v2801
        %v3234 = vpop.f32.mrf.mxu0
        %v3235 = vadd.f32 %v3209, %v3234
        %3236 = vmatmul.f32.gmra.mxu0 %v2804
        %v3237 = vpop.f32.mrf.mxu0
        %v3238 = vadd.f32 %v3209, %v3237
        %3239 = vmatmul.f32.gmra.mxu0 %v2807
        %v3240 = vpop.f32.mrf.mxu0
        %v3241 = vadd.f32 %v3209, %v3240
        %3242 = vdwg.mxu0
        %s3243 = scalar_lea.vmem %s51, 8
        %v3244 = vld [vmem:[%s3243] sm:$0xff]
        %s3245 = scalar_lea.vmem [#allocation23], 1
        %v3246 = vld [vmem:[%s3245] sm:$0x1]
        %v3248 = vperm.slane %v3246, 0
        %v3251 = vsel %vm1492, %v3244, 0
        %3253 = vmatpush.xpose.msra.mxu0 0.0
        %3254 = vmatpush.xpose.msra.mxu0 0.0
        %3255 = vmatpush.xpose.msra.mxu0 0.0
        %3256 = vmatpush.xpose.msra.mxu0 0.0
        %3257 = vmatpush.xpose.msra.mxu0 0.0
        %3258 = vmatpush.xpose.msra.mxu0 0.0
        %3259 = vmatpush.xpose.msra.mxu0 0.0
        %3260 = vmatpush.xpose.msra.mxu0 0.0
        %3261 = vmatpush.xpose.msra.mxu0 0.0
        %3262 = vmatpush.xpose.msra.mxu0 0.0
        %3263 = vmatpush.xpose.msra.mxu0 0.0
        %3264 = vmatpush.xpose.msra.mxu0 0.0
        %3265 = vmatpush.xpose.msra.mxu0 0.0
        %3266 = vmatpush.xpose.msra.mxu0 0.0
        %3267 = vmatpush.xpose.msra.mxu0 0.0
        %3268 = vmatpush.xpose.msra.mxu0 %v3251
        %3269 = vmatmul.f32.gmra.mxu0 %v2798
        %v3270 = vpop.f32.mrf.mxu0
        %v3271 = vadd.f32 %v3248, %v3270
        %3272 = vmatmul.f32.gmra.mxu0 %v2801
        %v3273 = vpop.f32.mrf.mxu0
        %v3274 = vadd.f32 %v3248, %v3273
        %3275 = vmatmul.f32.gmra.mxu0 %v2804
        %v3276 = vpop.f32.mrf.mxu0
        %v3277 = vadd.f32 %v3248, %v3276
        %3278 = vmatmul.f32.gmra.mxu0 %v2807
        %v3279 = vpop.f32.mrf.mxu0
        %v3280 = vadd.f32 %v3248, %v3279
        %3281 = vdwg.mxu0
        %v3283 = vsel %vm1615, %v3200, 0
        %v3286 = vsel %vm1615, %v3232, 0
        %3288 = vmatpush.xpose.msra.mxu0 0.0
        %3289 = vmatpush.xpose.msra.mxu0 0.0
        %3290 = vmatpush.xpose.msra.mxu0 0.0
        %3291 = vmatpush.xpose.msra.mxu0 0.0
        %3292 = vmatpush.xpose.msra.mxu0 0.0
        %3293 = vmatpush.xpose.msra.mxu0 0.0
        %3294 = vmatpush.xpose.msra.mxu0 0.0
        %3295 = vmatpush.xpose.msra.mxu0 0.0
        %3296 = vmatpush.xpose.msra.mxu0 0.0
        %3297 = vmatpush.xpose.msra.mxu0 0.0
        %3298 = vmatpush.xpose.msra.mxu0 0.0
        %3299 = vmatpush.xpose.msra.mxu0 0.0
        %3300 = vmatpush.xpose.msra.mxu0 0.0
        %3301 = vmatpush.xpose.msra.mxu0 0.0
        %3302 = vmatpush.xpose.msra.mxu0 0.0
        %3303 = vmatpush.xpose.msra.mxu0 %v3286
        %3304 = vmatmul.f32.gmra.mxu0 %v3283
        %v3305 = vpop.f32.mrf.mxu0
        %v3306 = vadd.f32 0.0, %v3305
        %3307 = vdwg.mxu0
        %v3309 = vsel %vm1615, %v3201, 0
        %v3312 = vsel %vm1615, %v3235, 0
        %3314 = vmatpush.xpose.msra.mxu0 0.0
        %3315 = vmatpush.xpose.msra.mxu0 0.0
        %3316 = vmatpush.xpose.msra.mxu0 0.0
        %3317 = vmatpush.xpose.msra.mxu0 0.0
        %3318 = vmatpush.xpose.msra.mxu0 0.0
        %3319 = vmatpush.xpose.msra.mxu0 0.0
        %3320 = vmatpush.xpose.msra.mxu0 0.0
        %3321 = vmatpush.xpose.msra.mxu0 0.0
        %3322 = vmatpush.xpose.msra.mxu0 0.0
        %3323 = vmatpush.xpose.msra.mxu0 0.0
        %3324 = vmatpush.xpose.msra.mxu0 0.0
        %3325 = vmatpush.xpose.msra.mxu0 0.0
        %3326 = vmatpush.xpose.msra.mxu0 0.0
        %3327 = vmatpush.xpose.msra.mxu0 0.0
        %3328 = vmatpush.xpose.msra.mxu0 0.0
        %3329 = vmatpush.xpose.msra.mxu0 %v3312
        %3330 = vmatmul.f32.gmra.mxu0 %v3309
        %v3331 = vpop.f32.mrf.mxu0
        %v3332 = vadd.f32 0.0, %v3331
        %3333 = vdwg.mxu0
        %v3335 = vsel %vm1615, %v3202, 0
        %v3338 = vsel %vm1615, %v3238, 0
        %3340 = vmatpush.xpose.msra.mxu0 0.0
        %3341 = vmatpush.xpose.msra.mxu0 0.0
        %3342 = vmatpush.xpose.msra.mxu0 0.0
        %3343 = vmatpush.xpose.msra.mxu0 0.0
        %3344 = vmatpush.xpose.msra.mxu0 0.0
        %3345 = vmatpush.xpose.msra.mxu0 0.0
        %3346 = vmatpush.xpose.msra.mxu0 0.0
        %3347 = vmatpush.xpose.msra.mxu0 0.0
        %3348 = vmatpush.xpose.msra.mxu0 0.0
        %3349 = vmatpush.xpose.msra.mxu0 0.0
        %3350 = vmatpush.xpose.msra.mxu0 0.0
        %3351 = vmatpush.xpose.msra.mxu0 0.0
        %3352 = vmatpush.xpose.msra.mxu0 0.0
        %3353 = vmatpush.xpose.msra.mxu0 0.0
        %3354 = vmatpush.xpose.msra.mxu0 0.0
        %3355 = vmatpush.xpose.msra.mxu0 %v3338
        %3356 = vmatmul.f32.gmra.mxu0 %v3335
        %v3357 = vpop.f32.mrf.mxu0
        %v3358 = vadd.f32 0.0, %v3357
        %3359 = vdwg.mxu0
        %v3361 = vsel %vm1615, %v3203, 0
        %v3364 = vsel %vm1615, %v3241, 0
        %3366 = vmatpush.xpose.msra.mxu0 0.0
        %3367 = vmatpush.xpose.msra.mxu0 0.0
        %3368 = vmatpush.xpose.msra.mxu0 0.0
        %3369 = vmatpush.xpose.msra.mxu0 0.0
        %3370 = vmatpush.xpose.msra.mxu0 0.0
        %3371 = vmatpush.xpose.msra.mxu0 0.0
        %3372 = vmatpush.xpose.msra.mxu0 0.0
        %3373 = vmatpush.xpose.msra.mxu0 0.0
        %3374 = vmatpush.xpose.msra.mxu0 0.0
        %3375 = vmatpush.xpose.msra.mxu0 0.0
        %3376 = vmatpush.xpose.msra.mxu0 0.0
        %3377 = vmatpush.xpose.msra.mxu0 0.0
        %3378 = vmatpush.xpose.msra.mxu0 0.0
        %3379 = vmatpush.xpose.msra.mxu0 0.0
        %3380 = vmatpush.xpose.msra.mxu0 0.0
        %3381 = vmatpush.xpose.msra.mxu0 %v3364
        %3382 = vmatmul.f32.gmra.mxu0 %v3361
        %v3383 = vpop.f32.mrf.mxu0
        %v3384 = vadd.f32 0.0, %v3383
        %3385 = vdwg.mxu0
        %v3386 = vsel %vm1615, %v3306, -inf
        %3387 = vmax.xlane.f32.xlu0 %v3386
        %v3388 = vpop.xlane.xlu0 %3387
        %v3389 = vsel %vm1615, %v3332, -inf
        %3390 = vmax.xlane.f32.xlu0 %v3389
        %v3391 = vpop.xlane.xlu0 %3390
        %v3392 = vsel %vm1615, %v3358, -inf
        %3393 = vmax.xlane.f32.xlu0 %v3392
        %v3394 = vpop.xlane.xlu0 %3393
        %v3395 = vsel %vm1615, %v3384, -inf
        %3396 = vmax.xlane.f32.xlu0 %v3395
        %v3397 = vpop.xlane.xlu0 %3396
        %v3398 = vsub.f32 %v3306, %v3388
        %v3399 = vsub.f32 %v3332, %v3391
        %v3400 = vsub.f32 %v3358, %v3394
        %v3401 = vsub.f32 %v3384, %v3397
        %v3402 = vmul.f32 %v3398, 1.442695
        %v3403 = vpow.pop %v3402
        %v3404 = vmul.f32 %v3399, 1.442695
        %v3405 = vpow.pop %v3404
        %v3406 = vmul.f32 %v3400, 1.442695
        %v3407 = vpow.pop %v3406
        %v3408 = vmul.f32 %v3401, 1.442695
        %v3409 = vpow.pop %v3408
        %v3410 = vsel %vm1615, %v3403, 0.0
        %3411 = vadd.xlane.f32.xlu0 %v3410
        %v3412 = vpop.xlane.xlu0 %3411
        %v3413 = vsel %vm1615, %v3405, 0.0
        %3414 = vadd.xlane.f32.xlu0 %v3413
        %v3415 = vpop.xlane.xlu0 %3414
        %v3416 = vsel %vm1615, %v3407, 0.0
        %3417 = vadd.xlane.f32.xlu0 %v3416
        %v3418 = vpop.xlane.xlu0 %3417
        %v3419 = vsel %vm1615, %v3409, 0.0
        %3420 = vadd.xlane.f32.xlu0 %v3419
        %v3421 = vpop.xlane.xlu0 %3420
        %v3422 = vrcp.pop %v3412
        %v3423 = vrcp.pop %v3415
        %v3424 = vrcp.pop %v3418
        %v3425 = vrcp.pop %v3421
        %v3426 = vmul.f32 %v3403, %v3422
        %v3427 = vmul.f32 %v3405, %v3423
        %v3428 = vmul.f32 %v3407, %v3424
        %v3429 = vmul.f32 %v3409, %v3425
        %v3431 = vsel %vm1615, %v3426, 0
        %3433 = vmatpush.msra.mxu0 0.0
        %3434 = vmatpush.msra.mxu0 0.0
        %3435 = vmatpush.msra.mxu0 0.0
        %3436 = vmatpush.msra.mxu0 0.0
        %3437 = vmatpush.msra.mxu0 0.0
        %3438 = vmatpush.msra.mxu0 0.0
        %3439 = vmatpush.msra.mxu0 0.0
        %3440 = vmatpush.msra.mxu0 0.0
        %3441 = vmatpush.msra.mxu0 0.0
        %3442 = vmatpush.msra.mxu0 0.0
        %3443 = vmatpush.msra.mxu0 0.0
        %3444 = vmatpush.msra.mxu0 0.0
        %3445 = vmatpush.msra.mxu0 0.0
        %3446 = vmatpush.msra.mxu0 0.0
        %3447 = vmatpush.msra.mxu0 0.0
        %3448 = vmatpush.msra.mxu0 %v3271
        %3449 = vmatmul.f32.gmra.mxu0 %v3431
        %v3450 = vpop.f32.mrf.mxu0
        %v3451 = vadd.f32 0.0, %v3450
        %3452 = vdwg.mxu0
        %v3454 = vsel %vm1615, %v3427, 0
        %3456 = vmatpush.msra.mxu0 0.0
        %3457 = vmatpush.msra.mxu0 0.0
        %3458 = vmatpush.msra.mxu0 0.0
        %3459 = vmatpush.msra.mxu0 0.0
        %3460 = vmatpush.msra.mxu0 0.0
        %3461 = vmatpush.msra.mxu0 0.0
        %3462 = vmatpush.msra.mxu0 0.0
        %3463 = vmatpush.msra.mxu0 0.0
        %3464 = vmatpush.msra.mxu0 0.0
        %3465 = vmatpush.msra.mxu0 0.0
        %3466 = vmatpush.msra.mxu0 0.0
        %3467 = vmatpush.msra.mxu0 0.0
        %3468 = vmatpush.msra.mxu0 0.0
        %3469 = vmatpush.msra.mxu0 0.0
        %3470 = vmatpush.msra.mxu0 0.0
        %3471 = vmatpush.msra.mxu0 %v3274
        %3472 = vmatmul.f32.gmra.mxu0 %v3454
        %v3473 = vpop.f32.mrf.mxu0
        %v3474 = vadd.f32 0.0, %v3473
        %3475 = vdwg.mxu0
        %v3477 = vsel %vm1615, %v3428, 0
        %3479 = vmatpush.msra.mxu0 0.0
        %3480 = vmatpush.msra.mxu0 0.0
        %3481 = vmatpush.msra.mxu0 0.0
        %3482 = vmatpush.msra.mxu0 0.0
        %3483 = vmatpush.msra.mxu0 0.0
        %3484 = vmatpush.msra.mxu0 0.0
        %3485 = vmatpush.msra.mxu0 0.0
        %3486 = vmatpush.msra.mxu0 0.0
        %3487 = vmatpush.msra.mxu0 0.0
        %3488 = vmatpush.msra.mxu0 0.0
        %3489 = vmatpush.msra.mxu0 0.0
        %3490 = vmatpush.msra.mxu0 0.0
        %3491 = vmatpush.msra.mxu0 0.0
        %3492 = vmatpush.msra.mxu0 0.0
        %3493 = vmatpush.msra.mxu0 0.0
        %3494 = vmatpush.msra.mxu0 %v3277
        %3495 = vmatmul.f32.gmra.mxu0 %v3477
        %v3496 = vpop.f32.mrf.mxu0
        %v3497 = vadd.f32 0.0, %v3496
        %3498 = vdwg.mxu0
        %v3500 = vsel %vm1615, %v3429, 0
        %3502 = vmatpush.msra.mxu0 0.0
        %3503 = vmatpush.msra.mxu0 0.0
        %3504 = vmatpush.msra.mxu0 0.0
        %3505 = vmatpush.msra.mxu0 0.0
        %3506 = vmatpush.msra.mxu0 0.0
        %3507 = vmatpush.msra.mxu0 0.0
        %3508 = vmatpush.msra.mxu0 0.0
        %3509 = vmatpush.msra.mxu0 0.0
        %3510 = vmatpush.msra.mxu0 0.0
        %3511 = vmatpush.msra.mxu0 0.0
        %3512 = vmatpush.msra.mxu0 0.0
        %3513 = vmatpush.msra.mxu0 0.0
        %3514 = vmatpush.msra.mxu0 0.0
        %3515 = vmatpush.msra.mxu0 0.0
        %3516 = vmatpush.msra.mxu0 0.0
        %3517 = vmatpush.msra.mxu0 %v3280
        %3518 = vmatmul.f32.gmra.mxu0 %v3500
        %v3519 = vpop.f32.mrf.mxu0
        %v3520 = vadd.f32 0.0, %v3519
        %3521 = vdwg.mxu0
        %s3522 = scalar_lea.vmem %s55, 16
        %v3523 = vld [vmem:[%s3522] sm:$0xff]
        %v3524 = vld [vmem:[%s3522 + $0x8] sm:$0xff]
        %v3526 = vsel %vm1615, %v3451, 0
        %v3529 = vsel %vm1615, %v3474, 0
        %v3532 = vsel %vm1615, %v3497, 0
        %v3535 = vsel %vm1615, %v3520, 0
        %v3538 = vsel %vm1615, %v3523, 0
        %v3541 = vsel %vm1615, %v3524, 0
        %3543 = vmatpush.xpose.msra.mxu0 0.0
        %3544 = vmatpush.xpose.msra.mxu0 0.0
        %3545 = vmatpush.xpose.msra.mxu0 0.0
        %3546 = vmatpush.xpose.msra.mxu0 0.0
        %3547 = vmatpush.xpose.msra.mxu0 0.0
        %3548 = vmatpush.xpose.msra.mxu0 0.0
        %3549 = vmatpush.xpose.msra.mxu0 0.0
        %3550 = vmatpush.xpose.msra.mxu0 0.0
        %3551 = vmatpush.xpose.msra.mxu0 0.0
        %3552 = vmatpush.xpose.msra.mxu0 0.0
        %3553 = vmatpush.xpose.msra.mxu0 0.0
        %3554 = vmatpush.xpose.msra.mxu0 0.0
        %3555 = vmatpush.xpose.msra.mxu0 0.0
        %3556 = vmatpush.xpose.msra.mxu0 0.0
        %3557 = vmatpush.xpose.msra.mxu0 %v3541
        %3558 = vmatpush.xpose.msra.mxu0 %v3538
        %3559 = vmatmul.f32.gmra.mxu0 %v3526
        %v3560 = vpop.f32.mrf.mxu0
        %v3561 = vadd.f32 0.0, %v3560
        %3562 = vmatmul.f32.gmra.mxu0 %v3529
        %v3563 = vpop.f32.mrf.mxu0
        %v3564 = vadd.f32 0.0, %v3563
        %3565 = vmatmul.f32.gmra.mxu0 %v3532
        %v3566 = vpop.f32.mrf.mxu0
        %v3567 = vadd.f32 0.0, %v3566
        %3568 = vmatmul.f32.gmra.mxu0 %v3535
        %v3569 = vpop.f32.mrf.mxu0
        %v3570 = vadd.f32 0.0, %v3569
        %3571 = vdwg.mxu0
        %v3573 = vsel %vm1615, %v3088, 0
        %v3576 = vsel %vm1615, %v3111, 0
        %v3579 = vsel %vm1615, %v3134, 0
        %v3582 = vsel %vm1615, %v3157, 0
        %v3585 = vsel %vm1615, %v3159, 0
        %v3588 = vsel %vm1615, %v3160, 0
        %3590 = vmatpush.xpose.msra.mxu0 0.0
        %3591 = vmatpush.xpose.msra.mxu0 0.0
        %3592 = vmatpush.xpose.msra.mxu0 0.0
        %3593 = vmatpush.xpose.msra.mxu0 0.0
        %3594 = vmatpush.xpose.msra.mxu0 0.0
        %3595 = vmatpush.xpose.msra.mxu0 0.0
        %3596 = vmatpush.xpose.msra.mxu0 0.0
        %3597 = vmatpush.xpose.msra.mxu0 0.0
        %3598 = vmatpush.xpose.msra.mxu0 0.0
        %3599 = vmatpush.xpose.msra.mxu0 0.0
        %3600 = vmatpush.xpose.msra.mxu0 0.0
        %3601 = vmatpush.xpose.msra.mxu0 0.0
        %3602 = vmatpush.xpose.msra.mxu0 0.0
        %3603 = vmatpush.xpose.msra.mxu0 0.0
        %3604 = vmatpush.xpose.msra.mxu0 %v3588
        %3605 = vmatpush.xpose.msra.mxu0 %v3585
        %3606 = vmatmul.f32.gmra.mxu0 %v3573
        %v3607 = vpop.f32.mrf.mxu0
        %v3608 = vadd.f32 %v3561, %v3607
        %3609 = vmatmul.f32.gmra.mxu0 %v3576
        %v3610 = vpop.f32.mrf.mxu0
        %v3611 = vadd.f32 %v3564, %v3610
        %3612 = vmatmul.f32.gmra.mxu0 %v3579
        %v3613 = vpop.f32.mrf.mxu0
        %v3614 = vadd.f32 %v3567, %v3613
        %3615 = vmatmul.f32.gmra.mxu0 %v3582
        %v3616 = vpop.f32.mrf.mxu0
        %v3617 = vadd.f32 %v3570, %v3616
        %3618 = vdwg.mxu0
        %v3619 = vld [vmem:[#allocation25] sm:$0x1]
        %v3621 = vperm.slane %v3619, 0
        %v3623 = vadd.f32 %v3608, %v3621
        %v3624 = vadd.f32 %v3611, %v3621
        %v3625 = vadd.f32 %v3614, %v3621
        %v3626 = vadd.f32 %v3617, %v3621
        %v3627 = vadd.f32 %v2781, %v3623
        %v3628 = vadd.f32 %v2784, %v3624
        %v3629 = vadd.f32 %v2787, %v3625
        %v3630 = vadd.f32 %v2790, %v3626
        %v3631 = vld [vmem:[#allocation26] sm:$0x1]
        %v3632 = vld [vmem:[%s61] sm:$0x1]
        %v3633 = vsel %vm1492, %v3627, 0.0
        %3634 = vadd.xlane.f32.xlu0 %v3633
        %v3635 = vpop.xlane.xlu0 %3634
        %v3636 = vsel %vm1492, %v3628, 0.0
        %3637 = vadd.xlane.f32.xlu0 %v3636
        %v3638 = vpop.xlane.xlu0 %3637
        %v3639 = vsel %vm1492, %v3629, 0.0
        %3640 = vadd.xlane.f32.xlu0 %v3639
        %v3641 = vpop.xlane.xlu0 %3640
        %v3642 = vsel %vm1492, %v3630, 0.0
        %3643 = vadd.xlane.f32.xlu0 %v3642
        %v3644 = vpop.xlane.xlu0 %3643
        %v3645 = vmul.f32 %v3635, %v2348
        %v3646 = vmul.f32 %v3638, %v2348
        %v3647 = vmul.f32 %v3641, %v2348
        %v3648 = vmul.f32 %v3644, %v2348
        %v3649 = vsub.f32 %v3627, %v3645
        %v3650 = vsub.f32 %v3628, %v3646
        %v3651 = vsub.f32 %v3629, %v3647
        %v3652 = vsub.f32 %v3630, %v3648
        %v3653 = vmul.f32 %v3649, %v3649
        %v3654 = vmul.f32 %v3650, %v3650
        %v3655 = vmul.f32 %v3651, %v3651
        %v3656 = vmul.f32 %v3652, %v3652
        %v3657 = vsel %vm1492, %v3653, 0.0
        %3658 = vadd.xlane.f32.xlu0 %v3657
        %v3659 = vpop.xlane.xlu0 %3658
        %v3660 = vsel %vm1492, %v3654, 0.0
        %3661 = vadd.xlane.f32.xlu0 %v3660
        %v3662 = vpop.xlane.xlu0 %3661
        %v3663 = vsel %vm1492, %v3655, 0.0
        %3664 = vadd.xlane.f32.xlu0 %v3663
        %v3665 = vpop.xlane.xlu0 %3664
        %v3666 = vsel %vm1492, %v3656, 0.0
        %3667 = vadd.xlane.f32.xlu0 %v3666
        %v3668 = vpop.xlane.xlu0 %3667
        %v3669 = vmul.f32 %v3659, %v2348
        %v3670 = vmul.f32 %v3662, %v2348
        %v3671 = vmul.f32 %v3665, %v2348
        %v3672 = vmul.f32 %v3668, %v2348
        %v3673 = vadd.f32 %v3669, 1e-05
        %v3674 = vadd.f32 %v3670, 1e-05
        %v3675 = vadd.f32 %v3671, 1e-05
        %v3676 = vadd.f32 %v3672, 1e-05
        %v3677 = vrsqrt.pop %v3673
        %v3678 = vmul.f32 %v3677, %v3673
        %v3679 = vmul.f32 %v3678, %v3677
        %v3680 = vmul.f32 0.5, %v3679
        %v3681 = vsub.f32 1.5, %v3680
        %v3682 = vmul.f32 %v3677, %v3681
        %vm3683 = vweird.f32 %v3673
        %vm3684 = vweird.f32 %v3677
        %vm3685 = vmor %vm3683, %vm3684
        %v3686 = vsel %vm3685, %v3677, %v3682
        %v3687 = vrsqrt.pop %v3674
        %v3688 = vmul.f32 %v3687, %v3674
        %v3689 = vmul.f32 %v3688, %v3687
        %v3690 = vmul.f32 0.5, %v3689
        %v3691 = vsub.f32 1.5, %v3690
        %v3692 = vmul.f32 %v3687, %v3691
        %vm3693 = vweird.f32 %v3674
        %vm3694 = vweird.f32 %v3687
        %vm3695 = vmor %vm3693, %vm3694
        %v3696 = vsel %vm3695, %v3687, %v3692
        %v3697 = vrsqrt.pop %v3675
        %v3698 = vmul.f32 %v3697, %v3675
        %v3699 = vmul.f32 %v3698, %v3697
        %v3700 = vmul.f32 0.5, %v3699
        %v3701 = vsub.f32 1.5, %v3700
        %v3702 = vmul.f32 %v3697, %v3701
        %vm3703 = vweird.f32 %v3675
        %vm3704 = vweird.f32 %v3697
        %vm3705 = vmor %vm3703, %vm3704
        %v3706 = vsel %vm3705, %v3697, %v3702
        %v3707 = vrsqrt.pop %v3676
        %v3708 = vmul.f32 %v3707, %v3676
        %v3709 = vmul.f32 %v3708, %v3707
        %v3710 = vmul.f32 0.5, %v3709
        %v3711 = vsub.f32 1.5, %v3710
        %v3712 = vmul.f32 %v3707, %v3711
        %vm3713 = vweird.f32 %v3676
        %vm3714 = vweird.f32 %v3707
        %vm3715 = vmor %vm3713, %vm3714
        %v3716 = vsel %vm3715, %v3707, %v3712
        %v3717 = vmul.f32 %v3649, %v3686
        %v3718 = vmul.f32 %v3650, %v3696
        %v3719 = vmul.f32 %v3651, %v3706
        %v3720 = vmul.f32 %v3652, %v3716
        %v3722 = vperm.slane %v3631, 0
        %v3724 = vmul.f32 %v3717, %v3722
        %v3725 = vmul.f32 %v3718, %v3722
        %v3726 = vmul.f32 %v3719, %v3722
        %v3727 = vmul.f32 %v3720, %v3722
        %v3729 = vperm.slane %v3632, 0
        %v3731 = vadd.f32 %v3724, %v3729
        %v3732 = vadd.f32 %v3725, %v3729
        %v3733 = vadd.f32 %v3726, %v3729
        %v3734 = vadd.f32 %v3727, %v3729
        %v3735 = vld [vmem:[%s63] sm:$0xff]
        %v3736 = vld [vmem:[%s63 + $0x8] sm:$0xff]
        %v3737 = vld [vmem:[%s63 + $0x10] sm:$0xff]
        %v3738 = vld [vmem:[%s63 + $0x18] sm:$0xff]
        %v3739 = vld [vmem:[%s63 + $0x20] sm:$0xff]
        %v3740 = vld [vmem:[%s63 + $0x28] sm:$0xff]
        %v3741 = vld [vmem:[%s63 + $0x30] sm:$0xff]
        %v3742 = vld [vmem:[%s63 + $0x38] sm:$0xff]
        %v3743 = vld [vmem:[%s65] sm:$0x1]
        %v3745 = vperm.slane %v3743, 0
        %v3748 = vsel %vm1492, %v3731, 0
        %v3751 = vsel %vm1492, %v3732, 0
        %v3754 = vsel %vm1492, %v3733, 0
        %v3757 = vsel %vm1492, %v3734, 0
        %v3760 = vsel %vm1492, %v3735, 0
        %v3763 = vsel %vm1492, %v3736, 0
        %v3766 = vsel %vm1492, %v3737, 0
        %v3769 = vsel %vm1492, %v3738, 0
        %v3772 = vsel %vm1492, %v3739, 0
        %v3775 = vsel %vm1492, %v3740, 0
        %v3778 = vsel %vm1492, %v3741, 0
        %v3781 = vsel %vm1492, %v3742, 0
        %3783 = vmatpush.xpose.msra.mxu0 0.0
        %3784 = vmatpush.xpose.msra.mxu0 0.0
        %3785 = vmatpush.xpose.msra.mxu0 0.0
        %3786 = vmatpush.xpose.msra.mxu0 0.0
        %3787 = vmatpush.xpose.msra.mxu0 0.0
        %3788 = vmatpush.xpose.msra.mxu0 0.0
        %3789 = vmatpush.xpose.msra.mxu0 0.0
        %3790 = vmatpush.xpose.msra.mxu0 0.0
        %3791 = vmatpush.xpose.msra.mxu0 %v3781
        %3792 = vmatpush.xpose.msra.mxu0 %v3778
        %3793 = vmatpush.xpose.msra.mxu0 %v3775
        %3794 = vmatpush.xpose.msra.mxu0 %v3772
        %3795 = vmatpush.xpose.msra.mxu0 %v3769
        %3796 = vmatpush.xpose.msra.mxu0 %v3766
        %3797 = vmatpush.xpose.msra.mxu0 %v3763
        %3798 = vmatpush.xpose.msra.mxu0 %v3760
        %3799 = vmatmul.f32.gmra.mxu0 %v3748
        %v3800 = vpop.f32.mrf.mxu0
        %v3801 = vadd.f32 %v3745, %v3800
        %3802 = vmatmul.f32.gmra.mxu0 %v3751
        %v3803 = vpop.f32.mrf.mxu0
        %v3804 = vadd.f32 %v3745, %v3803
        %3805 = vmatmul.f32.gmra.mxu0 %v3754
        %v3806 = vpop.f32.mrf.mxu0
        %v3807 = vadd.f32 %v3745, %v3806
        %3808 = vmatmul.f32.gmra.mxu0 %v3757
        %v3809 = vpop.f32.mrf.mxu0
        %v3810 = vadd.f32 %v3745, %v3809
        %3811 = vdwg.mxu0
        %v3812 = vmax.f32 %v3801, 0.0
        %v3813 = vmax.f32 %v3804, 0.0
        %v3814 = vmax.f32 %v3807, 0.0
        %v3815 = vmax.f32 %v3810, 0.0
        %v3816 = vld [vmem:[%s67] sm:$0xff]
        %v3817 = vld [vmem:[%s67 + $0x8] sm:$0xff]
        %v3818 = vld [vmem:[%s69] sm:$0x1]
        %v3820 = vperm.slane %v3818, 0
        %v3823 = vsel %vm2526, %v3812, 0
        %v3826 = vsel %vm2526, %v3813, 0
        %v3829 = vsel %vm2526, %v3814, 0
        %v3832 = vsel %vm2526, %v3815, 0
        %v3835 = vsel %vm2526, %v3816, 0
        %v3838 = vsel %vm2526, %v3817, 0
        %3840 = vmatpush.xpose.msra.mxu0 0.0
        %3841 = vmatpush.xpose.msra.mxu0 0.0
        %3842 = vmatpush.xpose.msra.mxu0 0.0
        %3843 = vmatpush.xpose.msra.mxu0 0.0
        %3844 = vmatpush.xpose.msra.mxu0 0.0
        %3845 = vmatpush.xpose.msra.mxu0 0.0
        %3846 = vmatpush.xpose.msra.mxu0 0.0
        %3847 = vmatpush.xpose.msra.mxu0 0.0
        %3848 = vmatpush.xpose.msra.mxu0 0.0
        %3849 = vmatpush.xpose.msra.mxu0 0.0
        %3850 = vmatpush.xpose.msra.mxu0 0.0
        %3851 = vmatpush.xpose.msra.mxu0 0.0
        %3852 = vmatpush.xpose.msra.mxu0 0.0
        %3853 = vmatpush.xpose.msra.mxu0 0.0
        %3854 = vmatpush.xpose.msra.mxu0 %v3838
        %3855 = vmatpush.xpose.msra.mxu0 %v3835
        %3856 = vmatmul.f32.gmra.mxu0 %v3823
        %v3857 = vpop.f32.mrf.mxu0
        %v3858 = vadd.f32 %v3820, %v3857
        %3859 = vmatmul.f32.gmra.mxu0 %v3826
        %v3860 = vpop.f32.mrf.mxu0
        %v3861 = vadd.f32 %v3820, %v3860
        %3862 = vmatmul.f32.gmra.mxu0 %v3829
        %v3863 = vpop.f32.mrf.mxu0
        %v3864 = vadd.f32 %v3820, %v3863
        %3865 = vmatmul.f32.gmra.mxu0 %v3832
        %v3866 = vpop.f32.mrf.mxu0
        %v3867 = vadd.f32 %v3820, %v3866
        %3868 = vdwg.mxu0
        %v3869 = vadd.f32 %v3731, %v3858
        %v3870 = vadd.f32 %v3732, %v3861
        %v3871 = vadd.f32 %v3733, %v3864
        %v3872 = vadd.f32 %v3734, %v3867
        %v3873 = vld [vmem:[%s71] sm:$0x1]
        %v3874 = vld [vmem:[%s73] sm:$0x1]
        %v3875 = vsel %vm1492, %v3869, 0.0
        %3876 = vadd.xlane.f32.xlu0 %v3875
        %v3877 = vpop.xlane.xlu0 %3876
        %v3878 = vsel %vm1492, %v3870, 0.0
        %3879 = vadd.xlane.f32.xlu0 %v3878
        %v3880 = vpop.xlane.xlu0 %3879
        %v3881 = vsel %vm1492, %v3871, 0.0
        %3882 = vadd.xlane.f32.xlu0 %v3881
        %v3883 = vpop.xlane.xlu0 %3882
        %v3884 = vsel %vm1492, %v3872, 0.0
        %3885 = vadd.xlane.f32.xlu0 %v3884
        %v3886 = vpop.xlane.xlu0 %3885
        %v3887 = vmul.f32 %v3877, %v2348
        %v3888 = vmul.f32 %v3880, %v2348
        %v3889 = vmul.f32 %v3883, %v2348
        %v3890 = vmul.f32 %v3886, %v2348
        %v3891 = vsub.f32 %v3869, %v3887
        %v3892 = vsub.f32 %v3870, %v3888
        %v3893 = vsub.f32 %v3871, %v3889
        %v3894 = vsub.f32 %v3872, %v3890
        %v3895 = vmul.f32 %v3891, %v3891
        %v3896 = vmul.f32 %v3892, %v3892
        %v3897 = vmul.f32 %v3893, %v3893
        %v3898 = vmul.f32 %v3894, %v3894
        %v3899 = vsel %vm1492, %v3895, 0.0
        %3900 = vadd.xlane.f32.xlu0 %v3899
        %v3901 = vpop.xlane.xlu0 %3900
        %v3902 = vsel %vm1492, %v3896, 0.0
        %3903 = vadd.xlane.f32.xlu0 %v3902
        %v3904 = vpop.xlane.xlu0 %3903
        %v3905 = vsel %vm1492, %v3897, 0.0
        %3906 = vadd.xlane.f32.xlu0 %v3905
        %v3907 = vpop.xlane.xlu0 %3906
        %v3908 = vsel %vm1492, %v3898, 0.0
        %3909 = vadd.xlane.f32.xlu0 %v3908
        %v3910 = vpop.xlane.xlu0 %3909
        %v3911 = vmul.f32 %v3901, %v2348
        %v3912 = vmul.f32 %v3904, %v2348
        %v3913 = vmul.f32 %v3907, %v2348
        %v3914 = vmul.f32 %v3910, %v2348
        %v3915 = vadd.f32 %v3911, 1e-05
        %v3916 = vadd.f32 %v3912, 1e-05
        %v3917 = vadd.f32 %v3913, 1e-05
        %v3918 = vadd.f32 %v3914, 1e-05
        %v3919 = vrsqrt.pop %v3915
        %v3920 = vmul.f32 %v3919, %v3915
        %v3921 = vmul.f32 %v3920, %v3919
        %v3922 = vmul.f32 0.5, %v3921
        %v3923 = vsub.f32 1.5, %v3922
        %v3924 = vmul.f32 %v3919, %v3923
        %vm3925 = vweird.f32 %v3915
        %vm3926 = vweird.f32 %v3919
        %vm3927 = vmor %vm3925, %vm3926
        %v3928 = vsel %vm3927, %v3919, %v3924
        %v3929 = vrsqrt.pop %v3916
        %v3930 = vmul.f32 %v3929, %v3916
        %v3931 = vmul.f32 %v3930, %v3929
        %v3932 = vmul.f32 0.5, %v3931
        %v3933 = vsub.f32 1.5, %v3932
        %v3934 = vmul.f32 %v3929, %v3933
        %vm3935 = vweird.f32 %v3916
        %vm3936 = vweird.f32 %v3929
        %vm3937 = vmor %vm3935, %vm3936
        %v3938 = vsel %vm3937, %v3929, %v3934
        %v3939 = vrsqrt.pop %v3917
        %v3940 = vmul.f32 %v3939, %v3917
        %v3941 = vmul.f32 %v3940, %v3939
        %v3942 = vmul.f32 0.5, %v3941
        %v3943 = vsub.f32 1.5, %v3942
        %v3944 = vmul.f32 %v3939, %v3943
        %vm3945 = vweird.f32 %v3917
        %vm3946 = vweird.f32 %v3939
        %vm3947 = vmor %vm3945, %vm3946
        %v3948 = vsel %vm3947, %v3939, %v3944
        %v3949 = vrsqrt.pop %v3918
        %v3950 = vmul.f32 %v3949, %v3918
        %v3951 = vmul.f32 %v3950, %v3949
        %v3952 = vmul.f32 0.5, %v3951
        %v3953 = vsub.f32 1.5, %v3952
        %v3954 = vmul.f32 %v3949, %v3953
        %vm3955 = vweird.f32 %v3918
        %vm3956 = vweird.f32 %v3949
        %vm3957 = vmor %vm3955, %vm3956
        %v3958 = vsel %vm3957, %v3949, %v3954
        %v3959 = vmul.f32 %v3891, %v3928
        %v3960 = vmul.f32 %v3892, %v3938
        %v3961 = vmul.f32 %v3893, %v3948
        %v3962 = vmul.f32 %v3894, %v3958
        %v3964 = vperm.slane %v3873, 0
        %v3966 = vmul.f32 %v3959, %v3964
        %v3967 = vmul.f32 %v3960, %v3964
        %v3968 = vmul.f32 %v3961, %v3964
        %v3969 = vmul.f32 %v3962, %v3964
        %v3971 = vperm.slane %v3874, 0
        %v3973 = vadd.f32 %v3966, %v3971
        %v3974 = vadd.f32 %v3967, %v3971
        %v3975 = vadd.f32 %v3968, %v3971
        %v3976 = vadd.f32 %v3969, %v3971
        %v3977 = vld [vmem:[%s75] sm:$0xff]
        %v3978 = vld [vmem:[%s75 + $0x8] sm:$0xff]
        %v3979 = vld [vmem:[%s77] sm:$0x1]
        %v3981 = vperm.slane %v3979, 0
        %v3984 = vsel %vm1492, %v3973, 0
        %v3987 = vsel %vm1492, %v3974, 0
        %v3990 = vsel %vm1492, %v3975, 0
        %v3993 = vsel %vm1492, %v3976, 0
        %v3996 = vsel %vm1492, %v3977, 0
        %v3999 = vsel %vm1492, %v3978, 0
        %4001 = vmatpush.xpose.msra.mxu0 0.0
        %4002 = vmatpush.xpose.msra.mxu0 0.0
        %4003 = vmatpush.xpose.msra.mxu0 0.0
        %4004 = vmatpush.xpose.msra.mxu0 0.0
        %4005 = vmatpush.xpose.msra.mxu0 0.0
        %4006 = vmatpush.xpose.msra.mxu0 0.0
        %4007 = vmatpush.xpose.msra.mxu0 0.0
        %4008 = vmatpush.xpose.msra.mxu0 0.0
        %4009 = vmatpush.xpose.msra.mxu0 0.0
        %4010 = vmatpush.xpose.msra.mxu0 0.0
        %4011 = vmatpush.xpose.msra.mxu0 0.0
        %4012 = vmatpush.xpose.msra.mxu0 0.0
        %4013 = vmatpush.xpose.msra.mxu0 0.0
        %4014 = vmatpush.xpose.msra.mxu0 0.0
        %4015 = vmatpush.xpose.msra.mxu0 %v3999
        %4016 = vmatpush.xpose.msra.mxu0 %v3996
        %4017 = vmatmul.f32.gmra.mxu0 %v3984
        %v4018 = vpop.f32.mrf.mxu0
        %v4019 = vadd.f32 %v3981, %v4018
        %4020 = vmatmul.f32.gmra.mxu0 %v3987
        %v4021 = vpop.f32.mrf.mxu0
        %v4022 = vadd.f32 %v3981, %v4021
        %4023 = vmatmul.f32.gmra.mxu0 %v3990
        %v4024 = vpop.f32.mrf.mxu0
        %v4025 = vadd.f32 %v3981, %v4024
        %4026 = vmatmul.f32.gmra.mxu0 %v3993
        %v4027 = vpop.f32.mrf.mxu0
        %v4028 = vadd.f32 %v3981, %v4027
        %4029 = vdwg.mxu0
        %v4030 = vmax.f32 %v4019, 0.0
        %v4031 = vmax.f32 %v4022, 0.0
        %v4032 = vmax.f32 %v4025, 0.0
        %v4033 = vmax.f32 %v4028, 0.0
        %v4034 = vld [vmem:[%s79] sm:$0xff]
        %v4035 = vld [vmem:[%s81] sm:$0x1]
        %v4037 = vperm.slane %v4035, 0
        %v4040 = vsel %vm1492, %v4030, 0
        %v4043 = vsel %vm1492, %v4031, 0
        %v4046 = vsel %vm1492, %v4032, 0
        %v4049 = vsel %vm1492, %v4033, 0
        %v4052 = vsel %vm1492, %v4034, 0
        %4054 = vmatpush.xpose.msra.mxu0 0.0
        %4055 = vmatpush.xpose.msra.mxu0 0.0
        %4056 = vmatpush.xpose.msra.mxu0 0.0
        %4057 = vmatpush.xpose.msra.mxu0 0.0
        %4058 = vmatpush.xpose.msra.mxu0 0.0
        %4059 = vmatpush.xpose.msra.mxu0 0.0
        %4060 = vmatpush.xpose.msra.mxu0 0.0
        %4061 = vmatpush.xpose.msra.mxu0 0.0
        %4062 = vmatpush.xpose.msra.mxu0 0.0
        %4063 = vmatpush.xpose.msra.mxu0 0.0
        %4064 = vmatpush.xpose.msra.mxu0 0.0
        %4065 = vmatpush.xpose.msra.mxu0 0.0
        %4066 = vmatpush.xpose.msra.mxu0 0.0
        %4067 = vmatpush.xpose.msra.mxu0 0.0
        %4068 = vmatpush.xpose.msra.mxu0 0.0
        %4069 = vmatpush.xpose.msra.mxu0 %v4052
        %4070 = vmatmul.f32.gmra.mxu0 %v4040
        %v4071 = vpop.f32.mrf.mxu0
        %v4072 = vadd.f32 %v4037, %v4071
        %4073 = vmatmul.f32.gmra.mxu0 %v4043
        %v4074 = vpop.f32.mrf.mxu0
        %v4075 = vadd.f32 %v4037, %v4074
        %4076 = vmatmul.f32.gmra.mxu0 %v4046
        %v4077 = vpop.f32.mrf.mxu0
        %v4078 = vadd.f32 %v4037, %v4077
        %4079 = vmatmul.f32.gmra.mxu0 %v4049
        %v4080 = vpop.f32.mrf.mxu0
        %v4081 = vadd.f32 %v4037, %v4080
        %4082 = vdwg.mxu0
        %4083 = vst.msk [vmem:[%s1475] sm:$0xff] %vm1615, %v4072
        %4084 = vst.msk [vmem:[%s1475 + $0x8] sm:$0xff] %vm1615, %v4075
        %4085 = vst.msk [vmem:[%s1475 + $0x10] sm:$0xff] %vm1615, %v4078
        %4086 = vst.msk [vmem:[%s1475 + $0x18] sm:$0xff] %vm1615, %v4081
        %s4087 = sand.u32 %s980, 1
        %s4088 = scalar_lea.sflag [#allocation4], %s4087
        %s4089 = sand.u32 %s980, 1
        %s4090 = smul.addr %s4089, 32
        %s4091 = scalar_lea.vmem [#allocation28], %s4090
        // Predicated region
        $region249: #{tpu_custom_call.1} parent=183 // pred_check
          %p4092 = pneg %p990
        $region250: #{tpu_custom_call.1} parent=183 // pred_check_branch
          %4094 = sbr.rel (%p4092) target = $region252
        $region251: #{tpu_custom_call.1} parent=183 // pred_region
          %s4095 = smul.u32 4, %s106
          %4097 = vsyncadd %s4088, 0
          %s4098 = smul.addr %s4095, 8
          %s4099 = scalar_lea.hbm %s83, %s4098
          %s4100 = sshll.u32 %s4091, 4
          %s4101 = int_to_ptr.vmem [resolvable:$true] %s4100
          %s4102 = sshll.u32 %s4099, 4
          %s4103 = int_to_ptr.hbm [resolvable:$true] %s4102
          %4108 = dma.vmem_to_hbm [thread:$0]  %s4101, 512, %s4103, %s4088, 128, 128, 8
        $region252: #{tpu_custom_call.1} parent=183 // pred_fallthru
          _
      $region184: #{tpu_custom_call.1} parent=5 // pred_fallthru
        _
      %p4109 = scmp.le.s32.totalorder 2, %s101
      // Predicated region
      $region253: #{tpu_custom_call.1} parent=5 // pred_check
        %p4110 = pneg %p4109
      $region254: #{tpu_custom_call.1} parent=5 // pred_check_branch
        %4112 = sbr.rel (%p4110) target = $region256
      $region255: #{tpu_custom_call.1} parent=5 // pred_region
        %s4113 = ssub.s32 %s101, 2
        // Predicated region
        $region257: #{tpu_custom_call.1} parent=255 // pred_check
          %p4114 = pneg %p996
        $region258: #{tpu_custom_call.1} parent=255 // pred_check_branch
          %4116 = sbr.rel (%p4114) target = $region260
        $region259: #{tpu_custom_call.1} parent=255 // pred_region
          %s4117 = sand.u32 %s981, 1
          %s4118 = scalar_lea.sflag [#allocation4], %s4117
          %s4119 = sand.u32 %s981, 1
          %s4120 = smul.addr %s4119, 32
          %s4121 = scalar_lea.vmem [#allocation28], %s4120
          %4123 = dma.done %s4118, 512
        $region260: #{tpu_custom_call.1} parent=255 // pred_fallthru
          _
      $region256: #{tpu_custom_call.1} parent=5 // pred_fallthru
        _
    $region6: #{tpu_custom_call.1} parent=1 // loop_footer
      %s105 = sadd.s32 1, %s101
    $region7: #{tpu_custom_call.1} parent=1 // loop_footer_branch
      %100 = sbr.rel target = $region3
    $region8: #{tpu_custom_call.1} parent=1 // loop_exit
      _
    %4124 = vsyncpa [#allocation3], 1
    %s4125 = scalar_lea.sflag [#allocation3], 1
    %4126 = vsyncpa %s4125, 1
    %4127 = vsyncpa [#allocation6], 1
    %4128 = vsyncpa [#allocation9], 1
    %4129 = vsyncpa [#allocation12], 1
    %4130 = vsyncpa [#allocation15], 1
    %4131 = vsyncpa [#allocation18], 1
    %4132 = vsyncpa [#allocation21], 1
    %4133 = vsyncpa [#allocation24], 1
    %4134 = vsyncpa [#allocation27], 1
    %4135 = vsyncpa [#allocation4], 1
    %s4136 = scalar_lea.sflag [#allocation4], 1
    %4137 = vsyncpa %s4136, 1

</llo_original>
